<compile_context>
chip_gen: v6e
topology: v6e:2x2x1
jax: 0.10.0
libtpu: 0.0.40
codegen_flags: <defaults>
</compile_context>

<pallas_src>
import jax
import jax.numpy as jnp
from jax.experimental import pallas as pl
from jax.experimental.pallas import tpu as pltpu


def _round_up(x, m):
    return ((x + m - 1) // m) * m


def _cdiv(a, b):
    return -(-a // b)


def _fold2_kernel(x_ref, w1_ref, b1_ref, w2_ref, b2_ref, w3_ref, b3_ref, o_ref):
    # x_ref : (1, C_in_p, tn) bf16   (channels on sublanes, points on lanes)
    # w1_ref: (H1, C_in_p) bf16      b1_ref: (H1, 1) f32
    # w2_ref: (H2, H1)     bf16      b2_ref: (H2, 1) f32
    # w3_ref: (OUT_SUB, H2) bf16     b3_ref: (OUT_SUB, 1) f32
    # o_ref : (1, OUT_SUB, tn) f32
    x = x_ref[0]
    # MXU matmuls in bf16 with f32 accumulation; bias-add / ReLU in f32 (VPU).
    h = jnp.dot(w1_ref[...], x, preferred_element_type=jnp.float32) + b1_ref[...]
    h = jnp.maximum(h, 0.0).astype(jnp.bfloat16)
    h = jnp.dot(w2_ref[...], h, preferred_element_type=jnp.float32) + b2_ref[...]
    h = jnp.maximum(h, 0.0).astype(jnp.bfloat16)
    y = jnp.dot(w3_ref[...], h, preferred_element_type=jnp.float32) + b3_ref[...]
    o_ref[0] = y.astype(o_ref.dtype)


def folding_net_dec_fold2(x, w1, b1, w2, b2, w3, b3, *, points_tile=2048):
    """Forward pass of FoldingNetDecFold2.

    x : [B, C_in, N] float32 (PyTorch Conv1d layout, C_in = bottleneck + 3)
    w1: [512, C_in], b1: [512]
    w2: [512, 512],  b2: [512]
    w3: [3,   512],  b3: [3]
    returns y: [B, 3, N] float32
    """
    B, C_in, N = x.shape
    H1 = w1.shape[0]
    H2 = w2.shape[0]
    C_out = w3.shape[0]
    out_dtype = x.dtype

    # ---- layout / padding (zero padding is mathematically inert) ------------
    C_in_p = _round_up(C_in, 8)               # input channels on sublanes
    OUT_SUB = _round_up(max(C_out, 8), 8)     # 3 output channels -> 8 sublanes

    # Points tile: lane multiple, big enough to amortize per-step overhead,
    # minimal padding waste, and >= 2 total grid steps when possible (v7x 2 TC).
    min_tiles = 2 if B < 2 else 1
    n_lanes = _round_up(N, 128)
    n_tiles = max(min(min_tiles, n_lanes // 128), _cdiv(n_lanes, points_tile))
    tn = _round_up(_cdiv(N, n_tiles), 128)
    N_p = tn * n_tiles

    # bf16 inputs / weights for the MXU; biases stay f32.
    x_p = jnp.pad(x, ((0, 0), (0, C_in_p - C_in), (0, N_p - N))).astype(jnp.bfloat16)
    w1c = jnp.pad(w1, ((0, 0), (0, C_in_p - C_in))).astype(jnp.bfloat16)    # (H1, C_in_p)
    w2c = w2.astype(jnp.bfloat16)                                           # (H2, H1)
    w3c = jnp.pad(w3, ((0, OUT_SUB - C_out), (0, 0))).astype(jnp.bfloat16)  # (OUT_SUB, H2)
    b1c = b1.astype(jnp.float32).reshape(H1, 1)
    b2c = b2.astype(jnp.float32).reshape(H2, 1)
    b3c = jnp.pad(b3.astype(jnp.float32), (0, OUT_SUB - C_out)).reshape(OUT_SUB, 1)

    # ---- honest VMEM budget: x/out double-buffered, weights counted twice so
    # the double-buffer fallback still fits; capped below v7x's 64 MiB VMEM. ---
    x_block_b = C_in_p * tn * 2
    out_block_b = OUT_SUB * tn * 4
    weight_b = (H1 * C_in_p + H2 * H1 + OUT_SUB * H2) * 2 + (H1 + H2 + OUT_SUB) * 4
    inter_b = 3 * max(H1, H2) * tn * 4            # in-kernel f32/bf16 intermediates
    vmem_limit = 2 * x_block_b + 2 * out_block_b + 2 * weight_b + inter_b + (12 << 20)
    vmem_limit = int(min(vmem_limit, 48 << 20))

    grid = (B, n_tiles)
    x_map = lambda b, j: (b, 0, j)
    const_map = lambda b, j: (0, 0)

    def make_call(single_buffer_weights):
        # Weights/biases have a constant index_map -> single buffer saves VMEM.
        wkw = {"pipeline_mode": pl.Buffered(1)} if single_buffer_weights else {}
        return pl.pallas_call(
            _fold2_kernel,
            out_shape=jax.ShapeDtypeStruct((B, OUT_SUB, N_p), out_dtype),
            grid_spec=pltpu.PrefetchScalarGridSpec(
                num_scalar_prefetch=0,
                grid=grid,
                in_specs=[
                    pl.BlockSpec((1, C_in_p, tn), x_map),        # x tile
                    pl.BlockSpec((H1, C_in_p), const_map, **wkw),   # W1
                    pl.BlockSpec((H1, 1), const_map, **wkw),        # b1
                    pl.BlockSpec((H2, H1), const_map, **wkw),       # W2
                    pl.BlockSpec((H2, 1), const_map, **wkw),        # b2
                    pl.BlockSpec((OUT_SUB, H2), const_map, **wkw),  # W3 (rows padded)
                    pl.BlockSpec((OUT_SUB, 1), const_map, **wkw),   # b3 (padded)
                ],
                out_specs=pl.BlockSpec((1, OUT_SUB, tn), x_map),
            ),
            compiler_params=pltpu.CompilerParams(
                dimension_semantics=("parallel", "parallel"),
                vmem_limit_bytes=vmem_limit,
            ),
        )

    args = (x_p, w1c, b1c, w2c, b2c, w3c, b3c)
    try:
        out = make_call(True)(*args)
    except Exception:
        # pl.Buffered(1) unsupported on this jax version; the weights are
        # < 2 MiB in bf16, so default double-buffering is an acceptable fallback.
        out = make_call(False)(*args)

    # Load-bearing slice: drops the zero-padded output channels (OUT_SUB -> 3)
    # and the padded points (N_p -> N) whose columns hold garbage.
    return out[:, :C_out, :N]


def _ref_forward(x, w1, b1, w2, b2, w3, b3):
    h = jnp.einsum("oc,bcn->bon", w1, x) + b1[None, :, None]
    h = jnp.maximum(h, 0.0)
    h = jnp.einsum("oc,bcn->bon", w2, h) + b2[None, :, None]
    h = jnp.maximum(h, 0.0)
    return jnp.einsum("oc,bcn->bon", w3, h) + b3[None, :, None]


if __name__ == "__main__":
    key = jax.random.PRNGKey(0)
    ks = jax.random.split(key, 7)

    bottleneck = 125                      # bottleneck + 3 = 128 input channels
    B, N = 2, 64                          # small point count for the smoke test
    C_in, H, C_out = bottleneck + 3, 512, 3

    x = jax.random.normal(ks[0], (B, C_in, N), dtype=jnp.float32)
    w1 = jax.random.normal(ks[1], (H, C_in), dtype=jnp.float32) / jnp.sqrt(C_in)
    b1 = jax.random.normal(ks[2], (H,), dtype=jnp.float32) * 0.1
    w2 = jax.random.normal(ks[3], (H, H), dtype=jnp.float32) / jnp.sqrt(H)
    b2 = jax.random.normal(ks[4], (H,), dtype=jnp.float32) * 0.1
    w3 = jax.random.normal(ks[5], (C_out, H), dtype=jnp.float32) / jnp.sqrt(H)
    b3 = jax.random.normal(ks[6], (C_out,), dtype=jnp.float32) * 0.1

    y = jax.block_until_ready(folding_net_dec_fold2(x, w1, b1, w2, b2, w3, b3))
    ref = _ref_forward(x, w1, b1, w2, b2, w3, b3)

    assert y.shape == (B, C_out, N), y.shape
    # bf16 MXU inputs (f32 accumulation) -> bf16-level tolerance vs f32 reference.
    max_err = float(jnp.max(jnp.abs(y - ref)))
    assert jnp.allclose(y, ref, atol=5e-2, rtol=5e-2), max_err
    print("KERNEL_OK")
</pallas_src>

<mosaic_0001>
module attributes {stable_mosaic.version = 11 : i64} {
  func.func @_fold2_kernel(%arg0: i32, %arg1: i32, %arg2: memref<1x128x128xbf16, #tpu.memory_space<vmem>>, %arg3: memref<512x128xbf16, #tpu.memory_space<vmem>>, %arg4: memref<512x1xf32, #tpu.memory_space<vmem>>, %arg5: memref<512x512xbf16, #tpu.memory_space<vmem>>, %arg6: memref<512x1xf32, #tpu.memory_space<vmem>>, %arg7: memref<8x512xbf16, #tpu.memory_space<vmem>>, %arg8: memref<8x1xf32, #tpu.memory_space<vmem>>, %arg9: memref<1x8x128xf32, #tpu.memory_space<vmem>>) attributes {dimension_semantics = [#tpu.dimension_semantics<parallel>, #tpu.dimension_semantics<parallel>], iteration_bounds = array<i64: 2, 1>, scalar_prefetch = 0 : i64, scratch_operands = 0 : i64, tpu.core_type = #tpu.core_type<tc>, window_params = [{transform_indices = @transform_0, window_bounds = array<i64: 1, 128, 128>}, {pipeline_mode = #tpu.pipeline_mode<synchronous>, transform_indices = @transform_1, window_bounds = array<i64: 512, 128>}, {pipeline_mode = #tpu.pipeline_mode<synchronous>, transform_indices = @transform_2, window_bounds = array<i64: 512, 1>}, {pipeline_mode = #tpu.pipeline_mode<synchronous>, transform_indices = @transform_3, window_bounds = array<i64: 512, 512>}, {pipeline_mode = #tpu.pipeline_mode<synchronous>, transform_indices = @transform_4, window_bounds = array<i64: 512, 1>}, {pipeline_mode = #tpu.pipeline_mode<synchronous>, transform_indices = @transform_5, window_bounds = array<i64: 8, 512>}, {pipeline_mode = #tpu.pipeline_mode<synchronous>, transform_indices = @transform_6, window_bounds = array<i64: 8, 1>}, {transform_indices = @transform_7, window_bounds = array<i64: 1, 8, 128>}]} {
    %c0 = arith.constant 0 : index
    %c0_0 = arith.constant 0 : index
    %c0_1 = arith.constant 0 : index
    %0 = vector.load %arg2[%c0, %c0_0, %c0_1] : memref<1x128x128xbf16, #tpu.memory_space<vmem>>, vector<1x128x128xbf16>
    %1 = vector.shape_cast %0 : vector<1x128x128xbf16> to vector<128x128xbf16>
    %c0_2 = arith.constant 0 : index
    %c0_3 = arith.constant 0 : index
    %2 = vector.load %arg3[%c0_2, %c0_3] : memref<512x128xbf16, #tpu.memory_space<vmem>>, vector<512x128xbf16>
    %cst = arith.constant dense<0.000000e+00> : vector<512x128xf32>
    %3 = tpu.matmul %2, %1, %cst {dimension_numbers = #tpu.dot_dimension_numbers<[1], [0], [0], [1], [0, 0, 1, 1], [], []>} : vector<512x128xbf16>, vector<128x128xbf16>, vector<512x128xf32> -> vector<512x128xf32>
    %c0_4 = arith.constant 0 : index
    %c0_5 = arith.constant 0 : index
    %4 = vector.load %arg4[%c0_4, %c0_5] : memref<512x1xf32, #tpu.memory_space<vmem>>, vector<512x1xf32>
    %5 = vector.broadcast %4 : vector<512x1xf32> to vector<512x128xf32>
    %6 = arith.addf %3, %5 : vector<512x128xf32>
    %cst_6 = arith.constant 0.000000e+00 : f32
    %7 = vector.broadcast %cst_6 : f32 to vector<512x128xf32>
    %8 = arith.maximumf %6, %7 : vector<512x128xf32>
    %9 = arith.truncf %8 : vector<512x128xf32> to vector<512x128xbf16>
    %c0_7 = arith.constant 0 : index
    %c0_8 = arith.constant 0 : index
    %10 = vector.load %arg5[%c0_7, %c0_8] : memref<512x512xbf16, #tpu.memory_space<vmem>>, vector<512x512xbf16>
    %cst_9 = arith.constant dense<0.000000e+00> : vector<512x128xf32>
    %11 = tpu.matmul %10, %9, %cst_9 {dimension_numbers = #tpu.dot_dimension_numbers<[1], [0], [0], [1], [0, 0, 1, 1], [], []>} : vector<512x512xbf16>, vector<512x128xbf16>, vector<512x128xf32> -> vector<512x128xf32>
    %c0_10 = arith.constant 0 : index
    %c0_11 = arith.constant 0 : index
    %12 = vector.load %arg6[%c0_10, %c0_11] : memref<512x1xf32, #tpu.memory_space<vmem>>, vector<512x1xf32>
    %13 = vector.broadcast %12 : vector<512x1xf32> to vector<512x128xf32>
    %14 = arith.addf %11, %13 : vector<512x128xf32>
    %cst_12 = arith.constant 0.000000e+00 : f32
    %15 = vector.broadcast %cst_12 : f32 to vector<512x128xf32>
    %16 = arith.maximumf %14, %15 : vector<512x128xf32>
    %17 = arith.truncf %16 : vector<512x128xf32> to vector<512x128xbf16>
    %c0_13 = arith.constant 0 : index
    %c0_14 = arith.constant 0 : index
    %18 = vector.load %arg7[%c0_13, %c0_14] : memref<8x512xbf16, #tpu.memory_space<vmem>>, vector<8x512xbf16>
    %cst_15 = arith.constant dense<0.000000e+00> : vector<8x128xf32>
    %19 = tpu.matmul %18, %17, %cst_15 {dimension_numbers = #tpu.dot_dimension_numbers<[1], [0], [0], [1], [0, 0, 1, 1], [], []>} : vector<8x512xbf16>, vector<512x128xbf16>, vector<8x128xf32> -> vector<8x128xf32>
    %c0_16 = arith.constant 0 : index
    %c0_17 = arith.constant 0 : index
    %20 = vector.load %arg8[%c0_16, %c0_17] : memref<8x1xf32, #tpu.memory_space<vmem>>, vector<8x1xf32>
    %21 = vector.broadcast %20 : vector<8x1xf32> to vector<8x128xf32>
    %22 = arith.addf %19, %21 : vector<8x128xf32>
    %c0_18 = arith.constant 0 : index
    %c0_19 = arith.constant 0 : index
    %c0_20 = arith.constant 0 : index
    %23 = vector.load %arg9[%c0_18, %c0_19, %c0_20] : memref<1x8x128xf32, #tpu.memory_space<vmem>>, vector<1x8x128xf32>
    %24 = vector.shape_cast %23 : vector<1x8x128xf32> to vector<8x128xf32>
    %25 = vector.shape_cast %22 : vector<8x128xf32> to vector<1x8x128xf32>
    tpu.vector_store %arg9[%c0_18, %c0_19, %c0_20], %25 {strides = array<i32>} : memref<1x8x128xf32, #tpu.memory_space<vmem>>, vector<1x8x128xf32>,
    return
  }
  func.func @transform_0(%arg0: i32, %arg1: i32) -> (i32, i32, i32) {
    %c0_i32 = arith.constant 0 : i32
    %c0_i32_0 = arith.constant 0 : i32
    return %arg0, %c0_i32, %arg1 : i32, i32, i32
  }
  func.func @transform_1(%arg0: i32, %arg1: i32) -> (i32, i32) {
    %c0_i32 = arith.constant 0 : i32
    %c0_i32_0 = arith.constant 0 : i32
    %c0_i32_1 = arith.constant 0 : i32
    return %c0_i32, %c0_i32_0 : i32, i32
  }
  func.func @transform_2(%arg0: i32, %arg1: i32) -> (i32, i32) {
    %c0_i32 = arith.constant 0 : i32
    %c0_i32_0 = arith.constant 0 : i32
    %c0_i32_1 = arith.constant 0 : i32
    return %c0_i32, %c0_i32_0 : i32, i32
  }
  func.func @transform_3(%arg0: i32, %arg1: i32) -> (i32, i32) {
    %c0_i32 = arith.constant 0 : i32
    %c0_i32_0 = arith.constant 0 : i32
    %c0_i32_1 = arith.constant 0 : i32
    return %c0_i32, %c0_i32_0 : i32, i32
  }
  func.func @transform_4(%arg0: i32, %arg1: i32) -> (i32, i32) {
    %c0_i32 = arith.constant 0 : i32
    %c0_i32_0 = arith.constant 0 : i32
    %c0_i32_1 = arith.constant 0 : i32
    return %c0_i32, %c0_i32_0 : i32, i32
  }
  func.func @transform_5(%arg0: i32, %arg1: i32) -> (i32, i32) {
    %c0_i32 = arith.constant 0 : i32
    %c0_i32_0 = arith.constant 0 : i32
    %c0_i32_1 = arith.constant 0 : i32
    return %c0_i32, %c0_i32_0 : i32, i32
  }
  func.func @transform_6(%arg0: i32, %arg1: i32) -> (i32, i32) {
    %c0_i32 = arith.constant 0 : i32
    %c0_i32_0 = arith.constant 0 : i32
    %c0_i32_1 = arith.constant 0 : i32
    return %c0_i32, %c0_i32_0 : i32, i32
  }
  func.func @transform_7(%arg0: i32, %arg1: i32) -> (i32, i32, i32) {
    %c0_i32 = arith.constant 0 : i32
    %c0_i32_0 = arith.constant 0 : i32
    return %arg0, %c0_i32, %arg1 : i32, i32, i32
  }
}

module attributes {stable_mosaic.version = 11 : i64} {
  func.func @_fold2_kernel(%arg0: i32, %arg1: i32, %arg2: memref<1x128x128xbf16, #tpu.memory_space<vmem>>, %arg3: memref<512x128xbf16, #tpu.memory_space<vmem>>, %arg4: memref<512x1xf32, #tpu.memory_space<vmem>>, %arg5: memref<512x512xbf16, #tpu.memory_space<vmem>>, %arg6: memref<512x1xf32, #tpu.memory_space<vmem>>, %arg7: memref<8x512xbf16, #tpu.memory_space<vmem>>, %arg8: memref<8x1xf32, #tpu.memory_space<vmem>>, %arg9: memref<1x8x128xf32, #tpu.memory_space<vmem>>) attributes {dimension_semantics = [#tpu.dimension_semantics<parallel>, #tpu.dimension_semantics<parallel>], iteration_bounds = array<i64: 2, 1>, scalar_prefetch = 0 : i64, scratch_operands = 0 : i64, tpu.core_type = #tpu.core_type<tc>, window_params = [{transform_indices = @transform_0, window_bounds = array<i64: 1, 128, 128>}, {pipeline_mode = #tpu.pipeline_mode<synchronous>, transform_indices = @transform_1, window_bounds = array<i64: 512, 128>}, {pipeline_mode = #tpu.pipeline_mode<synchronous>, transform_indices = @transform_2, window_bounds = array<i64: 512, 1>}, {pipeline_mode = #tpu.pipeline_mode<synchronous>, transform_indices = @transform_3, window_bounds = array<i64: 512, 512>}, {pipeline_mode = #tpu.pipeline_mode<synchronous>, transform_indices = @transform_4, window_bounds = array<i64: 512, 1>}, {pipeline_mode = #tpu.pipeline_mode<synchronous>, transform_indices = @transform_5, window_bounds = array<i64: 8, 512>}, {pipeline_mode = #tpu.pipeline_mode<synchronous>, transform_indices = @transform_6, window_bounds = array<i64: 8, 1>}, {transform_indices = @transform_7, window_bounds = array<i64: 1, 8, 128>}]} {
    %c0 = arith.constant 0 : index
    %c0_0 = arith.constant 0 : index
    %c0_1 = arith.constant 0 : index
    %0 = vector.load %arg2[%c0, %c0_0, %c0_1] : memref<1x128x128xbf16, #tpu.memory_space<vmem>>, vector<1x128x128xbf16>
    %1 = vector.shape_cast %0 : vector<1x128x128xbf16> to vector<128x128xbf16>
    %c0_2 = arith.constant 0 : index
    %c0_3 = arith.constant 0 : index
    %2 = vector.load %arg3[%c0_2, %c0_3] : memref<512x128xbf16, #tpu.memory_space<vmem>>, vector<512x128xbf16>
    %cst = arith.constant dense<0.000000e+00> : vector<512x128xf32>
    %3 = tpu.matmul %2, %1, %cst {dimension_numbers = #tpu.dot_dimension_numbers<[1], [0], [0], [1], [0, 0, 1, 1], [], []>} : vector<512x128xbf16>, vector<128x128xbf16>, vector<512x128xf32> -> vector<512x128xf32>
    %c0_4 = arith.constant 0 : index
    %c0_5 = arith.constant 0 : index
    %4 = vector.load %arg4[%c0_4, %c0_5] : memref<512x1xf32, #tpu.memory_space<vmem>>, vector<512x1xf32>
    %5 = vector.broadcast %4 : vector<512x1xf32> to vector<512x128xf32>
    %6 = arith.addf %3, %5 : vector<512x128xf32>
    %cst_6 = arith.constant 0.000000e+00 : f32
    %7 = vector.broadcast %cst_6 : f32 to vector<512x128xf32>
    %8 = arith.maximumf %6, %7 : vector<512x128xf32>
    %9 = arith.truncf %8 : vector<512x128xf32> to vector<512x128xbf16>
    %c0_7 = arith.constant 0 : index
    %c0_8 = arith.constant 0 : index
    %10 = vector.load %arg5[%c0_7, %c0_8] : memref<512x512xbf16, #tpu.memory_space<vmem>>, vector<512x512xbf16>
    %cst_9 = arith.constant dense<0.000000e+00> : vector<512x128xf32>
    %11 = tpu.matmul %10, %9, %cst_9 {dimension_numbers = #tpu.dot_dimension_numbers<[1], [0], [0], [1], [0, 0, 1, 1], [], []>} : vector<512x512xbf16>, vector<512x128xbf16>, vector<512x128xf32> -> vector<512x128xf32>
    %c0_10 = arith.constant 0 : index
    %c0_11 = arith.constant 0 : index
    %12 = vector.load %arg6[%c0_10, %c0_11] : memref<512x1xf32, #tpu.memory_space<vmem>>, vector<512x1xf32>
    %13 = vector.broadcast %12 : vector<512x1xf32> to vector<512x128xf32>
    %14 = arith.addf %11, %13 : vector<512x128xf32>
    %cst_12 = arith.constant 0.000000e+00 : f32
    %15 = vector.broadcast %cst_12 : f32 to vector<512x128xf32>
    %16 = arith.maximumf %14, %15 : vector<512x128xf32>
    %17 = arith.truncf %16 : vector<512x128xf32> to vector<512x128xbf16>
    %c0_13 = arith.constant 0 : index
    %c0_14 = arith.constant 0 : index
    %18 = vector.load %arg7[%c0_13, %c0_14] : memref<8x512xbf16, #tpu.memory_space<vmem>>, vector<8x512xbf16>
    %cst_15 = arith.constant dense<0.000000e+00> : vector<8x128xf32>
    %19 = tpu.matmul %18, %17, %cst_15 {dimension_numbers = #tpu.dot_dimension_numbers<[1], [0], [0], [1], [0, 0, 1, 1], [], []>} : vector<8x512xbf16>, vector<512x128xbf16>, vector<8x128xf32> -> vector<8x128xf32>
    %c0_16 = arith.constant 0 : index
    %c0_17 = arith.constant 0 : index
    %20 = vector.load %arg8[%c0_16, %c0_17] : memref<8x1xf32, #tpu.memory_space<vmem>>, vector<8x1xf32>
    %21 = vector.broadcast %20 : vector<8x1xf32> to vector<8x128xf32>
    %22 = arith.addf %19, %21 : vector<8x128xf32>
    %c0_18 = arith.constant 0 : index
    %c0_19 = arith.constant 0 : index
    %c0_20 = arith.constant 0 : index
    %23 = vector.load %arg9[%c0_18, %c0_19, %c0_20] : memref<1x8x128xf32, #tpu.memory_space<vmem>>, vector<1x8x128xf32>
    %24 = vector.shape_cast %23 : vector<1x8x128xf32> to vector<8x128xf32>
    %25 = vector.shape_cast %22 : vector<8x128xf32> to vector<1x8x128xf32>
    tpu.vector_store %arg9[%c0_18, %c0_19, %c0_20], %25 {strides = array<i32>} : memref<1x8x128xf32, #tpu.memory_space<vmem>>, vector<1x8x128xf32>,
    return
  }
  func.func @transform_0(%arg0: i32, %arg1: i32) -> (i32, i32, i32) {
    %c0_i32 = arith.constant 0 : i32
    %c0_i32_0 = arith.constant 0 : i32
    return %arg0, %c0_i32, %arg1 : i32, i32, i32
  }
  func.func @transform_1(%arg0: i32, %arg1: i32) -> (i32, i32) {
    %c0_i32 = arith.constant 0 : i32
    %c0_i32_0 = arith.constant 0 : i32
    %c0_i32_1 = arith.constant 0 : i32
    return %c0_i32, %c0_i32_0 : i32, i32
  }
  func.func @transform_2(%arg0: i32, %arg1: i32) -> (i32, i32) {
    %c0_i32 = arith.constant 0 : i32
    %c0_i32_0 = arith.constant 0 : i32
    %c0_i32_1 = arith.constant 0 : i32
    return %c0_i32, %c0_i32_0 : i32, i32
  }
  func.func @transform_3(%arg0: i32, %arg1: i32) -> (i32, i32) {
    %c0_i32 = arith.constant 0 : i32
    %c0_i32_0 = arith.constant 0 : i32
    %c0_i32_1 = arith.constant 0 : i32
    return %c0_i32, %c0_i32_0 : i32, i32
  }
  func.func @transform_4(%arg0: i32, %arg1: i32) -> (i32, i32) {
    %c0_i32 = arith.constant 0 : i32
    %c0_i32_0 = arith.constant 0 : i32
    %c0_i32_1 = arith.constant 0 : i32
    return %c0_i32, %c0_i32_0 : i32, i32
  }
  func.func @transform_5(%arg0: i32, %arg1: i32) -> (i32, i32) {
    %c0_i32 = arith.constant 0 : i32
    %c0_i32_0 = arith.constant 0 : i32
    %c0_i32_1 = arith.constant 0 : i32
    return %c0_i32, %c0_i32_0 : i32, i32
  }
  func.func @transform_6(%arg0: i32, %arg1: i32) -> (i32, i32) {
    %c0_i32 = arith.constant 0 : i32
    %c0_i32_0 = arith.constant 0 : i32
    %c0_i32_1 = arith.constant 0 : i32
    return %c0_i32, %c0_i32_0 : i32, i32
  }
  func.func @transform_7(%arg0: i32, %arg1: i32) -> (i32, i32, i32) {
    %c0_i32 = arith.constant 0 : i32
    %c0_i32_0 = arith.constant 0 : i32
    return %arg0, %c0_i32, %arg1 : i32, i32, i32
  }
}

</mosaic_0001>

<llo_original>
// kernel: tpu_custom_call.1
$region0: #{tpu_custom_call.1}
  #allocation0 [shape = 'u32[]', space=smem, size = 0x4, offset = 0x4, fixed_abs, tag = 'smem constant byte address 0x4 - core index']
  #allocation1 [shape = 'u32[144,128]{1,0:T(1,128)}', space=vmem, size = 0x12000, scoped, tag = 'internal scratch']
  %s0 = inlined_call_operand.hbm [shape: bf16[2,128,128], index: 0, kind: input, shape index: {}]
  %s1 = inlined_call_operand.hbm [shape: bf16[512,128], index: 1, kind: input, shape index: {}]
  %s2 = inlined_call_operand.vmem [shape: f32[512,1], index: 2, kind: input, shape index: {}]
  %s3 = inlined_call_operand.vmem [shape: bf16[512,512], index: 3, kind: input, shape index: {}]
  %s4 = inlined_call_operand.vmem [shape: f32[512,1], index: 4, kind: input, shape index: {}]
  %s5 = inlined_call_operand.vmem [shape: bf16[8,512], index: 5, kind: input, shape index: {}]
  %s6 = inlined_call_operand.vmem [shape: f32[8,1], index: 6, kind: input, shape index: {}]
  %s7 = inlined_call_operand.hbm [shape: f32[2,8,128], index: 7, kind: output, shape index: {}]
  %s8 = sld [smem:[#allocation0]]
  $region69: #{tpu_custom_call.1} parent=0
    _
  %s10 = ssub.s32 1, %s8
  %s11 = scalar_select 0, %s10, %s8
  $region1: #{tpu_custom_call.1} parent=0
    #allocation2 [shape = 'u8[65536]{0}', space=vmem, size = 0x10000, scoped, tag = 'input window, operand 0']
    #allocation3 [shape = 's32[2]{0}', space=sflag, size = 0x8, scoped, tag = 'scoped memory for tpu_custom_call.1']
    #allocation4 [shape = 's32[2]{0}', space=sflag, size = 0x8, scoped, tag = 'scoped memory for tpu_custom_call.1']
    #allocation5 [shape = 'u8[131072]{0}', space=vmem, size = 0x20000, scoped, tag = 'input window, operand 1, single buffered']
    #allocation6 [shape = 's32[1]{0}', space=sflag, size = 0x4, scoped, tag = 'scoped memory for tpu_custom_call.1']
    #allocation7 [shape = 'u8[8192]{0}', space=vmem, size = 0x2000, scoped, tag = 'output window, operand 0']
    %12 = vsyncpa [#allocation3], 0
    %s13 = scalar_lea.sflag [#allocation3], 1
    %14 = vsyncpa %s13, 0
    %15 = vsyncpa [#allocation6], 0
    %16 = vsyncpa [#allocation4], 0
    %s17 = scalar_lea.sflag [#allocation4], 1
    %18 = vsyncpa %s17, 0
    loop: start=0, step=1, limit=4
    $region2: #{tpu_custom_call.1} parent=1 // loop_pre_header
      _
    $region3: #{tpu_custom_call.1} parent=1 // loop_header
      %s20 = sphi 0, %s24
      %p21 = scmp.ge.s32.totalorder %s20, 4
      %s27 = sphi 0, %s39
      %s28 = sphi 0, %s35
      %s29 = sphi 0, %s27
      %s30 = sphi 0, %s28
      %s31 = sphi 0, %s29
      %s32 = sphi 0, %s30
      %s44 = sphi 0, %s46
      %s47 = sphi 0, %s44
      %s48 = sphi 0, %s47
      %s64 = sphi 0, %s48
      %s68 = sphi 0, %s68
      %s70 = sphi 0, %s68
      %s71 = sphi 0, %s70
      %s85 = sphi 0, %s71
      %s89 = sphi 0, %s89
      %s91 = sphi 0, %s89
      %s92 = sphi 0, %s91
      %s106 = sphi 0, %s92
      %s110 = sphi 0, %s110
      %s112 = sphi 0, %s110
      %s113 = sphi 0, %s112
      %s127 = sphi 0, %s113
      %s131 = sphi 0, %s131
      %s133 = sphi 0, %s131
      %s134 = sphi 0, %s133
      %s148 = sphi 0, %s134
      %s152 = sphi 0, %s152
      %s154 = sphi 0, %s152
      %s155 = sphi 0, %s154
      %s169 = sphi 0, %s155
      %s173 = sphi 0, %s173
      %s175 = sphi 0, %s173
      %s176 = sphi 0, %s175
      %s190 = sphi 0, %s176
      %s198 = sphi 0, %s200
      %s201 = sphi 0, %s198
      %s202 = sphi 0, %s201
      %s218 = sphi 0, %s202
    $region4: #{tpu_custom_call.1} parent=1 // loop_header_branch
      %23 = sbr.rel (%p21) target = $region8
    $region5: #{tpu_custom_call.1} parent=1 // loop_body
      %s25 = ssub.s32 %s20, 1
      %s26 = ssub.s32 %s20, 2
      %s33 = sadd.s32 1, %s28
      %p34 = scmp.ge.s32.totalorder %s33, 1
      %s35 = scalar_select %p34, 0, %s33
      %s36 = sadd.s32 1, %s27
      %s37 = scalar_select %p34, %s36, %s27
      %p38 = scmp.ge.s32.totalorder %s37, 2
      %s39 = scalar_select %p38, 0, %s37
      %s40 = ssub.s32 %s27, %s39
      %s41 = ssub.s32 %s28, %s35
      %s42 = sor.u32 %s40, %s41
      %p43 = scmp.eq.s32.totalorder %s42, 0
      %s45 = sadd.s32 %s44, 1
      %s46 = scalar_select %p43, %s44, %s45
      %p49 = pneg %p43
      %p50 = scmp.eq.s32.totalorder %s20, 1
      %p51 = por %p49, %p50
      %p52 = scmp.ne.s32.totalorder %s44, %s47
      %p53 = scmp.eq.s32.totalorder %s20, 0
      %p54 = por %p52, %p53
      %p55 = scmp.ne.s32.totalorder %s44, %s47
      %p56 = scmp.eq.s32.totalorder %s25, 1
      %p57 = por %p55, %p56
      %p58 = scmp.ne.s32.totalorder %s47, %s48
      %p59 = scmp.eq.s32.totalorder %s25, 0
      %p60 = por %p58, %p59
      %p61 = scmp.ne.s32.totalorder %s47, %s48
      %p62 = scmp.eq.s32.totalorder %s26, 1
      %p63 = por %p61, %p62
      %p65 = scmp.ne.s32.totalorder %s48, %s64
      %p66 = scmp.eq.s32.totalorder %s26, 0
      %p67 = por %p65, %p66
      %s69 = sadd.s32 %s68, 1
      %p72 = scmp.eq.s32.totalorder %s20, 1
      %p73 = scmp.ne.s32.totalorder %s68, %s70
      %p74 = scmp.eq.s32.totalorder %s20, 0
      %p75 = por %p73, %p74
      %p76 = scmp.ne.s32.totalorder %s68, %s70
      %p77 = scmp.eq.s32.totalorder %s25, 1
      %p78 = por %p76, %p77
      %p79 = scmp.ne.s32.totalorder %s70, %s71
      %p80 = scmp.eq.s32.totalorder %s25, 0
      %p81 = por %p79, %p80
      %p82 = scmp.ne.s32.totalorder %s70, %s71
      %p83 = scmp.eq.s32.totalorder %s26, 1
      %p84 = por %p82, %p83
      %p86 = scmp.ne.s32.totalorder %s71, %s85
      %p87 = scmp.eq.s32.totalorder %s26, 0
      %p88 = por %p86, %p87
      %s90 = sadd.s32 %s89, 1
      %p93 = scmp.eq.s32.totalorder %s20, 1
      %p94 = scmp.ne.s32.totalorder %s89, %s91
      %p95 = scmp.eq.s32.totalorder %s20, 0
      %p96 = por %p94, %p95
      %p97 = scmp.ne.s32.totalorder %s89, %s91
      %p98 = scmp.eq.s32.totalorder %s25, 1
      %p99 = por %p97, %p98
      %p100 = scmp.ne.s32.totalorder %s91, %s92
      %p101 = scmp.eq.s32.totalorder %s25, 0
      %p102 = por %p100, %p101
      %p103 = scmp.ne.s32.totalorder %s91, %s92
      %p104 = scmp.eq.s32.totalorder %s26, 1
      %p105 = por %p103, %p104
      %p107 = scmp.ne.s32.totalorder %s92, %s106
      %p108 = scmp.eq.s32.totalorder %s26, 0
      %p109 = por %p107, %p108
      %s111 = sadd.s32 %s110, 1
      %p114 = scmp.eq.s32.totalorder %s20, 1
      %p115 = scmp.ne.s32.totalorder %s110, %s112
      %p116 = scmp.eq.s32.totalorder %s20, 0
      %p117 = por %p115, %p116
      %p118 = scmp.ne.s32.totalorder %s110, %s112
      %p119 = scmp.eq.s32.totalorder %s25, 1
      %p120 = por %p118, %p119
      %p121 = scmp.ne.s32.totalorder %s112, %s113
      %p122 = scmp.eq.s32.totalorder %s25, 0
      %p123 = por %p121, %p122
      %p124 = scmp.ne.s32.totalorder %s112, %s113
      %p125 = scmp.eq.s32.totalorder %s26, 1
      %p126 = por %p124, %p125
      %p128 = scmp.ne.s32.totalorder %s113, %s127
      %p129 = scmp.eq.s32.totalorder %s26, 0
      %p130 = por %p128, %p129
      %s132 = sadd.s32 %s131, 1
      %p135 = scmp.eq.s32.totalorder %s20, 1
      %p136 = scmp.ne.s32.totalorder %s131, %s133
      %p137 = scmp.eq.s32.totalorder %s20, 0
      %p138 = por %p136, %p137
      %p139 = scmp.ne.s32.totalorder %s131, %s133
      %p140 = scmp.eq.s32.totalorder %s25, 1
      %p141 = por %p139, %p140
      %p142 = scmp.ne.s32.totalorder %s133, %s134
      %p143 = scmp.eq.s32.totalorder %s25, 0
      %p144 = por %p142, %p143
      %p145 = scmp.ne.s32.totalorder %s133, %s134
      %p146 = scmp.eq.s32.totalorder %s26, 1
      %p147 = por %p145, %p146
      %p149 = scmp.ne.s32.totalorder %s134, %s148
      %p150 = scmp.eq.s32.totalorder %s26, 0
      %p151 = por %p149, %p150
      %s153 = sadd.s32 %s152, 1
      %p156 = scmp.eq.s32.totalorder %s20, 1
      %p157 = scmp.ne.s32.totalorder %s152, %s154
      %p158 = scmp.eq.s32.totalorder %s20, 0
      %p159 = por %p157, %p158
      %p160 = scmp.ne.s32.totalorder %s152, %s154
      %p161 = scmp.eq.s32.totalorder %s25, 1
      %p162 = por %p160, %p161
      %p163 = scmp.ne.s32.totalorder %s154, %s155
      %p164 = scmp.eq.s32.totalorder %s25, 0
      %p165 = por %p163, %p164
      %p166 = scmp.ne.s32.totalorder %s154, %s155
      %p167 = scmp.eq.s32.totalorder %s26, 1
      %p168 = por %p166, %p167
      %p170 = scmp.ne.s32.totalorder %s155, %s169
      %p171 = scmp.eq.s32.totalorder %s26, 0
      %p172 = por %p170, %p171
      %s174 = sadd.s32 %s173, 1
      %p177 = scmp.eq.s32.totalorder %s20, 1
      %p178 = scmp.ne.s32.totalorder %s173, %s175
      %p179 = scmp.eq.s32.totalorder %s20, 0
      %p180 = por %p178, %p179
      %p181 = scmp.ne.s32.totalorder %s173, %s175
      %p182 = scmp.eq.s32.totalorder %s25, 1
      %p183 = por %p181, %p182
      %p184 = scmp.ne.s32.totalorder %s175, %s176
      %p185 = scmp.eq.s32.totalorder %s25, 0
      %p186 = por %p184, %p185
      %p187 = scmp.ne.s32.totalorder %s175, %s176
      %p188 = scmp.eq.s32.totalorder %s26, 1
      %p189 = por %p187, %p188
      %p191 = scmp.ne.s32.totalorder %s176, %s190
      %p192 = scmp.eq.s32.totalorder %s26, 0
      %p193 = por %p191, %p192
      %s194 = ssub.s32 %s27, %s39
      %s195 = ssub.s32 %s28, %s35
      %s196 = sor.u32 %s194, %s195
      %p197 = scmp.eq.s32.totalorder %s196, 0
      %s199 = sadd.s32 %s198, 1
      %s200 = scalar_select %p197, %s198, %s199
      %p203 = pneg %p197
      %p204 = scmp.eq.s32.totalorder %s20, 1
      %p205 = por %p203, %p204
      %p206 = scmp.ne.s32.totalorder %s198, %s201
      %p207 = scmp.eq.s32.totalorder %s20, 0
      %p208 = por %p206, %p207
      %p209 = scmp.ne.s32.totalorder %s198, %s201
      %p210 = scmp.eq.s32.totalorder %s25, 1
      %p211 = por %p209, %p210
      %p212 = scmp.ne.s32.totalorder %s201, %s202
      %p213 = scmp.eq.s32.totalorder %s25, 0
      %p214 = por %p212, %p213
      %p215 = scmp.ne.s32.totalorder %s201, %s202
      %p216 = scmp.eq.s32.totalorder %s26, 1
      %p217 = por %p215, %p216
      %p219 = scmp.ne.s32.totalorder %s202, %s218
      %p220 = scmp.eq.s32.totalorder %s26, 0
      %p221 = por %p219, %p220
      %p222 = scmp.le.s32.totalorder 1, %s20
      %p223 = scmp.lt.s32.totalorder %s20, 3
      %p224 = pnand %p222, %p223
      %p225 = pneg %p224
      // Predicated region
      $region9: #{tpu_custom_call.1} parent=5 // pred_check
        _
      $region10: #{tpu_custom_call.1} parent=5 // pred_check_branch
        %227 = sbr.rel (%p224) target = $region12
      $region11: #{tpu_custom_call.1} parent=5 // pred_region
        %s228 = ssub.s32 %s20, 1
        // Predicated region
        $region13: #{tpu_custom_call.1} parent=11 // pred_check
          %p229 = pneg %p81
        $region14: #{tpu_custom_call.1} parent=11 // pred_check_branch
          %231 = sbr.rel (%p229) target = $region16
        $region15: #{tpu_custom_call.1} parent=11 // pred_region
          %s233 = ssub.s32 4096, 4096
          %234 = vsyncadd [#allocation6], %s233
          %s235 = sshll.u32 [#allocation5], 4
          %s236 = int_to_ptr.vmem [resolvable:$true] %s235
          %241 = dma.hbm_to_vmem [thread:$0]  %s1, 4096, %s236, [#allocation6], 64, 64, 4
        $region16: #{tpu_custom_call.1} parent=11 // pred_fallthru
          _
        // Predicated region
        $region17: #{tpu_custom_call.1} parent=11 // pred_check
          %p242 = pneg %p102
        $region18: #{tpu_custom_call.1} parent=11 // pred_check_branch
          %244 = sbr.rel (%p242) target = $region20
        $region19: #{tpu_custom_call.1} parent=11 // pred_region
          _
        $region20: #{tpu_custom_call.1} parent=11 // pred_fallthru
          _
        // Predicated region
        $region21: #{tpu_custom_call.1} parent=11 // pred_check
          %p245 = pneg %p123
        $region22: #{tpu_custom_call.1} parent=11 // pred_check_branch
          %247 = sbr.rel (%p245) target = $region24
        $region23: #{tpu_custom_call.1} parent=11 // pred_region
          _
        $region24: #{tpu_custom_call.1} parent=11 // pred_fallthru
          _
        // Predicated region
        $region25: #{tpu_custom_call.1} parent=11 // pred_check
          %p248 = pneg %p144
        $region26: #{tpu_custom_call.1} parent=11 // pred_check_branch
          %250 = sbr.rel (%p248) target = $region28
        $region27: #{tpu_custom_call.1} parent=11 // pred_region
          _
        $region28: #{tpu_custom_call.1} parent=11 // pred_fallthru
          _
        // Predicated region
        $region29: #{tpu_custom_call.1} parent=11 // pred_check
          %p251 = pneg %p165
        $region30: #{tpu_custom_call.1} parent=11 // pred_check_branch
          %253 = sbr.rel (%p251) target = $region32
        $region31: #{tpu_custom_call.1} parent=11 // pred_region
          _
        $region32: #{tpu_custom_call.1} parent=11 // pred_fallthru
          _
        // Predicated region
        $region33: #{tpu_custom_call.1} parent=11 // pred_check
          %p254 = pneg %p186
        $region34: #{tpu_custom_call.1} parent=11 // pred_check_branch
          %256 = sbr.rel (%p254) target = $region36
        $region35: #{tpu_custom_call.1} parent=11 // pred_region
          _
        $region36: #{tpu_custom_call.1} parent=11 // pred_fallthru
          _
      $region12: #{tpu_custom_call.1} parent=5 // pred_fallthru
        _
      %p257 = scmp.lt.s32.totalorder %s20, 2
      // Predicated region
      $region37: #{tpu_custom_call.1} parent=5 // pred_check
        %p258 = pneg %p257
      $region38: #{tpu_custom_call.1} parent=5 // pred_check_branch
        %260 = sbr.rel (%p258) target = $region40
      $region39: #{tpu_custom_call.1} parent=5 // pred_region
        // Predicated region
        $region41: #{tpu_custom_call.1} parent=39 // pred_check
          %p261 = pneg %p54
        $region42: #{tpu_custom_call.1} parent=39 // pred_check_branch
          %263 = sbr.rel (%p261) target = $region44
        $region43: #{tpu_custom_call.1} parent=39 // pred_region
          %s264 = sand.u32 %s44, 1
          %s265 = scalar_lea.sflag [#allocation3], %s264
          %s266 = sand.u32 %s44, 1
          %s267 = smul.addr %s266, 64
          %s268 = scalar_lea.vmem [#allocation2], %s267
          %s270 = ssub.s32 1024, 1024
          %271 = vsyncadd %s265, %s270
          %s272 = smul.addr %s27, 16
          %s273 = sadd.s32 %s28, %s272
          %s274 = smul.addr %s273, 64
          %s275 = scalar_lea.hbm %s0, %s274
          %s276 = sshll.u32 %s268, 4
          %s277 = int_to_ptr.vmem [resolvable:$true] %s276
          %282 = dma.hbm_to_vmem [thread:$0]  %s275, 1024, %s277, %s265, 64, 64, 4
        $region44: #{tpu_custom_call.1} parent=39 // pred_fallthru
          _
      $region40: #{tpu_custom_call.1} parent=5 // pred_fallthru
        _
      %p283 = scmp.le.s32.totalorder 1, %s20
      %p284 = scmp.lt.s32.totalorder %s20, 3
      %p285 = pnand %p283, %p284
      %p286 = pneg %p285
      // Predicated region
      $region45: #{tpu_custom_call.1} parent=5 // pred_check
        _
      $region46: #{tpu_custom_call.1} parent=5 // pred_check_branch
        %288 = sbr.rel (%p285) target = $region48
      $region47: #{tpu_custom_call.1} parent=5 // pred_region
        %s289 = ssub.s32 %s20, 1
        %s290 = sand.u32 %s47, 1
        %s291 = scalar_lea.sflag [#allocation3], %s290
        %s292 = sand.u32 %s47, 1
        %s293 = smul.addr %s292, 64
        %s294 = scalar_lea.vmem [#allocation2], %s293
        // Predicated region
        $region49: #{tpu_custom_call.1} parent=47 // pred_check
          %p295 = pneg %p60
        $region50: #{tpu_custom_call.1} parent=47 // pred_check_branch
          %297 = sbr.rel (%p295) target = $region52
        $region51: #{tpu_custom_call.1} parent=47 // pred_region
          %298 = dma.done %s291, 1024
        $region52: #{tpu_custom_call.1} parent=47 // pred_fallthru
          _
        // Predicated region
        $region53: #{tpu_custom_call.1} parent=47 // pred_check
          %p299 = pneg %p81
        $region54: #{tpu_custom_call.1} parent=47 // pred_check_branch
          %301 = sbr.rel (%p299) target = $region56
        $region55: #{tpu_custom_call.1} parent=47 // pred_region
          %302 = dma.done [#allocation6], 4096
        $region56: #{tpu_custom_call.1} parent=47 // pred_fallthru
          _
        %s303 = sand.u32 %s47, 1
        %s304 = scalar_lea.sflag [#allocation3], %s303
        %s305 = sand.u32 %s47, 1
        %s306 = smul.addr %s305, 64
        %s307 = scalar_lea.vmem [#allocation2], %s306
        %p308 = pneg %p60
        %p309 = pneg %p57
        %p310 = pneg %p81
        %p311 = pneg %p78
        %p312 = pneg %p102
        %p313 = pneg %p99
        %p314 = pneg %p123
        %p315 = pneg %p120
        %p316 = pneg %p144
        %p317 = pneg %p141
        %p318 = pneg %p165
        %p319 = pneg %p162
        %p320 = pneg %p186
        %p321 = pneg %p183
        %p322 = pneg %p214
        %p323 = pneg %p211
        %s324 = sand.u32 %s201, 1
        %s325 = scalar_lea.sflag [#allocation4], %s324
        %s326 = sand.u32 %s201, 1
        %s327 = smul.addr %s326, 8
        %s328 = scalar_lea.vmem [#allocation7], %s327
        %v330 = vld [vmem:[%s294] sm:$0xf]
        %v331 = vld [vmem:[%s294 + $0x4] sm:$0xf]
        %v332 = vld [vmem:[%s294 + $0x8] sm:$0xf]
        %v333 = vld [vmem:[%s294 + $0xc] sm:$0xf]
        %v334 = vld [vmem:[%s294 + $0x10] sm:$0xf]
        %v335 = vld [vmem:[%s294 + $0x14] sm:$0xf]
        %v336 = vld [vmem:[%s294 + $0x18] sm:$0xf]
        %v337 = vld [vmem:[%s294 + $0x1c] sm:$0xf]
        %v338 = vld [vmem:[%s294 + $0x20] sm:$0xf]
        %v339 = vld [vmem:[%s294 + $0x24] sm:$0xf]
        %v340 = vld [vmem:[%s294 + $0x28] sm:$0xf]
        %v341 = vld [vmem:[%s294 + $0x2c] sm:$0xf]
        %v342 = vld [vmem:[%s294 + $0x30] sm:$0xf]
        %v343 = vld [vmem:[%s294 + $0x34] sm:$0xf]
        %v344 = vld [vmem:[%s294 + $0x38] sm:$0xf]
        %v345 = vld [vmem:[%s294 + $0x3c] sm:$0xf]
        %v346 = vld [vmem:[#allocation5] sm:$0xf]
        %v347 = vld [vmem:[#allocation5 + $0x4] sm:$0xf]
        %v348 = vld [vmem:[#allocation5 + $0x8] sm:$0xf]
        %v349 = vld [vmem:[#allocation5 + $0xc] sm:$0xf]
        %v350 = vld [vmem:[#allocation5 + $0x10] sm:$0xf]
        %v351 = vld [vmem:[#allocation5 + $0x14] sm:$0xf]
        %v352 = vld [vmem:[#allocation5 + $0x18] sm:$0xf]
        %v353 = vld [vmem:[#allocation5 + $0x1c] sm:$0xf]
        %v354 = vld [vmem:[#allocation5 + $0x20] sm:$0xf]
        %v355 = vld [vmem:[#allocation5 + $0x24] sm:$0xf]
        %v356 = vld [vmem:[#allocation5 + $0x28] sm:$0xf]
        %v357 = vld [vmem:[#allocation5 + $0x2c] sm:$0xf]
        %v358 = vld [vmem:[#allocation5 + $0x30] sm:$0xf]
        %v359 = vld [vmem:[#allocation5 + $0x34] sm:$0xf]
        %v360 = vld [vmem:[#allocation5 + $0x38] sm:$0xf]
        %v361 = vld [vmem:[#allocation5 + $0x3c] sm:$0xf]
        %v362 = vld [vmem:[#allocation5 + $0x40] sm:$0xf]
        %v363 = vld [vmem:[#allocation5 + $0x44] sm:$0xf]
        %v364 = vld [vmem:[#allocation5 + $0x48] sm:$0xf]
        %v365 = vld [vmem:[#allocation5 + $0x4c] sm:$0xf]
        %v366 = vld [vmem:[#allocation5 + $0x50] sm:$0xf]
        %v367 = vld [vmem:[#allocation5 + $0x54] sm:$0xf]
        %v368 = vld [vmem:[#allocation5 + $0x58] sm:$0xf]
        %v369 = vld [vmem:[#allocation5 + $0x5c] sm:$0xf]
        %v370 = vld [vmem:[#allocation5 + $0x60] sm:$0xf]
        %v371 = vld [vmem:[#allocation5 + $0x64] sm:$0xf]
        %v372 = vld [vmem:[#allocation5 + $0x68] sm:$0xf]
        %v373 = vld [vmem:[#allocation5 + $0x6c] sm:$0xf]
        %v374 = vld [vmem:[#allocation5 + $0x70] sm:$0xf]
        %v375 = vld [vmem:[#allocation5 + $0x74] sm:$0xf]
        %v376 = vld [vmem:[#allocation5 + $0x78] sm:$0xf]
        %v377 = vld [vmem:[#allocation5 + $0x7c] sm:$0xf]
        %v378 = vld [vmem:[#allocation5 + $0x80] sm:$0xf]
        %v379 = vld [vmem:[#allocation5 + $0x84] sm:$0xf]
        %v380 = vld [vmem:[#allocation5 + $0x88] sm:$0xf]
        %v381 = vld [vmem:[#allocation5 + $0x8c] sm:$0xf]
        %v382 = vld [vmem:[#allocation5 + $0x90] sm:$0xf]
        %v383 = vld [vmem:[#allocation5 + $0x94] sm:$0xf]
        %v384 = vld [vmem:[#allocation5 + $0x98] sm:$0xf]
        %v385 = vld [vmem:[#allocation5 + $0x9c] sm:$0xf]
        %v386 = vld [vmem:[#allocation5 + $0xa0] sm:$0xf]
        %v387 = vld [vmem:[#allocation5 + $0xa4] sm:$0xf]
        %v388 = vld [vmem:[#allocation5 + $0xa8] sm:$0xf]
        %v389 = vld [vmem:[#allocation5 + $0xac] sm:$0xf]
        %v390 = vld [vmem:[#allocation5 + $0xb0] sm:$0xf]
        %v391 = vld [vmem:[#allocation5 + $0xb4] sm:$0xf]
        %v392 = vld [vmem:[#allocation5 + $0xb8] sm:$0xf]
        %v393 = vld [vmem:[#allocation5 + $0xbc] sm:$0xf]
        %v394 = vld [vmem:[#allocation5 + $0xc0] sm:$0xf]
        %v395 = vld [vmem:[#allocation5 + $0xc4] sm:$0xf]
        %v396 = vld [vmem:[#allocation5 + $0xc8] sm:$0xf]
        %v397 = vld [vmem:[#allocation5 + $0xcc] sm:$0xf]
        %v398 = vld [vmem:[#allocation5 + $0xd0] sm:$0xf]
        %v399 = vld [vmem:[#allocation5 + $0xd4] sm:$0xf]
        %v400 = vld [vmem:[#allocation5 + $0xd8] sm:$0xf]
        %v401 = vld [vmem:[#allocation5 + $0xdc] sm:$0xf]
        %v402 = vld [vmem:[#allocation5 + $0xe0] sm:$0xf]
        %v403 = vld [vmem:[#allocation5 + $0xe4] sm:$0xf]
        %v404 = vld [vmem:[#allocation5 + $0xe8] sm:$0xf]
        %v405 = vld [vmem:[#allocation5 + $0xec] sm:$0xf]
        %v406 = vld [vmem:[#allocation5 + $0xf0] sm:$0xf]
        %v407 = vld [vmem:[#allocation5 + $0xf4] sm:$0xf]
        %v408 = vld [vmem:[#allocation5 + $0xf8] sm:$0xf]
        %v409 = vld [vmem:[#allocation5 + $0xfc] sm:$0xf]
        %v410 = vld [vmem:[%s2] sm:$0xff]
        %v411 = vld [vmem:[%s2 + $0x8] sm:$0xff]
        %v412 = vld [vmem:[%s2 + $0x10] sm:$0xff]
        %v413 = vld [vmem:[%s2 + $0x18] sm:$0xff]
        %v414 = vld [vmem:[%s2 + $0x20] sm:$0xff]
        %v415 = vld [vmem:[%s2 + $0x28] sm:$0xff]
        %v416 = vld [vmem:[%s2 + $0x30] sm:$0xff]
        %v417 = vld [vmem:[%s2 + $0x38] sm:$0xff]
        %v418 = vld [vmem:[%s2 + $0x40] sm:$0xff]
        %v419 = vld [vmem:[%s2 + $0x48] sm:$0xff]
        %v420 = vld [vmem:[%s2 + $0x50] sm:$0xff]
        %v421 = vld [vmem:[%s2 + $0x58] sm:$0xff]
        %v422 = vld [vmem:[%s2 + $0x60] sm:$0xff]
        %v423 = vld [vmem:[%s2 + $0x68] sm:$0xff]
        %v424 = vld [vmem:[%s2 + $0x70] sm:$0xff]
        %v425 = vld [vmem:[%s2 + $0x78] sm:$0xff]
        %v426 = vld [vmem:[%s2 + $0x80] sm:$0xff]
        %v427 = vld [vmem:[%s2 + $0x88] sm:$0xff]
        %v428 = vld [vmem:[%s2 + $0x90] sm:$0xff]
        %v429 = vld [vmem:[%s2 + $0x98] sm:$0xff]
        %v430 = vld [vmem:[%s2 + $0xa0] sm:$0xff]
        %v431 = vld [vmem:[%s2 + $0xa8] sm:$0xff]
        %v432 = vld [vmem:[%s2 + $0xb0] sm:$0xff]
        %v433 = vld [vmem:[%s2 + $0xb8] sm:$0xff]
        %v434 = vld [vmem:[%s2 + $0xc0] sm:$0xff]
        %v435 = vld [vmem:[%s2 + $0xc8] sm:$0xff]
        %v436 = vld [vmem:[%s2 + $0xd0] sm:$0xff]
        %v437 = vld [vmem:[%s2 + $0xd8] sm:$0xff]
        %v438 = vld [vmem:[%s2 + $0xe0] sm:$0xff]
        %v439 = vld [vmem:[%s2 + $0xe8] sm:$0xff]
        %v440 = vld [vmem:[%s2 + $0xf0] sm:$0xff]
        %v441 = vld [vmem:[%s2 + $0xf8] sm:$0xff]
        %v442 = vld [vmem:[%s2 + $0x100] sm:$0xff]
        %v443 = vld [vmem:[%s2 + $0x108] sm:$0xff]
        %v444 = vld [vmem:[%s2 + $0x110] sm:$0xff]
        %v445 = vld [vmem:[%s2 + $0x118] sm:$0xff]
        %v446 = vld [vmem:[%s2 + $0x120] sm:$0xff]
        %v447 = vld [vmem:[%s2 + $0x128] sm:$0xff]
        %v448 = vld [vmem:[%s2 + $0x130] sm:$0xff]
        %v449 = vld [vmem:[%s2 + $0x138] sm:$0xff]
        %v450 = vld [vmem:[%s2 + $0x140] sm:$0xff]
        %v451 = vld [vmem:[%s2 + $0x148] sm:$0xff]
        %v452 = vld [vmem:[%s2 + $0x150] sm:$0xff]
        %v453 = vld [vmem:[%s2 + $0x158] sm:$0xff]
        %v454 = vld [vmem:[%s2 + $0x160] sm:$0xff]
        %v455 = vld [vmem:[%s2 + $0x168] sm:$0xff]
        %v456 = vld [vmem:[%s2 + $0x170] sm:$0xff]
        %v457 = vld [vmem:[%s2 + $0x178] sm:$0xff]
        %v458 = vld [vmem:[%s2 + $0x180] sm:$0xff]
        %v459 = vld [vmem:[%s2 + $0x188] sm:$0xff]
        %v460 = vld [vmem:[%s2 + $0x190] sm:$0xff]
        %v461 = vld [vmem:[%s2 + $0x198] sm:$0xff]
        %v462 = vld [vmem:[%s2 + $0x1a0] sm:$0xff]
        %v463 = vld [vmem:[%s2 + $0x1a8] sm:$0xff]
        %v464 = vld [vmem:[%s2 + $0x1b0] sm:$0xff]
        %v465 = vld [vmem:[%s2 + $0x1b8] sm:$0xff]
        %v466 = vld [vmem:[%s2 + $0x1c0] sm:$0xff]
        %v467 = vld [vmem:[%s2 + $0x1c8] sm:$0xff]
        %v468 = vld [vmem:[%s2 + $0x1d0] sm:$0xff]
        %v469 = vld [vmem:[%s2 + $0x1d8] sm:$0xff]
        %v470 = vld [vmem:[%s2 + $0x1e0] sm:$0xff]
        %v471 = vld [vmem:[%s2 + $0x1e8] sm:$0xff]
        %v472 = vld [vmem:[%s2 + $0x1f0] sm:$0xff]
        %v473 = vld [vmem:[%s2 + $0x1f8] sm:$0xff]
        %475 = vset.pattern.permute.xlu0 0
        %476 = vperm.xlu0 %475, %v410
        %v477 = vpop.permute.xlu0 %476
        %480 = vset.pattern.permute.xlu0 0
        %481 = vperm.xlu0 %480, %v411
        %v482 = vpop.permute.xlu0 %481
        %485 = vset.pattern.permute.xlu0 0
        %486 = vperm.xlu0 %485, %v412
        %v487 = vpop.permute.xlu0 %486
        %490 = vset.pattern.permute.xlu0 0
        %491 = vperm.xlu0 %490, %v413
        %v492 = vpop.permute.xlu0 %491
        %495 = vset.pattern.permute.xlu0 0
        %496 = vperm.xlu0 %495, %v414
        %v497 = vpop.permute.xlu0 %496
        %500 = vset.pattern.permute.xlu0 0
        %501 = vperm.xlu0 %500, %v415
        %v502 = vpop.permute.xlu0 %501
        %505 = vset.pattern.permute.xlu0 0
        %506 = vperm.xlu0 %505, %v416
        %v507 = vpop.permute.xlu0 %506
        %510 = vset.pattern.permute.xlu0 0
        %511 = vperm.xlu0 %510, %v417
        %v512 = vpop.permute.xlu0 %511
        %515 = vset.pattern.permute.xlu0 0
        %516 = vperm.xlu0 %515, %v418
        %v517 = vpop.permute.xlu0 %516
        %520 = vset.pattern.permute.xlu0 0
        %521 = vperm.xlu0 %520, %v419
        %v522 = vpop.permute.xlu0 %521
        %525 = vset.pattern.permute.xlu0 0
        %526 = vperm.xlu0 %525, %v420
        %v527 = vpop.permute.xlu0 %526
        %530 = vset.pattern.permute.xlu0 0
        %531 = vperm.xlu0 %530, %v421
        %v532 = vpop.permute.xlu0 %531
        %535 = vset.pattern.permute.xlu0 0
        %536 = vperm.xlu0 %535, %v422
        %v537 = vpop.permute.xlu0 %536
        %540 = vset.pattern.permute.xlu0 0
        %541 = vperm.xlu0 %540, %v423
        %v542 = vpop.permute.xlu0 %541
        %545 = vset.pattern.permute.xlu0 0
        %546 = vperm.xlu0 %545, %v424
        %v547 = vpop.permute.xlu0 %546
        %550 = vset.pattern.permute.xlu0 0
        %551 = vperm.xlu0 %550, %v425
        %v552 = vpop.permute.xlu0 %551
        %555 = vset.pattern.permute.xlu0 0
        %556 = vperm.xlu0 %555, %v426
        %v557 = vpop.permute.xlu0 %556
        %560 = vset.pattern.permute.xlu0 0
        %561 = vperm.xlu0 %560, %v427
        %v562 = vpop.permute.xlu0 %561
        %565 = vset.pattern.permute.xlu0 0
        %566 = vperm.xlu0 %565, %v428
        %v567 = vpop.permute.xlu0 %566
        %570 = vset.pattern.permute.xlu0 0
        %571 = vperm.xlu0 %570, %v429
        %v572 = vpop.permute.xlu0 %571
        %575 = vset.pattern.permute.xlu0 0
        %576 = vperm.xlu0 %575, %v430
        %v577 = vpop.permute.xlu0 %576
        %580 = vset.pattern.permute.xlu0 0
        %581 = vperm.xlu0 %580, %v431
        %v582 = vpop.permute.xlu0 %581
        %585 = vset.pattern.permute.xlu0 0
        %586 = vperm.xlu0 %585, %v432
        %v587 = vpop.permute.xlu0 %586
        %590 = vset.pattern.permute.xlu0 0
        %591 = vperm.xlu0 %590, %v433
        %v592 = vpop.permute.xlu0 %591
        %595 = vset.pattern.permute.xlu0 0
        %596 = vperm.xlu0 %595, %v434
        %v597 = vpop.permute.xlu0 %596
        %600 = vset.pattern.permute.xlu0 0
        %601 = vperm.xlu0 %600, %v435
        %v602 = vpop.permute.xlu0 %601
        %605 = vset.pattern.permute.xlu0 0
        %606 = vperm.xlu0 %605, %v436
        %v607 = vpop.permute.xlu0 %606
        %610 = vset.pattern.permute.xlu0 0
        %611 = vperm.xlu0 %610, %v437
        %v612 = vpop.permute.xlu0 %611
        %615 = vset.pattern.permute.xlu0 0
        %616 = vperm.xlu0 %615, %v438
        %v617 = vpop.permute.xlu0 %616
        %620 = vset.pattern.permute.xlu0 0
        %621 = vperm.xlu0 %620, %v439
        %v622 = vpop.permute.xlu0 %621
        %625 = vset.pattern.permute.xlu0 0
        %626 = vperm.xlu0 %625, %v440
        %v627 = vpop.permute.xlu0 %626
        %630 = vset.pattern.permute.xlu0 0
        %631 = vperm.xlu0 %630, %v441
        %v632 = vpop.permute.xlu0 %631
        %635 = vset.pattern.permute.xlu0 0
        %636 = vperm.xlu0 %635, %v442
        %v637 = vpop.permute.xlu0 %636
        %640 = vset.pattern.permute.xlu0 0
        %641 = vperm.xlu0 %640, %v443
        %v642 = vpop.permute.xlu0 %641
        %645 = vset.pattern.permute.xlu0 0
        %646 = vperm.xlu0 %645, %v444
        %v647 = vpop.permute.xlu0 %646
        %650 = vset.pattern.permute.xlu0 0
        %651 = vperm.xlu0 %650, %v445
        %v652 = vpop.permute.xlu0 %651
        %655 = vset.pattern.permute.xlu0 0
        %656 = vperm.xlu0 %655, %v446
        %v657 = vpop.permute.xlu0 %656
        %660 = vset.pattern.permute.xlu0 0
        %661 = vperm.xlu0 %660, %v447
        %v662 = vpop.permute.xlu0 %661
        %665 = vset.pattern.permute.xlu0 0
        %666 = vperm.xlu0 %665, %v448
        %v667 = vpop.permute.xlu0 %666
        %670 = vset.pattern.permute.xlu0 0
        %671 = vperm.xlu0 %670, %v449
        %v672 = vpop.permute.xlu0 %671
        %675 = vset.pattern.permute.xlu0 0
        %676 = vperm.xlu0 %675, %v450
        %v677 = vpop.permute.xlu0 %676
        %680 = vset.pattern.permute.xlu0 0
        %681 = vperm.xlu0 %680, %v451
        %v682 = vpop.permute.xlu0 %681
        %685 = vset.pattern.permute.xlu0 0
        %686 = vperm.xlu0 %685, %v452
        %v687 = vpop.permute.xlu0 %686
        %690 = vset.pattern.permute.xlu0 0
        %691 = vperm.xlu0 %690, %v453
        %v692 = vpop.permute.xlu0 %691
        %695 = vset.pattern.permute.xlu0 0
        %696 = vperm.xlu0 %695, %v454
        %v697 = vpop.permute.xlu0 %696
        %700 = vset.pattern.permute.xlu0 0
        %701 = vperm.xlu0 %700, %v455
        %v702 = vpop.permute.xlu0 %701
        %705 = vset.pattern.permute.xlu0 0
        %706 = vperm.xlu0 %705, %v456
        %v707 = vpop.permute.xlu0 %706
        %710 = vset.pattern.permute.xlu0 0
        %711 = vperm.xlu0 %710, %v457
        %v712 = vpop.permute.xlu0 %711
        %715 = vset.pattern.permute.xlu0 0
        %716 = vperm.xlu0 %715, %v458
        %v717 = vpop.permute.xlu0 %716
        %720 = vset.pattern.permute.xlu0 0
        %721 = vperm.xlu0 %720, %v459
        %v722 = vpop.permute.xlu0 %721
        %725 = vset.pattern.permute.xlu0 0
        %726 = vperm.xlu0 %725, %v460
        %v727 = vpop.permute.xlu0 %726
        %730 = vset.pattern.permute.xlu0 0
        %731 = vperm.xlu0 %730, %v461
        %v732 = vpop.permute.xlu0 %731
        %735 = vset.pattern.permute.xlu0 0
        %736 = vperm.xlu0 %735, %v462
        %v737 = vpop.permute.xlu0 %736
        %740 = vset.pattern.permute.xlu0 0
        %741 = vperm.xlu0 %740, %v463
        %v742 = vpop.permute.xlu0 %741
        %745 = vset.pattern.permute.xlu0 0
        %746 = vperm.xlu0 %745, %v464
        %v747 = vpop.permute.xlu0 %746
        %750 = vset.pattern.permute.xlu0 0
        %751 = vperm.xlu0 %750, %v465
        %v752 = vpop.permute.xlu0 %751
        %755 = vset.pattern.permute.xlu0 0
        %756 = vperm.xlu0 %755, %v466
        %v757 = vpop.permute.xlu0 %756
        %760 = vset.pattern.permute.xlu0 0
        %761 = vperm.xlu0 %760, %v467
        %v762 = vpop.permute.xlu0 %761
        %765 = vset.pattern.permute.xlu0 0
        %766 = vperm.xlu0 %765, %v468
        %v767 = vpop.permute.xlu0 %766
        %770 = vset.pattern.permute.xlu0 0
        %771 = vperm.xlu0 %770, %v469
        %v772 = vpop.permute.xlu0 %771
        %775 = vset.pattern.permute.xlu0 0
        %776 = vperm.xlu0 %775, %v470
        %v777 = vpop.permute.xlu0 %776
        %780 = vset.pattern.permute.xlu0 0
        %781 = vperm.xlu0 %780, %v471
        %v782 = vpop.permute.xlu0 %781
        %785 = vset.pattern.permute.xlu0 0
        %786 = vperm.xlu0 %785, %v472
        %v787 = vpop.permute.xlu0 %786
        %790 = vset.pattern.permute.xlu0 0
        %791 = vperm.xlu0 %790, %v473
        %v792 = vpop.permute.xlu0 %791
        %v858 = vunpack.c.l.b16 %v346
        %v859 = vunpack.c.l.b16 %v347
        %v860 = vunpack.c.l.b16 %v348
        %v861 = vunpack.c.l.b16 %v349
        %v862 = vunpack.c.l.b16 %v350
        %v863 = vunpack.c.l.b16 %v351
        %v864 = vunpack.c.l.b16 %v352
        %v865 = vunpack.c.l.b16 %v353
        %v866 = vunpack.c.l.b16 %v354
        %v867 = vunpack.c.l.b16 %v355
        %v868 = vunpack.c.l.b16 %v356
        %v869 = vunpack.c.l.b16 %v357
        %v870 = vunpack.c.l.b16 %v358
        %v871 = vunpack.c.l.b16 %v359
        %v872 = vunpack.c.l.b16 %v360
        %v873 = vunpack.c.l.b16 %v361
        %v874 = vunpack.c.l.b16 %v362
        %v875 = vunpack.c.l.b16 %v363
        %v876 = vunpack.c.l.b16 %v364
        %v877 = vunpack.c.l.b16 %v365
        %v878 = vunpack.c.l.b16 %v366
        %v879 = vunpack.c.l.b16 %v367
        %v880 = vunpack.c.l.b16 %v368
        %v881 = vunpack.c.l.b16 %v369
        %v882 = vunpack.c.l.b16 %v370
        %v883 = vunpack.c.l.b16 %v371
        %v884 = vunpack.c.l.b16 %v372
        %v885 = vunpack.c.l.b16 %v373
        %v886 = vunpack.c.l.b16 %v374
        %v887 = vunpack.c.l.b16 %v375
        %v888 = vunpack.c.l.b16 %v376
        %v889 = vunpack.c.l.b16 %v377
        %v890 = vunpack.c.l.b16 %v378
        %v891 = vunpack.c.l.b16 %v379
        %v892 = vunpack.c.l.b16 %v380
        %v893 = vunpack.c.l.b16 %v381
        %v894 = vunpack.c.l.b16 %v382
        %v895 = vunpack.c.l.b16 %v383
        %v896 = vunpack.c.l.b16 %v384
        %v897 = vunpack.c.l.b16 %v385
        %v898 = vunpack.c.l.b16 %v386
        %v899 = vunpack.c.l.b16 %v387
        %v900 = vunpack.c.l.b16 %v388
        %v901 = vunpack.c.l.b16 %v389
        %v902 = vunpack.c.l.b16 %v390
        %v903 = vunpack.c.l.b16 %v391
        %v904 = vunpack.c.l.b16 %v392
        %v905 = vunpack.c.l.b16 %v393
        %v906 = vunpack.c.l.b16 %v394
        %v907 = vunpack.c.l.b16 %v395
        %v908 = vunpack.c.l.b16 %v396
        %v909 = vunpack.c.l.b16 %v397
        %v910 = vunpack.c.l.b16 %v398
        %v911 = vunpack.c.l.b16 %v399
        %v912 = vunpack.c.l.b16 %v400
        %v913 = vunpack.c.l.b16 %v401
        %v914 = vunpack.c.l.b16 %v402
        %v915 = vunpack.c.l.b16 %v403
        %v916 = vunpack.c.l.b16 %v404
        %v917 = vunpack.c.l.b16 %v405
        %v918 = vunpack.c.l.b16 %v406
        %v919 = vunpack.c.l.b16 %v407
        %v920 = vunpack.c.l.b16 %v408
        %v921 = vunpack.c.l.b16 %v409
        %v922 = vpack.c.b16 %v859, %v858
        %v923 = vpack.c.b16 %v861, %v860
        %v924 = vpack.c.b16 %v863, %v862
        %v925 = vpack.c.b16 %v865, %v864
        %v926 = vpack.c.b16 %v867, %v866
        %v927 = vpack.c.b16 %v869, %v868
        %v928 = vpack.c.b16 %v871, %v870
        %v929 = vpack.c.b16 %v873, %v872
        %v930 = vpack.c.b16 %v875, %v874
        %v931 = vpack.c.b16 %v877, %v876
        %v932 = vpack.c.b16 %v879, %v878
        %v933 = vpack.c.b16 %v881, %v880
        %v934 = vpack.c.b16 %v883, %v882
        %v935 = vpack.c.b16 %v885, %v884
        %v936 = vpack.c.b16 %v887, %v886
        %v937 = vpack.c.b16 %v889, %v888
        %v938 = vpack.c.b16 %v891, %v890
        %v939 = vpack.c.b16 %v893, %v892
        %v940 = vpack.c.b16 %v895, %v894
        %v941 = vpack.c.b16 %v897, %v896
        %v942 = vpack.c.b16 %v899, %v898
        %v943 = vpack.c.b16 %v901, %v900
        %v944 = vpack.c.b16 %v903, %v902
        %v945 = vpack.c.b16 %v905, %v904
        %v946 = vpack.c.b16 %v907, %v906
        %v947 = vpack.c.b16 %v909, %v908
        %v948 = vpack.c.b16 %v911, %v910
        %v949 = vpack.c.b16 %v913, %v912
        %v950 = vpack.c.b16 %v915, %v914
        %v951 = vpack.c.b16 %v917, %v916
        %v952 = vpack.c.b16 %v919, %v918
        %v953 = vpack.c.b16 %v921, %v920
        %v1002 = vunpack.c.l.b16 %v330
        %v1003 = vunpack.c.l.b16 %v331
        %v1004 = vunpack.c.l.b16 %v332
        %v1005 = vunpack.c.l.b16 %v333
        %v1006 = vunpack.c.l.b16 %v334
        %v1007 = vunpack.c.l.b16 %v335
        %v1008 = vunpack.c.l.b16 %v336
        %v1009 = vunpack.c.l.b16 %v337
        %v1010 = vunpack.c.l.b16 %v338
        %v1011 = vunpack.c.l.b16 %v339
        %v1012 = vunpack.c.l.b16 %v340
        %v1013 = vunpack.c.l.b16 %v341
        %v1014 = vunpack.c.l.b16 %v342
        %v1015 = vunpack.c.l.b16 %v343
        %v1016 = vunpack.c.l.b16 %v344
        %v1017 = vunpack.c.l.b16 %v345
        %v1018 = vpack.c.b16 %v1003, %v1002
        %v1019 = vpack.c.b16 %v1005, %v1004
        %v1020 = vpack.c.b16 %v1007, %v1006
        %v1021 = vpack.c.b16 %v1009, %v1008
        %v1022 = vpack.c.b16 %v1011, %v1010
        %v1023 = vpack.c.b16 %v1013, %v1012
        %v1024 = vpack.c.b16 %v1015, %v1014
        %v1025 = vpack.c.b16 %v1017, %v1016
        %1034 = vmatprep.subr.bf16.mxu0 0
        %1035 = vmatpush1.bf16.msra.mxu0 %v1025
        %1036 = vmatprep.subr.bf16.mxu0 0
        %1037 = vmatpush1.bf16.msra.mxu0 %v1024
        %1038 = vmatprep.subr.bf16.mxu0 0
        %1039 = vmatpush1.bf16.msra.mxu0 %v1023
        %1040 = vmatprep.subr.bf16.mxu0 0
        %1041 = vmatpush1.bf16.msra.mxu0 %v1022
        %1042 = vmatprep.subr.bf16.mxu0 0
        %1043 = vmatpush1.bf16.msra.mxu0 %v1021
        %1044 = vmatprep.subr.bf16.mxu0 0
        %1045 = vmatpush1.bf16.msra.mxu0 %v1020
        %1046 = vmatprep.subr.bf16.mxu0 0
        %1047 = vmatpush1.bf16.msra.mxu0 %v1019
        %1048 = vmatprep.subr.bf16.mxu0 0
        %1049 = vmatpush1.bf16.msra.mxu0 %v1018
        %1050 = vmatprep.subr.bf16.mxu0 0
        %1051 = vmatpush2.bf16.msra.mxu0 0
        %1052 = vmatprep.subr.bf16.mxu0 0
        %1053 = vmatpush2.bf16.msra.mxu0 0
        %1054 = vmatprep.subr.bf16.mxu0 0
        %1055 = vmatpush2.bf16.msra.mxu0 0
        %1056 = vmatprep.subr.bf16.mxu0 0
        %1057 = vmatpush2.bf16.msra.mxu0 0
        %1058 = vmatprep.subr.bf16.mxu0 0
        %1059 = vmatpush2.bf16.msra.mxu0 0
        %1060 = vmatprep.subr.bf16.mxu0 0
        %1061 = vmatpush2.bf16.msra.mxu0 0
        %1062 = vmatprep.subr.bf16.mxu0 0
        %1063 = vmatpush2.bf16.msra.mxu0 0
        %1064 = vmatprep.subr.bf16.mxu0 0
        %1065 = vmatpush2.bf16.msra.mxu0 0
        %1066 = vmatprep.mubr.bf16.mxu0 0
        %1067 = vmatmul.mubr.bf16.gmra.mxu0 %v922
        %v1068 = vpop.f32.mrf.mxu0
        %v1069 = vadd.f32 %v477, %v1068
        %v1070 = vpop.f32.mrf.mxu0
        %v1071 = vpop.f32.mrf.mxu0
        %v1072 = vadd.f32 %v482, %v1071
        %v1073 = vpop.f32.mrf.mxu0
        %1074 = vmatprep.mubr.bf16.mxu0 0
        %1075 = vmatmul.mubr.bf16.gmra.mxu0 %v923
        %v1076 = vpop.f32.mrf.mxu0
        %v1077 = vadd.f32 %v487, %v1076
        %v1078 = vpop.f32.mrf.mxu0
        %v1079 = vpop.f32.mrf.mxu0
        %v1080 = vadd.f32 %v492, %v1079
        %v1081 = vpop.f32.mrf.mxu0
        %1082 = vmatprep.mubr.bf16.mxu0 0
        %1083 = vmatmul.mubr.bf16.gmra.mxu0 %v924
        %v1084 = vpop.f32.mrf.mxu0
        %v1085 = vadd.f32 %v497, %v1084
        %v1086 = vpop.f32.mrf.mxu0
        %v1087 = vpop.f32.mrf.mxu0
        %v1088 = vadd.f32 %v502, %v1087
        %v1089 = vpop.f32.mrf.mxu0
        %1090 = vmatprep.mubr.bf16.mxu0 0
        %1091 = vmatmul.mubr.bf16.gmra.mxu0 %v925
        %v1092 = vpop.f32.mrf.mxu0
        %v1093 = vadd.f32 %v507, %v1092
        %v1094 = vpop.f32.mrf.mxu0
        %v1095 = vpop.f32.mrf.mxu0
        %v1096 = vadd.f32 %v512, %v1095
        %v1097 = vpop.f32.mrf.mxu0
        %1098 = vmatprep.mubr.bf16.mxu0 0
        %1099 = vmatmul.mubr.bf16.gmra.mxu0 %v926
        %v1100 = vpop.f32.mrf.mxu0
        %v1101 = vadd.f32 %v517, %v1100
        %v1102 = vpop.f32.mrf.mxu0
        %v1103 = vpop.f32.mrf.mxu0
        %v1104 = vadd.f32 %v522, %v1103
        %v1105 = vpop.f32.mrf.mxu0
        %1106 = vmatprep.mubr.bf16.mxu0 0
        %1107 = vmatmul.mubr.bf16.gmra.mxu0 %v927
        %v1108 = vpop.f32.mrf.mxu0
        %v1109 = vadd.f32 %v527, %v1108
        %v1110 = vpop.f32.mrf.mxu0
        %v1111 = vpop.f32.mrf.mxu0
        %v1112 = vadd.f32 %v532, %v1111
        %v1113 = vpop.f32.mrf.mxu0
        %1114 = vmatprep.mubr.bf16.mxu0 0
        %1115 = vmatmul.mubr.bf16.gmra.mxu0 %v928
        %v1116 = vpop.f32.mrf.mxu0
        %v1117 = vadd.f32 %v537, %v1116
        %v1118 = vpop.f32.mrf.mxu0
        %v1119 = vpop.f32.mrf.mxu0
        %v1120 = vadd.f32 %v542, %v1119
        %v1121 = vpop.f32.mrf.mxu0
        %1122 = vmatprep.mubr.bf16.mxu0 0
        %1123 = vmatmul.mubr.bf16.gmra.mxu0 %v929
        %v1124 = vpop.f32.mrf.mxu0
        %v1125 = vadd.f32 %v547, %v1124
        %v1126 = vpop.f32.mrf.mxu0
        %v1127 = vpop.f32.mrf.mxu0
        %v1128 = vadd.f32 %v552, %v1127
        %v1129 = vpop.f32.mrf.mxu0
        %1130 = vmatprep.mubr.bf16.mxu0 0
        %1131 = vmatmul.mubr.bf16.gmra.mxu0 %v930
        %v1132 = vpop.f32.mrf.mxu0
        %v1133 = vadd.f32 %v557, %v1132
        %v1134 = vpop.f32.mrf.mxu0
        %v1135 = vpop.f32.mrf.mxu0
        %v1136 = vadd.f32 %v562, %v1135
        %v1137 = vpop.f32.mrf.mxu0
        %1138 = vmatprep.mubr.bf16.mxu0 0
        %1139 = vmatmul.mubr.bf16.gmra.mxu0 %v931
        %v1140 = vpop.f32.mrf.mxu0
        %v1141 = vadd.f32 %v567, %v1140
        %v1142 = vpop.f32.mrf.mxu0
        %v1143 = vpop.f32.mrf.mxu0
        %v1144 = vadd.f32 %v572, %v1143
        %v1145 = vpop.f32.mrf.mxu0
        %1146 = vmatprep.mubr.bf16.mxu0 0
        %1147 = vmatmul.mubr.bf16.gmra.mxu0 %v932
        %v1148 = vpop.f32.mrf.mxu0
        %v1149 = vadd.f32 %v577, %v1148
        %v1150 = vpop.f32.mrf.mxu0
        %v1151 = vpop.f32.mrf.mxu0
        %v1152 = vadd.f32 %v582, %v1151
        %v1153 = vpop.f32.mrf.mxu0
        %1154 = vmatprep.mubr.bf16.mxu0 0
        %1155 = vmatmul.mubr.bf16.gmra.mxu0 %v933
        %v1156 = vpop.f32.mrf.mxu0
        %v1157 = vadd.f32 %v587, %v1156
        %v1158 = vpop.f32.mrf.mxu0
        %v1159 = vpop.f32.mrf.mxu0
        %v1160 = vadd.f32 %v592, %v1159
        %v1161 = vpop.f32.mrf.mxu0
        %1162 = vmatprep.mubr.bf16.mxu0 0
        %1163 = vmatmul.mubr.bf16.gmra.mxu0 %v934
        %v1164 = vpop.f32.mrf.mxu0
        %v1165 = vadd.f32 %v597, %v1164
        %v1166 = vpop.f32.mrf.mxu0
        %v1167 = vpop.f32.mrf.mxu0
        %v1168 = vadd.f32 %v602, %v1167
        %v1169 = vpop.f32.mrf.mxu0
        %1170 = vmatprep.mubr.bf16.mxu0 0
        %1171 = vmatmul.mubr.bf16.gmra.mxu0 %v935
        %v1172 = vpop.f32.mrf.mxu0
        %v1173 = vadd.f32 %v607, %v1172
        %v1174 = vpop.f32.mrf.mxu0
        %v1175 = vpop.f32.mrf.mxu0
        %v1176 = vadd.f32 %v612, %v1175
        %v1177 = vpop.f32.mrf.mxu0
        %1178 = vmatprep.mubr.bf16.mxu0 0
        %1179 = vmatmul.mubr.bf16.gmra.mxu0 %v936
        %v1180 = vpop.f32.mrf.mxu0
        %v1181 = vadd.f32 %v617, %v1180
        %v1182 = vpop.f32.mrf.mxu0
        %v1183 = vpop.f32.mrf.mxu0
        %v1184 = vadd.f32 %v622, %v1183
        %v1185 = vpop.f32.mrf.mxu0
        %1186 = vmatprep.mubr.bf16.mxu0 0
        %1187 = vmatmul.mubr.bf16.gmra.mxu0 %v937
        %v1188 = vpop.f32.mrf.mxu0
        %v1189 = vadd.f32 %v627, %v1188
        %v1190 = vpop.f32.mrf.mxu0
        %v1191 = vpop.f32.mrf.mxu0
        %v1192 = vadd.f32 %v632, %v1191
        %v1193 = vpop.f32.mrf.mxu0
        %1194 = vmatprep.mubr.bf16.mxu0 0
        %1195 = vmatmul.mubr.bf16.gmra.mxu0 %v938
        %v1196 = vpop.f32.mrf.mxu0
        %v1197 = vadd.f32 %v637, %v1196
        %v1198 = vpop.f32.mrf.mxu0
        %v1199 = vpop.f32.mrf.mxu0
        %v1200 = vadd.f32 %v642, %v1199
        %v1201 = vpop.f32.mrf.mxu0
        %1202 = vmatprep.mubr.bf16.mxu0 0
        %1203 = vmatmul.mubr.bf16.gmra.mxu0 %v939
        %v1204 = vpop.f32.mrf.mxu0
        %v1205 = vadd.f32 %v647, %v1204
        %v1206 = vpop.f32.mrf.mxu0
        %v1207 = vpop.f32.mrf.mxu0
        %v1208 = vadd.f32 %v652, %v1207
        %v1209 = vpop.f32.mrf.mxu0
        %1210 = vmatprep.mubr.bf16.mxu0 0
        %1211 = vmatmul.mubr.bf16.gmra.mxu0 %v940
        %v1212 = vpop.f32.mrf.mxu0
        %v1213 = vadd.f32 %v657, %v1212
        %v1214 = vpop.f32.mrf.mxu0
        %v1215 = vpop.f32.mrf.mxu0
        %v1216 = vadd.f32 %v662, %v1215
        %v1217 = vpop.f32.mrf.mxu0
        %1218 = vmatprep.mubr.bf16.mxu0 0
        %1219 = vmatmul.mubr.bf16.gmra.mxu0 %v941
        %v1220 = vpop.f32.mrf.mxu0
        %v1221 = vadd.f32 %v667, %v1220
        %v1222 = vpop.f32.mrf.mxu0
        %v1223 = vpop.f32.mrf.mxu0
        %v1224 = vadd.f32 %v672, %v1223
        %v1225 = vpop.f32.mrf.mxu0
        %1226 = vmatprep.mubr.bf16.mxu0 0
        %1227 = vmatmul.mubr.bf16.gmra.mxu0 %v942
        %v1228 = vpop.f32.mrf.mxu0
        %v1229 = vadd.f32 %v677, %v1228
        %v1230 = vpop.f32.mrf.mxu0
        %v1231 = vpop.f32.mrf.mxu0
        %v1232 = vadd.f32 %v682, %v1231
        %v1233 = vpop.f32.mrf.mxu0
        %1234 = vmatprep.mubr.bf16.mxu0 0
        %1235 = vmatmul.mubr.bf16.gmra.mxu0 %v943
        %v1236 = vpop.f32.mrf.mxu0
        %v1237 = vadd.f32 %v687, %v1236
        %v1238 = vpop.f32.mrf.mxu0
        %v1239 = vpop.f32.mrf.mxu0
        %v1240 = vadd.f32 %v692, %v1239
        %v1241 = vpop.f32.mrf.mxu0
        %1242 = vmatprep.mubr.bf16.mxu0 0
        %1243 = vmatmul.mubr.bf16.gmra.mxu0 %v944
        %v1244 = vpop.f32.mrf.mxu0
        %v1245 = vadd.f32 %v697, %v1244
        %v1246 = vpop.f32.mrf.mxu0
        %v1247 = vpop.f32.mrf.mxu0
        %v1248 = vadd.f32 %v702, %v1247
        %v1249 = vpop.f32.mrf.mxu0
        %1250 = vmatprep.mubr.bf16.mxu0 0
        %1251 = vmatmul.mubr.bf16.gmra.mxu0 %v945
        %v1252 = vpop.f32.mrf.mxu0
        %v1253 = vadd.f32 %v707, %v1252
        %v1254 = vpop.f32.mrf.mxu0
        %v1255 = vpop.f32.mrf.mxu0
        %v1256 = vadd.f32 %v712, %v1255
        %v1257 = vpop.f32.mrf.mxu0
        %1258 = vmatprep.mubr.bf16.mxu0 0
        %1259 = vmatmul.mubr.bf16.gmra.mxu0 %v946
        %v1260 = vpop.f32.mrf.mxu0
        %v1261 = vadd.f32 %v717, %v1260
        %v1262 = vpop.f32.mrf.mxu0
        %v1263 = vpop.f32.mrf.mxu0
        %v1264 = vadd.f32 %v722, %v1263
        %v1265 = vpop.f32.mrf.mxu0
        %1266 = vmatprep.mubr.bf16.mxu0 0
        %1267 = vmatmul.mubr.bf16.gmra.mxu0 %v947
        %v1268 = vpop.f32.mrf.mxu0
        %v1269 = vadd.f32 %v727, %v1268
        %v1270 = vpop.f32.mrf.mxu0
        %v1271 = vpop.f32.mrf.mxu0
        %v1272 = vadd.f32 %v732, %v1271
        %v1273 = vpop.f32.mrf.mxu0
        %1274 = vmatprep.mubr.bf16.mxu0 0
        %1275 = vmatmul.mubr.bf16.gmra.mxu0 %v948
        %v1276 = vpop.f32.mrf.mxu0
        %v1277 = vadd.f32 %v737, %v1276
        %v1278 = vpop.f32.mrf.mxu0
        %v1279 = vpop.f32.mrf.mxu0
        %v1280 = vadd.f32 %v742, %v1279
        %v1281 = vpop.f32.mrf.mxu0
        %1282 = vmatprep.mubr.bf16.mxu0 0
        %1283 = vmatmul.mubr.bf16.gmra.mxu0 %v949
        %v1284 = vpop.f32.mrf.mxu0
        %v1285 = vadd.f32 %v747, %v1284
        %v1286 = vpop.f32.mrf.mxu0
        %v1287 = vpop.f32.mrf.mxu0
        %v1288 = vadd.f32 %v752, %v1287
        %v1289 = vpop.f32.mrf.mxu0
        %1290 = vmatprep.mubr.bf16.mxu0 0
        %1291 = vmatmul.mubr.bf16.gmra.mxu0 %v950
        %v1292 = vpop.f32.mrf.mxu0
        %v1293 = vadd.f32 %v757, %v1292
        %v1294 = vpop.f32.mrf.mxu0
        %v1295 = vpop.f32.mrf.mxu0
        %v1296 = vadd.f32 %v762, %v1295
        %v1297 = vpop.f32.mrf.mxu0
        %1298 = vmatprep.mubr.bf16.mxu0 0
        %1299 = vmatmul.mubr.bf16.gmra.mxu0 %v951
        %v1300 = vpop.f32.mrf.mxu0
        %v1301 = vadd.f32 %v767, %v1300
        %v1302 = vpop.f32.mrf.mxu0
        %v1303 = vpop.f32.mrf.mxu0
        %v1304 = vadd.f32 %v772, %v1303
        %v1305 = vpop.f32.mrf.mxu0
        %1306 = vmatprep.mubr.bf16.mxu0 0
        %1307 = vmatmul.mubr.bf16.gmra.mxu0 %v952
        %v1308 = vpop.f32.mrf.mxu0
        %v1309 = vadd.f32 %v777, %v1308
        %v1310 = vpop.f32.mrf.mxu0
        %v1311 = vpop.f32.mrf.mxu0
        %v1312 = vadd.f32 %v782, %v1311
        %v1313 = vpop.f32.mrf.mxu0
        %1314 = vmatprep.mubr.bf16.mxu0 0
        %1315 = vmatmul.mubr.bf16.gmra.mxu0 %v953
        %v1316 = vpop.f32.mrf.mxu0
        %v1317 = vadd.f32 %v787, %v1316
        %v1318 = vpop.f32.mrf.mxu0
        %v1319 = vpop.f32.mrf.mxu0
        %v1320 = vadd.f32 %v792, %v1319
        %v1321 = vpop.f32.mrf.mxu0
        %1322 = vdwg.mxu0
        %v1323 = vmax.f32 %v1069, 0.0
        %v1324 = vmax.f32 %v1072, 0.0
        %v1325 = vmax.f32 %v1077, 0.0
        %v1326 = vmax.f32 %v1080, 0.0
        %v1327 = vmax.f32 %v1085, 0.0
        %v1328 = vmax.f32 %v1088, 0.0
        %v1329 = vmax.f32 %v1093, 0.0
        %v1330 = vmax.f32 %v1096, 0.0
        %v1331 = vmax.f32 %v1101, 0.0
        %v1332 = vmax.f32 %v1104, 0.0
        %v1333 = vmax.f32 %v1109, 0.0
        %v1334 = vmax.f32 %v1112, 0.0
        %v1335 = vmax.f32 %v1117, 0.0
        %v1336 = vmax.f32 %v1120, 0.0
        %v1337 = vmax.f32 %v1125, 0.0
        %v1338 = vmax.f32 %v1128, 0.0
        %v1339 = vmax.f32 %v1133, 0.0
        %v1340 = vmax.f32 %v1136, 0.0
        %v1341 = vmax.f32 %v1141, 0.0
        %v1342 = vmax.f32 %v1144, 0.0
        %v1343 = vmax.f32 %v1149, 0.0
        %v1344 = vmax.f32 %v1152, 0.0
        %v1345 = vmax.f32 %v1157, 0.0
        %v1346 = vmax.f32 %v1160, 0.0
        %v1347 = vmax.f32 %v1165, 0.0
        %v1348 = vmax.f32 %v1168, 0.0
        %v1349 = vmax.f32 %v1173, 0.0
        %v1350 = vmax.f32 %v1176, 0.0
        %v1351 = vmax.f32 %v1181, 0.0
        %v1352 = vmax.f32 %v1184, 0.0
        %v1353 = vmax.f32 %v1189, 0.0
        %v1354 = vmax.f32 %v1192, 0.0
        %v1355 = vmax.f32 %v1197, 0.0
        %v1356 = vmax.f32 %v1200, 0.0
        %v1357 = vmax.f32 %v1205, 0.0
        %v1358 = vmax.f32 %v1208, 0.0
        %v1359 = vmax.f32 %v1213, 0.0
        %v1360 = vmax.f32 %v1216, 0.0
        %v1361 = vmax.f32 %v1221, 0.0
        %v1362 = vmax.f32 %v1224, 0.0
        %v1363 = vmax.f32 %v1229, 0.0
        %v1364 = vmax.f32 %v1232, 0.0
        %v1365 = vmax.f32 %v1237, 0.0
        %v1366 = vmax.f32 %v1240, 0.0
        %v1367 = vmax.f32 %v1245, 0.0
        %v1368 = vmax.f32 %v1248, 0.0
        %v1369 = vmax.f32 %v1253, 0.0
        %v1370 = vmax.f32 %v1256, 0.0
        %v1371 = vmax.f32 %v1261, 0.0
        %v1372 = vmax.f32 %v1264, 0.0
        %v1373 = vmax.f32 %v1269, 0.0
        %v1374 = vmax.f32 %v1272, 0.0
        %v1375 = vmax.f32 %v1277, 0.0
        %v1376 = vmax.f32 %v1280, 0.0
        %v1377 = vmax.f32 %v1285, 0.0
        %v1378 = vmax.f32 %v1288, 0.0
        %v1379 = vmax.f32 %v1293, 0.0
        %v1380 = vmax.f32 %v1296, 0.0
        %v1381 = vmax.f32 %v1301, 0.0
        %v1382 = vmax.f32 %v1304, 0.0
        %v1383 = vmax.f32 %v1309, 0.0
        %v1384 = vmax.f32 %v1312, 0.0
        %v1385 = vmax.f32 %v1317, 0.0
        %v1386 = vmax.f32 %v1320, 0.0
        %v1387 = vpack.c.bf16 %v1324, %v1323
        %v1388 = vpack.c.bf16 %v1326, %v1325
        %v1389 = vpack.c.bf16 %v1328, %v1327
        %v1390 = vpack.c.bf16 %v1330, %v1329
        %v1391 = vpack.c.bf16 %v1332, %v1331
        %v1392 = vpack.c.bf16 %v1334, %v1333
        %v1393 = vpack.c.bf16 %v1336, %v1335
        %v1394 = vpack.c.bf16 %v1338, %v1337
        %v1395 = vpack.c.bf16 %v1340, %v1339
        %v1396 = vpack.c.bf16 %v1342, %v1341
        %v1397 = vpack.c.bf16 %v1344, %v1343
        %v1398 = vpack.c.bf16 %v1346, %v1345
        %v1399 = vpack.c.bf16 %v1348, %v1347
        %v1400 = vpack.c.bf16 %v1350, %v1349
        %v1401 = vpack.c.bf16 %v1352, %v1351
        %v1402 = vpack.c.bf16 %v1354, %v1353
        %v1403 = vpack.c.bf16 %v1356, %v1355
        %v1404 = vpack.c.bf16 %v1358, %v1357
        %v1405 = vpack.c.bf16 %v1360, %v1359
        %v1406 = vpack.c.bf16 %v1362, %v1361
        %v1407 = vpack.c.bf16 %v1364, %v1363
        %v1408 = vpack.c.bf16 %v1366, %v1365
        %v1409 = vpack.c.bf16 %v1368, %v1367
        %v1410 = vpack.c.bf16 %v1370, %v1369
        %v1411 = vpack.c.bf16 %v1372, %v1371
        %v1412 = vpack.c.bf16 %v1374, %v1373
        %v1413 = vpack.c.bf16 %v1376, %v1375
        %v1414 = vpack.c.bf16 %v1378, %v1377
        %v1415 = vpack.c.bf16 %v1380, %v1379
        %v1416 = vpack.c.bf16 %v1382, %v1381
        %v1417 = vpack.c.bf16 %v1384, %v1383
        %v1418 = vpack.c.bf16 %v1386, %v1385
        %v1419 = vld [vmem:[%s3] sm:$0xff]
        %v1420 = vld [vmem:[%s3 + $0x8] sm:$0xff]
        %v1421 = vld [vmem:[%s3 + $0x10] sm:$0xff]
        %v1422 = vld [vmem:[%s3 + $0x18] sm:$0xff]
        %v1423 = vld [vmem:[%s3 + $0x20] sm:$0xff]
        %v1424 = vld [vmem:[%s3 + $0x28] sm:$0xff]
        %v1425 = vld [vmem:[%s3 + $0x30] sm:$0xff]
        %v1426 = vld [vmem:[%s3 + $0x38] sm:$0xff]
        %v1427 = vld [vmem:[%s3 + $0x40] sm:$0xff]
        %v1428 = vld [vmem:[%s3 + $0x48] sm:$0xff]
        %v1429 = vld [vmem:[%s3 + $0x50] sm:$0xff]
        %v1430 = vld [vmem:[%s3 + $0x58] sm:$0xff]
        %v1431 = vld [vmem:[%s3 + $0x60] sm:$0xff]
        %v1432 = vld [vmem:[%s3 + $0x68] sm:$0xff]
        %v1433 = vld [vmem:[%s3 + $0x70] sm:$0xff]
        %v1434 = vld [vmem:[%s3 + $0x78] sm:$0xff]
        %v1435 = vld [vmem:[%s3 + $0x80] sm:$0xff]
        %v1436 = vld [vmem:[%s3 + $0x88] sm:$0xff]
        %v1437 = vld [vmem:[%s3 + $0x90] sm:$0xff]
        %v1438 = vld [vmem:[%s3 + $0x98] sm:$0xff]
        %v1439 = vld [vmem:[%s3 + $0xa0] sm:$0xff]
        %v1440 = vld [vmem:[%s3 + $0xa8] sm:$0xff]
        %v1441 = vld [vmem:[%s3 + $0xb0] sm:$0xff]
        %v1442 = vld [vmem:[%s3 + $0xb8] sm:$0xff]
        %v1443 = vld [vmem:[%s3 + $0xc0] sm:$0xff]
        %v1444 = vld [vmem:[%s3 + $0xc8] sm:$0xff]
        %v1445 = vld [vmem:[%s3 + $0xd0] sm:$0xff]
        %v1446 = vld [vmem:[%s3 + $0xd8] sm:$0xff]
        %v1447 = vld [vmem:[%s3 + $0xe0] sm:$0xff]
        %v1448 = vld [vmem:[%s3 + $0xe8] sm:$0xff]
        %v1449 = vld [vmem:[%s3 + $0xf0] sm:$0xff]
        %v1450 = vld [vmem:[%s3 + $0xf8] sm:$0xff]
        %v1451 = vld [vmem:[%s3 + $0x100] sm:$0xff]
        %v1452 = vld [vmem:[%s3 + $0x108] sm:$0xff]
        %v1453 = vld [vmem:[%s3 + $0x110] sm:$0xff]
        %v1454 = vld [vmem:[%s3 + $0x118] sm:$0xff]
        %v1455 = vld [vmem:[%s3 + $0x120] sm:$0xff]
        %v1456 = vld [vmem:[%s3 + $0x128] sm:$0xff]
        %v1457 = vld [vmem:[%s3 + $0x130] sm:$0xff]
        %v1458 = vld [vmem:[%s3 + $0x138] sm:$0xff]
        %v1459 = vld [vmem:[%s3 + $0x140] sm:$0xff]
        %v1460 = vld [vmem:[%s3 + $0x148] sm:$0xff]
        %v1461 = vld [vmem:[%s3 + $0x150] sm:$0xff]
        %v1462 = vld [vmem:[%s3 + $0x158] sm:$0xff]
        %v1463 = vld [vmem:[%s3 + $0x160] sm:$0xff]
        %v1464 = vld [vmem:[%s3 + $0x168] sm:$0xff]
        %v1465 = vld [vmem:[%s3 + $0x170] sm:$0xff]
        %v1466 = vld [vmem:[%s3 + $0x178] sm:$0xff]
        %v1467 = vld [vmem:[%s3 + $0x180] sm:$0xff]
        %v1468 = vld [vmem:[%s3 + $0x188] sm:$0xff]
        %v1469 = vld [vmem:[%s3 + $0x190] sm:$0xff]
        %v1470 = vld [vmem:[%s3 + $0x198] sm:$0xff]
        %v1471 = vld [vmem:[%s3 + $0x1a0] sm:$0xff]
        %v1472 = vld [vmem:[%s3 + $0x1a8] sm:$0xff]
        %v1473 = vld [vmem:[%s3 + $0x1b0] sm:$0xff]
        %v1474 = vld [vmem:[%s3 + $0x1b8] sm:$0xff]
        %v1475 = vld [vmem:[%s3 + $0x1c0] sm:$0xff]
        %v1476 = vld [vmem:[%s3 + $0x1c8] sm:$0xff]
        %v1477 = vld [vmem:[%s3 + $0x1d0] sm:$0xff]
        %v1478 = vld [vmem:[%s3 + $0x1d8] sm:$0xff]
        %v1479 = vld [vmem:[%s3 + $0x1e0] sm:$0xff]
        %v1480 = vld [vmem:[%s3 + $0x1e8] sm:$0xff]
        %v1481 = vld [vmem:[%s3 + $0x1f0] sm:$0xff]
        %v1482 = vld [vmem:[%s3 + $0x1f8] sm:$0xff]
        %v1483 = vld [vmem:[%s3 + $0x200] sm:$0xff]
        %v1484 = vld [vmem:[%s3 + $0x208] sm:$0xff]
        %v1485 = vld [vmem:[%s3 + $0x210] sm:$0xff]
        %v1486 = vld [vmem:[%s3 + $0x218] sm:$0xff]
        %v1487 = vld [vmem:[%s3 + $0x220] sm:$0xff]
        %v1488 = vld [vmem:[%s3 + $0x228] sm:$0xff]
        %v1489 = vld [vmem:[%s3 + $0x230] sm:$0xff]
        %v1490 = vld [vmem:[%s3 + $0x238] sm:$0xff]
        %v1491 = vld [vmem:[%s3 + $0x240] sm:$0xff]
        %v1492 = vld [vmem:[%s3 + $0x248] sm:$0xff]
        %v1493 = vld [vmem:[%s3 + $0x250] sm:$0xff]
        %v1494 = vld [vmem:[%s3 + $0x258] sm:$0xff]
        %v1495 = vld [vmem:[%s3 + $0x260] sm:$0xff]
        %v1496 = vld [vmem:[%s3 + $0x268] sm:$0xff]
        %v1497 = vld [vmem:[%s3 + $0x270] sm:$0xff]
        %v1498 = vld [vmem:[%s3 + $0x278] sm:$0xff]
        %v1499 = vld [vmem:[%s3 + $0x280] sm:$0xff]
        %v1500 = vld [vmem:[%s3 + $0x288] sm:$0xff]
        %v1501 = vld [vmem:[%s3 + $0x290] sm:$0xff]
        %v1502 = vld [vmem:[%s3 + $0x298] sm:$0xff]
        %v1503 = vld [vmem:[%s3 + $0x2a0] sm:$0xff]
        %v1504 = vld [vmem:[%s3 + $0x2a8] sm:$0xff]
        %v1505 = vld [vmem:[%s3 + $0x2b0] sm:$0xff]
        %v1506 = vld [vmem:[%s3 + $0x2b8] sm:$0xff]
        %v1507 = vld [vmem:[%s3 + $0x2c0] sm:$0xff]
        %v1508 = vld [vmem:[%s3 + $0x2c8] sm:$0xff]
        %v1509 = vld [vmem:[%s3 + $0x2d0] sm:$0xff]
        %v1510 = vld [vmem:[%s3 + $0x2d8] sm:$0xff]
        %v1511 = vld [vmem:[%s3 + $0x2e0] sm:$0xff]
        %v1512 = vld [vmem:[%s3 + $0x2e8] sm:$0xff]
        %v1513 = vld [vmem:[%s3 + $0x2f0] sm:$0xff]
        %v1514 = vld [vmem:[%s3 + $0x2f8] sm:$0xff]
        %v1515 = vld [vmem:[%s3 + $0x300] sm:$0xff]
        %v1516 = vld [vmem:[%s3 + $0x308] sm:$0xff]
        %v1517 = vld [vmem:[%s3 + $0x310] sm:$0xff]
        %v1518 = vld [vmem:[%s3 + $0x318] sm:$0xff]
        %v1519 = vld [vmem:[%s3 + $0x320] sm:$0xff]
        %v1520 = vld [vmem:[%s3 + $0x328] sm:$0xff]
        %v1521 = vld [vmem:[%s3 + $0x330] sm:$0xff]
        %v1522 = vld [vmem:[%s3 + $0x338] sm:$0xff]
        %v1523 = vld [vmem:[%s3 + $0x340] sm:$0xff]
        %v1524 = vld [vmem:[%s3 + $0x348] sm:$0xff]
        %v1525 = vld [vmem:[%s3 + $0x350] sm:$0xff]
        %v1526 = vld [vmem:[%s3 + $0x358] sm:$0xff]
        %v1527 = vld [vmem:[%s3 + $0x360] sm:$0xff]
        %v1528 = vld [vmem:[%s3 + $0x368] sm:$0xff]
        %v1529 = vld [vmem:[%s3 + $0x370] sm:$0xff]
        %v1530 = vld [vmem:[%s3 + $0x378] sm:$0xff]
        %v1531 = vld [vmem:[%s3 + $0x380] sm:$0xff]
        %v1532 = vld [vmem:[%s3 + $0x388] sm:$0xff]
        %v1533 = vld [vmem:[%s3 + $0x390] sm:$0xff]
        %v1534 = vld [vmem:[%s3 + $0x398] sm:$0xff]
        %v1535 = vld [vmem:[%s3 + $0x3a0] sm:$0xff]
        %v1536 = vld [vmem:[%s3 + $0x3a8] sm:$0xff]
        %v1537 = vld [vmem:[%s3 + $0x3b0] sm:$0xff]
        %v1538 = vld [vmem:[%s3 + $0x3b8] sm:$0xff]
        %v1539 = vld [vmem:[%s3 + $0x3c0] sm:$0xff]
        %v1540 = vld [vmem:[%s3 + $0x3c8] sm:$0xff]
        %v1541 = vld [vmem:[%s3 + $0x3d0] sm:$0xff]
        %v1542 = vld [vmem:[%s3 + $0x3d8] sm:$0xff]
        %v1543 = vld [vmem:[%s3 + $0x3e0] sm:$0xff]
        %v1544 = vld [vmem:[%s3 + $0x3e8] sm:$0xff]
        %v1545 = vld [vmem:[%s3 + $0x3f0] sm:$0xff]
        %v1546 = vld [vmem:[%s3 + $0x3f8] sm:$0xff]
        %v1547 = vld [vmem:[%s4] sm:$0xff]
        %v1548 = vld [vmem:[%s4 + $0x8] sm:$0xff]
        %v1549 = vld [vmem:[%s4 + $0x10] sm:$0xff]
        %v1550 = vld [vmem:[%s4 + $0x18] sm:$0xff]
        %v1551 = vld [vmem:[%s4 + $0x20] sm:$0xff]
        %v1552 = vld [vmem:[%s4 + $0x28] sm:$0xff]
        %v1553 = vld [vmem:[%s4 + $0x30] sm:$0xff]
        %v1554 = vld [vmem:[%s4 + $0x38] sm:$0xff]
        %v1555 = vld [vmem:[%s4 + $0x40] sm:$0xff]
        %v1556 = vld [vmem:[%s4 + $0x48] sm:$0xff]
        %v1557 = vld [vmem:[%s4 + $0x50] sm:$0xff]
        %v1558 = vld [vmem:[%s4 + $0x58] sm:$0xff]
        %v1559 = vld [vmem:[%s4 + $0x60] sm:$0xff]
        %v1560 = vld [vmem:[%s4 + $0x68] sm:$0xff]
        %v1561 = vld [vmem:[%s4 + $0x70] sm:$0xff]
        %v1562 = vld [vmem:[%s4 + $0x78] sm:$0xff]
        %v1563 = vld [vmem:[%s4 + $0x80] sm:$0xff]
        %v1564 = vld [vmem:[%s4 + $0x88] sm:$0xff]
        %v1565 = vld [vmem:[%s4 + $0x90] sm:$0xff]
        %v1566 = vld [vmem:[%s4 + $0x98] sm:$0xff]
        %v1567 = vld [vmem:[%s4 + $0xa0] sm:$0xff]
        %v1568 = vld [vmem:[%s4 + $0xa8] sm:$0xff]
        %v1569 = vld [vmem:[%s4 + $0xb0] sm:$0xff]
        %v1570 = vld [vmem:[%s4 + $0xb8] sm:$0xff]
        %v1571 = vld [vmem:[%s4 + $0xc0] sm:$0xff]
        %v1572 = vld [vmem:[%s4 + $0xc8] sm:$0xff]
        %v1573 = vld [vmem:[%s4 + $0xd0] sm:$0xff]
        %v1574 = vld [vmem:[%s4 + $0xd8] sm:$0xff]
        %v1575 = vld [vmem:[%s4 + $0xe0] sm:$0xff]
        %v1576 = vld [vmem:[%s4 + $0xe8] sm:$0xff]
        %v1577 = vld [vmem:[%s4 + $0xf0] sm:$0xff]
        %v1578 = vld [vmem:[%s4 + $0xf8] sm:$0xff]
        %v1579 = vld [vmem:[%s4 + $0x100] sm:$0xff]
        %v1580 = vld [vmem:[%s4 + $0x108] sm:$0xff]
        %v1581 = vld [vmem:[%s4 + $0x110] sm:$0xff]
        %v1582 = vld [vmem:[%s4 + $0x118] sm:$0xff]
        %v1583 = vld [vmem:[%s4 + $0x120] sm:$0xff]
        %v1584 = vld [vmem:[%s4 + $0x128] sm:$0xff]
        %v1585 = vld [vmem:[%s4 + $0x130] sm:$0xff]
        %v1586 = vld [vmem:[%s4 + $0x138] sm:$0xff]
        %v1587 = vld [vmem:[%s4 + $0x140] sm:$0xff]
        %v1588 = vld [vmem:[%s4 + $0x148] sm:$0xff]
        %v1589 = vld [vmem:[%s4 + $0x150] sm:$0xff]
        %v1590 = vld [vmem:[%s4 + $0x158] sm:$0xff]
        %v1591 = vld [vmem:[%s4 + $0x160] sm:$0xff]
        %v1592 = vld [vmem:[%s4 + $0x168] sm:$0xff]
        %v1593 = vld [vmem:[%s4 + $0x170] sm:$0xff]
        %v1594 = vld [vmem:[%s4 + $0x178] sm:$0xff]
        %v1595 = vld [vmem:[%s4 + $0x180] sm:$0xff]
        %v1596 = vld [vmem:[%s4 + $0x188] sm:$0xff]
        %v1597 = vld [vmem:[%s4 + $0x190] sm:$0xff]
        %v1598 = vld [vmem:[%s4 + $0x198] sm:$0xff]
        %v1599 = vld [vmem:[%s4 + $0x1a0] sm:$0xff]
        %v1600 = vld [vmem:[%s4 + $0x1a8] sm:$0xff]
        %v1601 = vld [vmem:[%s4 + $0x1b0] sm:$0xff]
        %v1602 = vld [vmem:[%s4 + $0x1b8] sm:$0xff]
        %v1603 = vld [vmem:[%s4 + $0x1c0] sm:$0xff]
        %v1604 = vld [vmem:[%s4 + $0x1c8] sm:$0xff]
        %v1605 = vld [vmem:[%s4 + $0x1d0] sm:$0xff]
        %v1606 = vld [vmem:[%s4 + $0x1d8] sm:$0xff]
        %v1607 = vld [vmem:[%s4 + $0x1e0] sm:$0xff]
        %v1608 = vld [vmem:[%s4 + $0x1e8] sm:$0xff]
        %v1609 = vld [vmem:[%s4 + $0x1f0] sm:$0xff]
        %v1610 = vld [vmem:[%s4 + $0x1f8] sm:$0xff]
        %1612 = vset.pattern.permute.xlu0 0
        %1613 = vperm.xlu0 %1612, %v1547
        %v1614 = vpop.permute.xlu0 %1613
        %1617 = vset.pattern.permute.xlu0 0
        %1618 = vperm.xlu0 %1617, %v1548
        %v1619 = vpop.permute.xlu0 %1618
        %1622 = vset.pattern.permute.xlu0 0
        %1623 = vperm.xlu0 %1622, %v1549
        %v1624 = vpop.permute.xlu0 %1623
        %1627 = vset.pattern.permute.xlu0 0
        %1628 = vperm.xlu0 %1627, %v1550
        %v1629 = vpop.permute.xlu0 %1628
        %1632 = vset.pattern.permute.xlu0 0
        %1633 = vperm.xlu0 %1632, %v1551
        %v1634 = vpop.permute.xlu0 %1633
        %1637 = vset.pattern.permute.xlu0 0
        %1638 = vperm.xlu0 %1637, %v1552
        %v1639 = vpop.permute.xlu0 %1638
        %1642 = vset.pattern.permute.xlu0 0
        %1643 = vperm.xlu0 %1642, %v1553
        %v1644 = vpop.permute.xlu0 %1643
        %1647 = vset.pattern.permute.xlu0 0
        %1648 = vperm.xlu0 %1647, %v1554
        %v1649 = vpop.permute.xlu0 %1648
        %1652 = vset.pattern.permute.xlu0 0
        %1653 = vperm.xlu0 %1652, %v1555
        %v1654 = vpop.permute.xlu0 %1653
        %1657 = vset.pattern.permute.xlu0 0
        %1658 = vperm.xlu0 %1657, %v1556
        %v1659 = vpop.permute.xlu0 %1658
        %1662 = vset.pattern.permute.xlu0 0
        %1663 = vperm.xlu0 %1662, %v1557
        %v1664 = vpop.permute.xlu0 %1663
        %1667 = vset.pattern.permute.xlu0 0
        %1668 = vperm.xlu0 %1667, %v1558
        %v1669 = vpop.permute.xlu0 %1668
        %1672 = vset.pattern.permute.xlu0 0
        %1673 = vperm.xlu0 %1672, %v1559
        %v1674 = vpop.permute.xlu0 %1673
        %1677 = vset.pattern.permute.xlu0 0
        %1678 = vperm.xlu0 %1677, %v1560
        %v1679 = vpop.permute.xlu0 %1678
        %1682 = vset.pattern.permute.xlu0 0
        %1683 = vperm.xlu0 %1682, %v1561
        %v1684 = vpop.permute.xlu0 %1683
        %1687 = vset.pattern.permute.xlu0 0
        %1688 = vperm.xlu0 %1687, %v1562
        %v1689 = vpop.permute.xlu0 %1688
        %1692 = vset.pattern.permute.xlu0 0
        %1693 = vperm.xlu0 %1692, %v1563
        %v1694 = vpop.permute.xlu0 %1693
        %1697 = vset.pattern.permute.xlu0 0
        %1698 = vperm.xlu0 %1697, %v1564
        %v1699 = vpop.permute.xlu0 %1698
        %1702 = vset.pattern.permute.xlu0 0
        %1703 = vperm.xlu0 %1702, %v1565
        %v1704 = vpop.permute.xlu0 %1703
        %1707 = vset.pattern.permute.xlu0 0
        %1708 = vperm.xlu0 %1707, %v1566
        %v1709 = vpop.permute.xlu0 %1708
        %1712 = vset.pattern.permute.xlu0 0
        %1713 = vperm.xlu0 %1712, %v1567
        %v1714 = vpop.permute.xlu0 %1713
        %1717 = vset.pattern.permute.xlu0 0
        %1718 = vperm.xlu0 %1717, %v1568
        %v1719 = vpop.permute.xlu0 %1718
        %1722 = vset.pattern.permute.xlu0 0
        %1723 = vperm.xlu0 %1722, %v1569
        %v1724 = vpop.permute.xlu0 %1723
        %1727 = vset.pattern.permute.xlu0 0
        %1728 = vperm.xlu0 %1727, %v1570
        %v1729 = vpop.permute.xlu0 %1728
        %1732 = vset.pattern.permute.xlu0 0
        %1733 = vperm.xlu0 %1732, %v1571
        %v1734 = vpop.permute.xlu0 %1733
        %1737 = vset.pattern.permute.xlu0 0
        %1738 = vperm.xlu0 %1737, %v1572
        %v1739 = vpop.permute.xlu0 %1738
        %1742 = vset.pattern.permute.xlu0 0
        %1743 = vperm.xlu0 %1742, %v1573
        %v1744 = vpop.permute.xlu0 %1743
        %1747 = vset.pattern.permute.xlu0 0
        %1748 = vperm.xlu0 %1747, %v1574
        %v1749 = vpop.permute.xlu0 %1748
        %1752 = vset.pattern.permute.xlu0 0
        %1753 = vperm.xlu0 %1752, %v1575
        %v1754 = vpop.permute.xlu0 %1753
        %1757 = vset.pattern.permute.xlu0 0
        %1758 = vperm.xlu0 %1757, %v1576
        %v1759 = vpop.permute.xlu0 %1758
        %1762 = vset.pattern.permute.xlu0 0
        %1763 = vperm.xlu0 %1762, %v1577
        %v1764 = vpop.permute.xlu0 %1763
        %1767 = vset.pattern.permute.xlu0 0
        %1768 = vperm.xlu0 %1767, %v1578
        %v1769 = vpop.permute.xlu0 %1768
        %1772 = vset.pattern.permute.xlu0 0
        %1773 = vperm.xlu0 %1772, %v1579
        %v1774 = vpop.permute.xlu0 %1773
        %1777 = vset.pattern.permute.xlu0 0
        %1778 = vperm.xlu0 %1777, %v1580
        %v1779 = vpop.permute.xlu0 %1778
        %1782 = vset.pattern.permute.xlu0 0
        %1783 = vperm.xlu0 %1782, %v1581
        %v1784 = vpop.permute.xlu0 %1783
        %1787 = vset.pattern.permute.xlu0 0
        %1788 = vperm.xlu0 %1787, %v1582
        %v1789 = vpop.permute.xlu0 %1788
        %1792 = vset.pattern.permute.xlu0 0
        %1793 = vperm.xlu0 %1792, %v1583
        %v1794 = vpop.permute.xlu0 %1793
        %1797 = vset.pattern.permute.xlu0 0
        %1798 = vperm.xlu0 %1797, %v1584
        %v1799 = vpop.permute.xlu0 %1798
        %1802 = vset.pattern.permute.xlu0 0
        %1803 = vperm.xlu0 %1802, %v1585
        %v1804 = vpop.permute.xlu0 %1803
        %1807 = vset.pattern.permute.xlu0 0
        %1808 = vperm.xlu0 %1807, %v1586
        %v1809 = vpop.permute.xlu0 %1808
        %1812 = vset.pattern.permute.xlu0 0
        %1813 = vperm.xlu0 %1812, %v1587
        %v1814 = vpop.permute.xlu0 %1813
        %1817 = vset.pattern.permute.xlu0 0
        %1818 = vperm.xlu0 %1817, %v1588
        %v1819 = vpop.permute.xlu0 %1818
        %1822 = vset.pattern.permute.xlu0 0
        %1823 = vperm.xlu0 %1822, %v1589
        %v1824 = vpop.permute.xlu0 %1823
        %1827 = vset.pattern.permute.xlu0 0
        %1828 = vperm.xlu0 %1827, %v1590
        %v1829 = vpop.permute.xlu0 %1828
        %1832 = vset.pattern.permute.xlu0 0
        %1833 = vperm.xlu0 %1832, %v1591
        %v1834 = vpop.permute.xlu0 %1833
        %1837 = vset.pattern.permute.xlu0 0
        %1838 = vperm.xlu0 %1837, %v1592
        %v1839 = vpop.permute.xlu0 %1838
        %1842 = vset.pattern.permute.xlu0 0
        %1843 = vperm.xlu0 %1842, %v1593
        %v1844 = vpop.permute.xlu0 %1843
        %1847 = vset.pattern.permute.xlu0 0
        %1848 = vperm.xlu0 %1847, %v1594
        %v1849 = vpop.permute.xlu0 %1848
        %1852 = vset.pattern.permute.xlu0 0
        %1853 = vperm.xlu0 %1852, %v1595
        %v1854 = vpop.permute.xlu0 %1853
        %1857 = vset.pattern.permute.xlu0 0
        %1858 = vperm.xlu0 %1857, %v1596
        %v1859 = vpop.permute.xlu0 %1858
        %1862 = vset.pattern.permute.xlu0 0
        %1863 = vperm.xlu0 %1862, %v1597
        %v1864 = vpop.permute.xlu0 %1863
        %1867 = vset.pattern.permute.xlu0 0
        %1868 = vperm.xlu0 %1867, %v1598
        %v1869 = vpop.permute.xlu0 %1868
        %1872 = vset.pattern.permute.xlu0 0
        %1873 = vperm.xlu0 %1872, %v1599
        %v1874 = vpop.permute.xlu0 %1873
        %1877 = vset.pattern.permute.xlu0 0
        %1878 = vperm.xlu0 %1877, %v1600
        %v1879 = vpop.permute.xlu0 %1878
        %1882 = vset.pattern.permute.xlu0 0
        %1883 = vperm.xlu0 %1882, %v1601
        %v1884 = vpop.permute.xlu0 %1883
        %1887 = vset.pattern.permute.xlu0 0
        %1888 = vperm.xlu0 %1887, %v1602
        %v1889 = vpop.permute.xlu0 %1888
        %1892 = vset.pattern.permute.xlu0 0
        %1893 = vperm.xlu0 %1892, %v1603
        %v1894 = vpop.permute.xlu0 %1893
        %1897 = vset.pattern.permute.xlu0 0
        %1898 = vperm.xlu0 %1897, %v1604
        %v1899 = vpop.permute.xlu0 %1898
        %1902 = vset.pattern.permute.xlu0 0
        %1903 = vperm.xlu0 %1902, %v1605
        %v1904 = vpop.permute.xlu0 %1903
        %1907 = vset.pattern.permute.xlu0 0
        %1908 = vperm.xlu0 %1907, %v1606
        %v1909 = vpop.permute.xlu0 %1908
        %1912 = vset.pattern.permute.xlu0 0
        %1913 = vperm.xlu0 %1912, %v1607
        %v1914 = vpop.permute.xlu0 %1913
        %1917 = vset.pattern.permute.xlu0 0
        %1918 = vperm.xlu0 %1917, %v1608
        %v1919 = vpop.permute.xlu0 %1918
        %1922 = vset.pattern.permute.xlu0 0
        %1923 = vperm.xlu0 %1922, %v1609
        %v1924 = vpop.permute.xlu0 %1923
        %1927 = vset.pattern.permute.xlu0 0
        %1928 = vperm.xlu0 %1927, %v1610
        %v1929 = vpop.permute.xlu0 %1928
        %v2059 = vunpack.c.l.b16 %v1419
        %v2060 = vunpack.c.h.b16 %v1419
        %v2061 = vunpack.c.l.b16 %v1420
        %v2062 = vunpack.c.h.b16 %v1420
        %v2063 = vunpack.c.l.b16 %v1421
        %v2064 = vunpack.c.h.b16 %v1421
        %v2065 = vunpack.c.l.b16 %v1422
        %v2066 = vunpack.c.h.b16 %v1422
        %v2067 = vunpack.c.l.b16 %v1423
        %v2068 = vunpack.c.h.b16 %v1423
        %v2069 = vunpack.c.l.b16 %v1424
        %v2070 = vunpack.c.h.b16 %v1424
        %v2071 = vunpack.c.l.b16 %v1425
        %v2072 = vunpack.c.h.b16 %v1425
        %v2073 = vunpack.c.l.b16 %v1426
        %v2074 = vunpack.c.h.b16 %v1426
        %v2075 = vunpack.c.l.b16 %v1427
        %v2076 = vunpack.c.h.b16 %v1427
        %v2077 = vunpack.c.l.b16 %v1428
        %v2078 = vunpack.c.h.b16 %v1428
        %v2079 = vunpack.c.l.b16 %v1429
        %v2080 = vunpack.c.h.b16 %v1429
        %v2081 = vunpack.c.l.b16 %v1430
        %v2082 = vunpack.c.h.b16 %v1430
        %v2083 = vunpack.c.l.b16 %v1431
        %v2084 = vunpack.c.h.b16 %v1431
        %v2085 = vunpack.c.l.b16 %v1432
        %v2086 = vunpack.c.h.b16 %v1432
        %v2087 = vunpack.c.l.b16 %v1433
        %v2088 = vunpack.c.h.b16 %v1433
        %v2089 = vunpack.c.l.b16 %v1434
        %v2090 = vunpack.c.h.b16 %v1434
        %v2091 = vunpack.c.l.b16 %v1435
        %v2092 = vunpack.c.h.b16 %v1435
        %v2093 = vunpack.c.l.b16 %v1436
        %v2094 = vunpack.c.h.b16 %v1436
        %v2095 = vunpack.c.l.b16 %v1437
        %v2096 = vunpack.c.h.b16 %v1437
        %v2097 = vunpack.c.l.b16 %v1438
        %v2098 = vunpack.c.h.b16 %v1438
        %v2099 = vunpack.c.l.b16 %v1439
        %v2100 = vunpack.c.h.b16 %v1439
        %v2101 = vunpack.c.l.b16 %v1440
        %v2102 = vunpack.c.h.b16 %v1440
        %v2103 = vunpack.c.l.b16 %v1441
        %v2104 = vunpack.c.h.b16 %v1441
        %v2105 = vunpack.c.l.b16 %v1442
        %v2106 = vunpack.c.h.b16 %v1442
        %v2107 = vunpack.c.l.b16 %v1443
        %v2108 = vunpack.c.h.b16 %v1443
        %v2109 = vunpack.c.l.b16 %v1444
        %v2110 = vunpack.c.h.b16 %v1444
        %v2111 = vunpack.c.l.b16 %v1445
        %v2112 = vunpack.c.h.b16 %v1445
        %v2113 = vunpack.c.l.b16 %v1446
        %v2114 = vunpack.c.h.b16 %v1446
        %v2115 = vunpack.c.l.b16 %v1447
        %v2116 = vunpack.c.h.b16 %v1447
        %v2117 = vunpack.c.l.b16 %v1448
        %v2118 = vunpack.c.h.b16 %v1448
        %v2119 = vunpack.c.l.b16 %v1449
        %v2120 = vunpack.c.h.b16 %v1449
        %v2121 = vunpack.c.l.b16 %v1450
        %v2122 = vunpack.c.h.b16 %v1450
        %v2123 = vunpack.c.l.b16 %v1451
        %v2124 = vunpack.c.h.b16 %v1451
        %v2125 = vunpack.c.l.b16 %v1452
        %v2126 = vunpack.c.h.b16 %v1452
        %v2127 = vunpack.c.l.b16 %v1453
        %v2128 = vunpack.c.h.b16 %v1453
        %v2129 = vunpack.c.l.b16 %v1454
        %v2130 = vunpack.c.h.b16 %v1454
        %v2131 = vunpack.c.l.b16 %v1455
        %v2132 = vunpack.c.h.b16 %v1455
        %v2133 = vunpack.c.l.b16 %v1456
        %v2134 = vunpack.c.h.b16 %v1456
        %v2135 = vunpack.c.l.b16 %v1457
        %v2136 = vunpack.c.h.b16 %v1457
        %v2137 = vunpack.c.l.b16 %v1458
        %v2138 = vunpack.c.h.b16 %v1458
        %v2139 = vunpack.c.l.b16 %v1459
        %v2140 = vunpack.c.h.b16 %v1459
        %v2141 = vunpack.c.l.b16 %v1460
        %v2142 = vunpack.c.h.b16 %v1460
        %v2143 = vunpack.c.l.b16 %v1461
        %v2144 = vunpack.c.h.b16 %v1461
        %v2145 = vunpack.c.l.b16 %v1462
        %v2146 = vunpack.c.h.b16 %v1462
        %v2147 = vunpack.c.l.b16 %v1463
        %v2148 = vunpack.c.h.b16 %v1463
        %v2149 = vunpack.c.l.b16 %v1464
        %v2150 = vunpack.c.h.b16 %v1464
        %v2151 = vunpack.c.l.b16 %v1465
        %v2152 = vunpack.c.h.b16 %v1465
        %v2153 = vunpack.c.l.b16 %v1466
        %v2154 = vunpack.c.h.b16 %v1466
        %v2155 = vunpack.c.l.b16 %v1467
        %v2156 = vunpack.c.h.b16 %v1467
        %v2157 = vunpack.c.l.b16 %v1468
        %v2158 = vunpack.c.h.b16 %v1468
        %v2159 = vunpack.c.l.b16 %v1469
        %v2160 = vunpack.c.h.b16 %v1469
        %v2161 = vunpack.c.l.b16 %v1470
        %v2162 = vunpack.c.h.b16 %v1470
        %v2163 = vunpack.c.l.b16 %v1471
        %v2164 = vunpack.c.h.b16 %v1471
        %v2165 = vunpack.c.l.b16 %v1472
        %v2166 = vunpack.c.h.b16 %v1472
        %v2167 = vunpack.c.l.b16 %v1473
        %v2168 = vunpack.c.h.b16 %v1473
        %v2169 = vunpack.c.l.b16 %v1474
        %v2170 = vunpack.c.h.b16 %v1474
        %v2171 = vunpack.c.l.b16 %v1475
        %v2172 = vunpack.c.h.b16 %v1475
        %v2173 = vunpack.c.l.b16 %v1476
        %v2174 = vunpack.c.h.b16 %v1476
        %v2175 = vunpack.c.l.b16 %v1477
        %v2176 = vunpack.c.h.b16 %v1477
        %v2177 = vunpack.c.l.b16 %v1478
        %v2178 = vunpack.c.h.b16 %v1478
        %v2179 = vunpack.c.l.b16 %v1479
        %v2180 = vunpack.c.h.b16 %v1479
        %v2181 = vunpack.c.l.b16 %v1480
        %v2182 = vunpack.c.h.b16 %v1480
        %v2183 = vunpack.c.l.b16 %v1481
        %v2184 = vunpack.c.h.b16 %v1481
        %v2185 = vunpack.c.l.b16 %v1482
        %v2186 = vunpack.c.h.b16 %v1482
        %v2187 = vunpack.c.l.b16 %v1483
        %v2188 = vunpack.c.h.b16 %v1483
        %v2189 = vunpack.c.l.b16 %v1484
        %v2190 = vunpack.c.h.b16 %v1484
        %v2191 = vunpack.c.l.b16 %v1485
        %v2192 = vunpack.c.h.b16 %v1485
        %v2193 = vunpack.c.l.b16 %v1486
        %v2194 = vunpack.c.h.b16 %v1486
        %v2195 = vunpack.c.l.b16 %v1487
        %v2196 = vunpack.c.h.b16 %v1487
        %v2197 = vunpack.c.l.b16 %v1488
        %v2198 = vunpack.c.h.b16 %v1488
        %v2199 = vunpack.c.l.b16 %v1489
        %v2200 = vunpack.c.h.b16 %v1489
        %v2201 = vunpack.c.l.b16 %v1490
        %v2202 = vunpack.c.h.b16 %v1490
        %v2203 = vunpack.c.l.b16 %v1491
        %v2204 = vunpack.c.h.b16 %v1491
        %v2205 = vunpack.c.l.b16 %v1492
        %v2206 = vunpack.c.h.b16 %v1492
        %v2207 = vunpack.c.l.b16 %v1493
        %v2208 = vunpack.c.h.b16 %v1493
        %v2209 = vunpack.c.l.b16 %v1494
        %v2210 = vunpack.c.h.b16 %v1494
        %v2211 = vunpack.c.l.b16 %v1495
        %v2212 = vunpack.c.h.b16 %v1495
        %v2213 = vunpack.c.l.b16 %v1496
        %v2214 = vunpack.c.h.b16 %v1496
        %v2215 = vunpack.c.l.b16 %v1497
        %v2216 = vunpack.c.h.b16 %v1497
        %v2217 = vunpack.c.l.b16 %v1498
        %v2218 = vunpack.c.h.b16 %v1498
        %v2219 = vunpack.c.l.b16 %v1499
        %v2220 = vunpack.c.h.b16 %v1499
        %v2221 = vunpack.c.l.b16 %v1500
        %v2222 = vunpack.c.h.b16 %v1500
        %v2223 = vunpack.c.l.b16 %v1501
        %v2224 = vunpack.c.h.b16 %v1501
        %v2225 = vunpack.c.l.b16 %v1502
        %v2226 = vunpack.c.h.b16 %v1502
        %v2227 = vunpack.c.l.b16 %v1503
        %v2228 = vunpack.c.h.b16 %v1503
        %v2229 = vunpack.c.l.b16 %v1504
        %v2230 = vunpack.c.h.b16 %v1504
        %v2231 = vunpack.c.l.b16 %v1505
        %v2232 = vunpack.c.h.b16 %v1505
        %v2233 = vunpack.c.l.b16 %v1506
        %v2234 = vunpack.c.h.b16 %v1506
        %v2235 = vunpack.c.l.b16 %v1507
        %v2236 = vunpack.c.h.b16 %v1507
        %v2237 = vunpack.c.l.b16 %v1508
        %v2238 = vunpack.c.h.b16 %v1508
        %v2239 = vunpack.c.l.b16 %v1509
        %v2240 = vunpack.c.h.b16 %v1509
        %v2241 = vunpack.c.l.b16 %v1510
        %v2242 = vunpack.c.h.b16 %v1510
        %v2243 = vunpack.c.l.b16 %v1511
        %v2244 = vunpack.c.h.b16 %v1511
        %v2245 = vunpack.c.l.b16 %v1512
        %v2246 = vunpack.c.h.b16 %v1512
        %v2247 = vunpack.c.l.b16 %v1513
        %v2248 = vunpack.c.h.b16 %v1513
        %v2249 = vunpack.c.l.b16 %v1514
        %v2250 = vunpack.c.h.b16 %v1514
        %v2251 = vunpack.c.l.b16 %v1515
        %v2252 = vunpack.c.h.b16 %v1515
        %v2253 = vunpack.c.l.b16 %v1516
        %v2254 = vunpack.c.h.b16 %v1516
        %v2255 = vunpack.c.l.b16 %v1517
        %v2256 = vunpack.c.h.b16 %v1517
        %v2257 = vunpack.c.l.b16 %v1518
        %v2258 = vunpack.c.h.b16 %v1518
        %v2259 = vunpack.c.l.b16 %v1519
        %v2260 = vunpack.c.h.b16 %v1519
        %v2261 = vunpack.c.l.b16 %v1520
        %v2262 = vunpack.c.h.b16 %v1520
        %v2263 = vunpack.c.l.b16 %v1521
        %v2264 = vunpack.c.h.b16 %v1521
        %v2265 = vunpack.c.l.b16 %v1522
        %v2266 = vunpack.c.h.b16 %v1522
        %v2267 = vunpack.c.l.b16 %v1523
        %v2268 = vunpack.c.h.b16 %v1523
        %v2269 = vunpack.c.l.b16 %v1524
        %v2270 = vunpack.c.h.b16 %v1524
        %v2271 = vunpack.c.l.b16 %v1525
        %v2272 = vunpack.c.h.b16 %v1525
        %v2273 = vunpack.c.l.b16 %v1526
        %v2274 = vunpack.c.h.b16 %v1526
        %v2275 = vunpack.c.l.b16 %v1527
        %v2276 = vunpack.c.h.b16 %v1527
        %v2277 = vunpack.c.l.b16 %v1528
        %v2278 = vunpack.c.h.b16 %v1528
        %v2279 = vunpack.c.l.b16 %v1529
        %v2280 = vunpack.c.h.b16 %v1529
        %v2281 = vunpack.c.l.b16 %v1530
        %v2282 = vunpack.c.h.b16 %v1530
        %v2283 = vunpack.c.l.b16 %v1531
        %v2284 = vunpack.c.h.b16 %v1531
        %v2285 = vunpack.c.l.b16 %v1532
        %v2286 = vunpack.c.h.b16 %v1532
        %v2287 = vunpack.c.l.b16 %v1533
        %v2288 = vunpack.c.h.b16 %v1533
        %v2289 = vunpack.c.l.b16 %v1534
        %v2290 = vunpack.c.h.b16 %v1534
        %v2291 = vunpack.c.l.b16 %v1535
        %v2292 = vunpack.c.h.b16 %v1535
        %v2293 = vunpack.c.l.b16 %v1536
        %v2294 = vunpack.c.h.b16 %v1536
        %v2295 = vunpack.c.l.b16 %v1537
        %v2296 = vunpack.c.h.b16 %v1537
        %v2297 = vunpack.c.l.b16 %v1538
        %v2298 = vunpack.c.h.b16 %v1538
        %v2299 = vunpack.c.l.b16 %v1539
        %v2300 = vunpack.c.h.b16 %v1539
        %v2301 = vunpack.c.l.b16 %v1540
        %v2302 = vunpack.c.h.b16 %v1540
        %v2303 = vunpack.c.l.b16 %v1541
        %v2304 = vunpack.c.h.b16 %v1541
        %v2305 = vunpack.c.l.b16 %v1542
        %v2306 = vunpack.c.h.b16 %v1542
        %v2307 = vunpack.c.l.b16 %v1543
        %v2308 = vunpack.c.h.b16 %v1543
        %v2309 = vunpack.c.l.b16 %v1544
        %v2310 = vunpack.c.h.b16 %v1544
        %v2311 = vunpack.c.l.b16 %v1545
        %v2312 = vunpack.c.h.b16 %v1545
        %v2313 = vunpack.c.l.b16 %v1546
        %v2314 = vunpack.c.h.b16 %v1546
        %v2315 = vpack.c.b16 %v2063, %v2059
        %v2316 = vpack.c.b16 %v2064, %v2060
        %v2317 = vpack.c.b16 %v2065, %v2061
        %v2318 = vpack.c.b16 %v2066, %v2062
        %v2319 = vpack.c.b16 %v2071, %v2067
        %v2320 = vpack.c.b16 %v2072, %v2068
        %v2321 = vpack.c.b16 %v2073, %v2069
        %v2322 = vpack.c.b16 %v2074, %v2070
        %v2323 = vpack.c.b16 %v2079, %v2075
        %v2324 = vpack.c.b16 %v2080, %v2076
        %v2325 = vpack.c.b16 %v2081, %v2077
        %v2326 = vpack.c.b16 %v2082, %v2078
        %v2327 = vpack.c.b16 %v2087, %v2083
        %v2328 = vpack.c.b16 %v2088, %v2084
        %v2329 = vpack.c.b16 %v2089, %v2085
        %v2330 = vpack.c.b16 %v2090, %v2086
        %v2331 = vpack.c.b16 %v2095, %v2091
        %v2332 = vpack.c.b16 %v2096, %v2092
        %v2333 = vpack.c.b16 %v2097, %v2093
        %v2334 = vpack.c.b16 %v2098, %v2094
        %v2335 = vpack.c.b16 %v2103, %v2099
        %v2336 = vpack.c.b16 %v2104, %v2100
        %v2337 = vpack.c.b16 %v2105, %v2101
        %v2338 = vpack.c.b16 %v2106, %v2102
        %v2339 = vpack.c.b16 %v2111, %v2107
        %v2340 = vpack.c.b16 %v2112, %v2108
        %v2341 = vpack.c.b16 %v2113, %v2109
        %v2342 = vpack.c.b16 %v2114, %v2110
        %v2343 = vpack.c.b16 %v2119, %v2115
        %v2344 = vpack.c.b16 %v2120, %v2116
        %v2345 = vpack.c.b16 %v2121, %v2117
        %v2346 = vpack.c.b16 %v2122, %v2118
        %v2347 = vpack.c.b16 %v2127, %v2123
        %v2348 = vpack.c.b16 %v2128, %v2124
        %v2349 = vpack.c.b16 %v2129, %v2125
        %v2350 = vpack.c.b16 %v2130, %v2126
        %v2351 = vpack.c.b16 %v2135, %v2131
        %v2352 = vpack.c.b16 %v2136, %v2132
        %v2353 = vpack.c.b16 %v2137, %v2133
        %v2354 = vpack.c.b16 %v2138, %v2134
        %v2355 = vpack.c.b16 %v2143, %v2139
        %v2356 = vpack.c.b16 %v2144, %v2140
        %v2357 = vpack.c.b16 %v2145, %v2141
        %v2358 = vpack.c.b16 %v2146, %v2142
        %v2359 = vpack.c.b16 %v2151, %v2147
        %v2360 = vpack.c.b16 %v2152, %v2148
        %v2361 = vpack.c.b16 %v2153, %v2149
        %v2362 = vpack.c.b16 %v2154, %v2150
        %v2363 = vpack.c.b16 %v2159, %v2155
        %v2364 = vpack.c.b16 %v2160, %v2156
        %v2365 = vpack.c.b16 %v2161, %v2157
        %v2366 = vpack.c.b16 %v2162, %v2158
        %v2367 = vpack.c.b16 %v2167, %v2163
        %v2368 = vpack.c.b16 %v2168, %v2164
        %v2369 = vpack.c.b16 %v2169, %v2165
        %v2370 = vpack.c.b16 %v2170, %v2166
        %v2371 = vpack.c.b16 %v2175, %v2171
        %v2372 = vpack.c.b16 %v2176, %v2172
        %v2373 = vpack.c.b16 %v2177, %v2173
        %v2374 = vpack.c.b16 %v2178, %v2174
        %v2375 = vpack.c.b16 %v2183, %v2179
        %v2376 = vpack.c.b16 %v2184, %v2180
        %v2377 = vpack.c.b16 %v2185, %v2181
        %v2378 = vpack.c.b16 %v2186, %v2182
        %v2379 = vpack.c.b16 %v2191, %v2187
        %v2380 = vpack.c.b16 %v2192, %v2188
        %v2381 = vpack.c.b16 %v2193, %v2189
        %v2382 = vpack.c.b16 %v2194, %v2190
        %v2383 = vpack.c.b16 %v2199, %v2195
        %v2384 = vpack.c.b16 %v2200, %v2196
        %v2385 = vpack.c.b16 %v2201, %v2197
        %v2386 = vpack.c.b16 %v2202, %v2198
        %v2387 = vpack.c.b16 %v2207, %v2203
        %v2388 = vpack.c.b16 %v2208, %v2204
        %v2389 = vpack.c.b16 %v2209, %v2205
        %v2390 = vpack.c.b16 %v2210, %v2206
        %v2391 = vpack.c.b16 %v2215, %v2211
        %v2392 = vpack.c.b16 %v2216, %v2212
        %v2393 = vpack.c.b16 %v2217, %v2213
        %v2394 = vpack.c.b16 %v2218, %v2214
        %v2395 = vpack.c.b16 %v2223, %v2219
        %v2396 = vpack.c.b16 %v2224, %v2220
        %v2397 = vpack.c.b16 %v2225, %v2221
        %v2398 = vpack.c.b16 %v2226, %v2222
        %v2399 = vpack.c.b16 %v2231, %v2227
        %v2400 = vpack.c.b16 %v2232, %v2228
        %v2401 = vpack.c.b16 %v2233, %v2229
        %v2402 = vpack.c.b16 %v2234, %v2230
        %v2403 = vpack.c.b16 %v2239, %v2235
        %v2404 = vpack.c.b16 %v2240, %v2236
        %v2405 = vpack.c.b16 %v2241, %v2237
        %v2406 = vpack.c.b16 %v2242, %v2238
        %v2407 = vpack.c.b16 %v2247, %v2243
        %v2408 = vpack.c.b16 %v2248, %v2244
        %v2409 = vpack.c.b16 %v2249, %v2245
        %v2410 = vpack.c.b16 %v2250, %v2246
        %v2411 = vpack.c.b16 %v2255, %v2251
        %v2412 = vpack.c.b16 %v2256, %v2252
        %v2413 = vpack.c.b16 %v2257, %v2253
        %v2414 = vpack.c.b16 %v2258, %v2254
        %v2415 = vpack.c.b16 %v2263, %v2259
        %v2416 = vpack.c.b16 %v2264, %v2260
        %v2417 = vpack.c.b16 %v2265, %v2261
        %v2418 = vpack.c.b16 %v2266, %v2262
        %v2419 = vpack.c.b16 %v2271, %v2267
        %v2420 = vpack.c.b16 %v2272, %v2268
        %v2421 = vpack.c.b16 %v2273, %v2269
        %v2422 = vpack.c.b16 %v2274, %v2270
        %v2423 = vpack.c.b16 %v2279, %v2275
        %v2424 = vpack.c.b16 %v2280, %v2276
        %v2425 = vpack.c.b16 %v2281, %v2277
        %v2426 = vpack.c.b16 %v2282, %v2278
        %v2427 = vpack.c.b16 %v2287, %v2283
        %v2428 = vpack.c.b16 %v2288, %v2284
        %v2429 = vpack.c.b16 %v2289, %v2285
        %v2430 = vpack.c.b16 %v2290, %v2286
        %v2431 = vpack.c.b16 %v2295, %v2291
        %v2432 = vpack.c.b16 %v2296, %v2292
        %v2433 = vpack.c.b16 %v2297, %v2293
        %v2434 = vpack.c.b16 %v2298, %v2294
        %v2435 = vpack.c.b16 %v2303, %v2299
        %v2436 = vpack.c.b16 %v2304, %v2300
        %v2437 = vpack.c.b16 %v2305, %v2301
        %v2438 = vpack.c.b16 %v2306, %v2302
        %v2439 = vpack.c.b16 %v2311, %v2307
        %v2440 = vpack.c.b16 %v2312, %v2308
        %v2441 = vpack.c.b16 %v2313, %v2309
        %v2442 = vpack.c.b16 %v2314, %v2310
        %2571 = vmatprep.subr.bf16.mxu0 0
        %2572 = vmatpush1.bf16.msra.mxu0 %v1394
        %2573 = vmatprep.subr.bf16.mxu0 0
        %2574 = vmatpush1.bf16.msra.mxu0 %v1393
        %2575 = vmatprep.subr.bf16.mxu0 0
        %2576 = vmatpush1.bf16.msra.mxu0 %v1392
        %2577 = vmatprep.subr.bf16.mxu0 0
        %2578 = vmatpush1.bf16.msra.mxu0 %v1391
        %2579 = vmatprep.subr.bf16.mxu0 0
        %2580 = vmatpush1.bf16.msra.mxu0 %v1390
        %2581 = vmatprep.subr.bf16.mxu0 0
        %2582 = vmatpush1.bf16.msra.mxu0 %v1389
        %2583 = vmatprep.subr.bf16.mxu0 0
        %2584 = vmatpush1.bf16.msra.mxu0 %v1388
        %2585 = vmatprep.subr.bf16.mxu0 0
        %2586 = vmatpush1.bf16.msra.mxu0 %v1387
        %2587 = vmatprep.subr.bf16.mxu0 0
        %2588 = vmatpush2.bf16.msra.mxu0 %v1402
        %2589 = vmatprep.subr.bf16.mxu0 0
        %2590 = vmatpush2.bf16.msra.mxu0 %v1401
        %2591 = vmatprep.subr.bf16.mxu0 0
        %2592 = vmatpush2.bf16.msra.mxu0 %v1400
        %2593 = vmatprep.subr.bf16.mxu0 0
        %2594 = vmatpush2.bf16.msra.mxu0 %v1399
        %2595 = vmatprep.subr.bf16.mxu0 0
        %2596 = vmatpush2.bf16.msra.mxu0 %v1398
        %2597 = vmatprep.subr.bf16.mxu0 0
        %2598 = vmatpush2.bf16.msra.mxu0 %v1397
        %2599 = vmatprep.subr.bf16.mxu0 0
        %2600 = vmatpush2.bf16.msra.mxu0 %v1396
        %2601 = vmatprep.subr.bf16.mxu0 0
        %2602 = vmatpush2.bf16.msra.mxu0 %v1395
        %2603 = vmatprep.mubr.bf16.mxu0 %v2316
        %2604 = vmatmul.mubr.bf16.gmra.mxu0 %v2315
        %v2605 = vpop.f32.mrf.mxu0
        %v2606 = vadd.f32 %v1614, %v2605
        %v2607 = vpop.f32.mrf.mxu0
        %v2608 = vpop.f32.mrf.mxu0
        %v2609 = vadd.f32 %v1619, %v2608
        %v2610 = vpop.f32.mrf.mxu0
        %2611 = vmatprep.mubr.bf16.mxu0 %v2320
        %2612 = vmatmul.mubr.bf16.gmra.mxu0 %v2319
        %v2613 = vpop.f32.mrf.mxu0
        %v2614 = vadd.f32 %v1624, %v2613
        %v2615 = vpop.f32.mrf.mxu0
        %v2616 = vpop.f32.mrf.mxu0
        %v2617 = vadd.f32 %v1629, %v2616
        %v2618 = vpop.f32.mrf.mxu0
        %2619 = vmatprep.mubr.bf16.mxu0 %v2324
        %2620 = vmatmul.mubr.bf16.gmra.mxu0 %v2323
        %v2621 = vpop.f32.mrf.mxu0
        %v2622 = vadd.f32 %v1634, %v2621
        %v2623 = vpop.f32.mrf.mxu0
        %v2624 = vpop.f32.mrf.mxu0
        %v2625 = vadd.f32 %v1639, %v2624
        %v2626 = vpop.f32.mrf.mxu0
        %2627 = vmatprep.mubr.bf16.mxu0 %v2328
        %2628 = vmatmul.mubr.bf16.gmra.mxu0 %v2327
        %v2629 = vpop.f32.mrf.mxu0
        %v2630 = vadd.f32 %v1644, %v2629
        %v2631 = vpop.f32.mrf.mxu0
        %v2632 = vpop.f32.mrf.mxu0
        %v2633 = vadd.f32 %v1649, %v2632
        %v2634 = vpop.f32.mrf.mxu0
        %2635 = vmatprep.mubr.bf16.mxu0 %v2332
        %2636 = vmatmul.mubr.bf16.gmra.mxu0 %v2331
        %v2637 = vpop.f32.mrf.mxu0
        %v2638 = vadd.f32 %v1654, %v2637
        %v2639 = vpop.f32.mrf.mxu0
        %v2640 = vpop.f32.mrf.mxu0
        %v2641 = vadd.f32 %v1659, %v2640
        %v2642 = vpop.f32.mrf.mxu0
        %2643 = vmatprep.mubr.bf16.mxu0 %v2336
        %2644 = vmatmul.mubr.bf16.gmra.mxu0 %v2335
        %v2645 = vpop.f32.mrf.mxu0
        %v2646 = vadd.f32 %v1664, %v2645
        %v2647 = vpop.f32.mrf.mxu0
        %v2648 = vpop.f32.mrf.mxu0
        %v2649 = vadd.f32 %v1669, %v2648
        %v2650 = vpop.f32.mrf.mxu0
        %2651 = vmatprep.mubr.bf16.mxu0 %v2340
        %2652 = vmatmul.mubr.bf16.gmra.mxu0 %v2339
        %v2653 = vpop.f32.mrf.mxu0
        %v2654 = vadd.f32 %v1674, %v2653
        %v2655 = vpop.f32.mrf.mxu0
        %v2656 = vpop.f32.mrf.mxu0
        %v2657 = vadd.f32 %v1679, %v2656
        %v2658 = vpop.f32.mrf.mxu0
        %2659 = vmatprep.mubr.bf16.mxu0 %v2344
        %2660 = vmatmul.mubr.bf16.gmra.mxu0 %v2343
        %v2661 = vpop.f32.mrf.mxu0
        %v2662 = vadd.f32 %v1684, %v2661
        %v2663 = vpop.f32.mrf.mxu0
        %v2664 = vpop.f32.mrf.mxu0
        %v2665 = vadd.f32 %v1689, %v2664
        %v2666 = vpop.f32.mrf.mxu0
        %2667 = vmatprep.mubr.bf16.mxu0 %v2348
        %2668 = vmatmul.mubr.bf16.gmra.mxu0 %v2347
        %v2669 = vpop.f32.mrf.mxu0
        %v2670 = vadd.f32 %v1694, %v2669
        %v2671 = vpop.f32.mrf.mxu0
        %v2672 = vpop.f32.mrf.mxu0
        %v2673 = vadd.f32 %v1699, %v2672
        %v2674 = vpop.f32.mrf.mxu0
        %2675 = vmatprep.mubr.bf16.mxu0 %v2352
        %2676 = vmatmul.mubr.bf16.gmra.mxu0 %v2351
        %v2677 = vpop.f32.mrf.mxu0
        %v2678 = vadd.f32 %v1704, %v2677
        %v2679 = vpop.f32.mrf.mxu0
        %v2680 = vpop.f32.mrf.mxu0
        %v2681 = vadd.f32 %v1709, %v2680
        %v2682 = vpop.f32.mrf.mxu0
        %2683 = vmatprep.mubr.bf16.mxu0 %v2356
        %2684 = vmatmul.mubr.bf16.gmra.mxu0 %v2355
        %v2685 = vpop.f32.mrf.mxu0
        %v2686 = vadd.f32 %v1714, %v2685
        %v2687 = vpop.f32.mrf.mxu0
        %v2688 = vpop.f32.mrf.mxu0
        %v2689 = vadd.f32 %v1719, %v2688
        %v2690 = vpop.f32.mrf.mxu0
        %2691 = vmatprep.mubr.bf16.mxu0 %v2360
        %2692 = vmatmul.mubr.bf16.gmra.mxu0 %v2359
        %v2693 = vpop.f32.mrf.mxu0
        %v2694 = vadd.f32 %v1724, %v2693
        %v2695 = vpop.f32.mrf.mxu0
        %v2696 = vpop.f32.mrf.mxu0
        %v2697 = vadd.f32 %v1729, %v2696
        %v2698 = vpop.f32.mrf.mxu0
        %2699 = vmatprep.mubr.bf16.mxu0 %v2364
        %2700 = vmatmul.mubr.bf16.gmra.mxu0 %v2363
        %v2701 = vpop.f32.mrf.mxu0
        %v2702 = vadd.f32 %v1734, %v2701
        %v2703 = vpop.f32.mrf.mxu0
        %v2704 = vpop.f32.mrf.mxu0
        %v2705 = vadd.f32 %v1739, %v2704
        %v2706 = vpop.f32.mrf.mxu0
        %2707 = vmatprep.mubr.bf16.mxu0 %v2368
        %2708 = vmatmul.mubr.bf16.gmra.mxu0 %v2367
        %v2709 = vpop.f32.mrf.mxu0
        %v2710 = vadd.f32 %v1744, %v2709
        %v2711 = vpop.f32.mrf.mxu0
        %v2712 = vpop.f32.mrf.mxu0
        %v2713 = vadd.f32 %v1749, %v2712
        %v2714 = vpop.f32.mrf.mxu0
        %2715 = vmatprep.mubr.bf16.mxu0 %v2372
        %2716 = vmatmul.mubr.bf16.gmra.mxu0 %v2371
        %v2717 = vpop.f32.mrf.mxu0
        %v2718 = vadd.f32 %v1754, %v2717
        %v2719 = vpop.f32.mrf.mxu0
        %v2720 = vpop.f32.mrf.mxu0
        %v2721 = vadd.f32 %v1759, %v2720
        %v2722 = vpop.f32.mrf.mxu0
        %2723 = vmatprep.mubr.bf16.mxu0 %v2376
        %2724 = vmatmul.mubr.bf16.gmra.mxu0 %v2375
        %v2725 = vpop.f32.mrf.mxu0
        %v2726 = vadd.f32 %v1764, %v2725
        %v2727 = vpop.f32.mrf.mxu0
        %v2728 = vpop.f32.mrf.mxu0
        %v2729 = vadd.f32 %v1769, %v2728
        %v2730 = vpop.f32.mrf.mxu0
        %2731 = vmatprep.mubr.bf16.mxu0 %v2380
        %2732 = vmatmul.mubr.bf16.gmra.mxu0 %v2379
        %v2733 = vpop.f32.mrf.mxu0
        %v2734 = vadd.f32 %v1774, %v2733
        %v2735 = vpop.f32.mrf.mxu0
        %v2736 = vpop.f32.mrf.mxu0
        %v2737 = vadd.f32 %v1779, %v2736
        %v2738 = vpop.f32.mrf.mxu0
        %2739 = vmatprep.mubr.bf16.mxu0 %v2384
        %2740 = vmatmul.mubr.bf16.gmra.mxu0 %v2383
        %v2741 = vpop.f32.mrf.mxu0
        %v2742 = vadd.f32 %v1784, %v2741
        %v2743 = vpop.f32.mrf.mxu0
        %v2744 = vpop.f32.mrf.mxu0
        %v2745 = vadd.f32 %v1789, %v2744
        %v2746 = vpop.f32.mrf.mxu0
        %2747 = vmatprep.mubr.bf16.mxu0 %v2388
        %2748 = vmatmul.mubr.bf16.gmra.mxu0 %v2387
        %v2749 = vpop.f32.mrf.mxu0
        %v2750 = vadd.f32 %v1794, %v2749
        %v2751 = vpop.f32.mrf.mxu0
        %v2752 = vpop.f32.mrf.mxu0
        %v2753 = vadd.f32 %v1799, %v2752
        %v2754 = vpop.f32.mrf.mxu0
        %2755 = vmatprep.mubr.bf16.mxu0 %v2392
        %2756 = vmatmul.mubr.bf16.gmra.mxu0 %v2391
        %v2757 = vpop.f32.mrf.mxu0
        %v2758 = vadd.f32 %v1804, %v2757
        %v2759 = vpop.f32.mrf.mxu0
        %v2760 = vpop.f32.mrf.mxu0
        %v2761 = vadd.f32 %v1809, %v2760
        %v2762 = vpop.f32.mrf.mxu0
        %2763 = vmatprep.mubr.bf16.mxu0 %v2396
        %2764 = vmatmul.mubr.bf16.gmra.mxu0 %v2395
        %v2765 = vpop.f32.mrf.mxu0
        %v2766 = vadd.f32 %v1814, %v2765
        %v2767 = vpop.f32.mrf.mxu0
        %v2768 = vpop.f32.mrf.mxu0
        %v2769 = vadd.f32 %v1819, %v2768
        %v2770 = vpop.f32.mrf.mxu0
        %2771 = vmatprep.mubr.bf16.mxu0 %v2400
        %2772 = vmatmul.mubr.bf16.gmra.mxu0 %v2399
        %v2773 = vpop.f32.mrf.mxu0
        %v2774 = vadd.f32 %v1824, %v2773
        %v2775 = vpop.f32.mrf.mxu0
        %v2776 = vpop.f32.mrf.mxu0
        %v2777 = vadd.f32 %v1829, %v2776
        %v2778 = vpop.f32.mrf.mxu0
        %2779 = vmatprep.mubr.bf16.mxu0 %v2404
        %2780 = vmatmul.mubr.bf16.gmra.mxu0 %v2403
        %v2781 = vpop.f32.mrf.mxu0
        %v2782 = vadd.f32 %v1834, %v2781
        %v2783 = vpop.f32.mrf.mxu0
        %v2784 = vpop.f32.mrf.mxu0
        %v2785 = vadd.f32 %v1839, %v2784
        %v2786 = vpop.f32.mrf.mxu0
        %2787 = vmatprep.mubr.bf16.mxu0 %v2408
        %2788 = vmatmul.mubr.bf16.gmra.mxu0 %v2407
        %v2789 = vpop.f32.mrf.mxu0
        %v2790 = vadd.f32 %v1844, %v2789
        %v2791 = vpop.f32.mrf.mxu0
        %v2792 = vpop.f32.mrf.mxu0
        %v2793 = vadd.f32 %v1849, %v2792
        %v2794 = vpop.f32.mrf.mxu0
        %2795 = vmatprep.mubr.bf16.mxu0 %v2412
        %2796 = vmatmul.mubr.bf16.gmra.mxu0 %v2411
        %v2797 = vpop.f32.mrf.mxu0
        %v2798 = vadd.f32 %v1854, %v2797
        %v2799 = vpop.f32.mrf.mxu0
        %v2800 = vpop.f32.mrf.mxu0
        %v2801 = vadd.f32 %v1859, %v2800
        %v2802 = vpop.f32.mrf.mxu0
        %2803 = vmatprep.mubr.bf16.mxu0 %v2416
        %2804 = vmatmul.mubr.bf16.gmra.mxu0 %v2415
        %v2805 = vpop.f32.mrf.mxu0
        %v2806 = vadd.f32 %v1864, %v2805
        %v2807 = vpop.f32.mrf.mxu0
        %v2808 = vpop.f32.mrf.mxu0
        %v2809 = vadd.f32 %v1869, %v2808
        %v2810 = vpop.f32.mrf.mxu0
        %2811 = vmatprep.mubr.bf16.mxu0 %v2420
        %2812 = vmatmul.mubr.bf16.gmra.mxu0 %v2419
        %v2813 = vpop.f32.mrf.mxu0
        %v2814 = vadd.f32 %v1874, %v2813
        %v2815 = vpop.f32.mrf.mxu0
        %v2816 = vpop.f32.mrf.mxu0
        %v2817 = vadd.f32 %v1879, %v2816
        %v2818 = vpop.f32.mrf.mxu0
        %2819 = vmatprep.mubr.bf16.mxu0 %v2424
        %2820 = vmatmul.mubr.bf16.gmra.mxu0 %v2423
        %v2821 = vpop.f32.mrf.mxu0
        %v2822 = vadd.f32 %v1884, %v2821
        %v2823 = vpop.f32.mrf.mxu0
        %v2824 = vpop.f32.mrf.mxu0
        %v2825 = vadd.f32 %v1889, %v2824
        %v2826 = vpop.f32.mrf.mxu0
        %2827 = vmatprep.mubr.bf16.mxu0 %v2428
        %2828 = vmatmul.mubr.bf16.gmra.mxu0 %v2427
        %v2829 = vpop.f32.mrf.mxu0
        %v2830 = vadd.f32 %v1894, %v2829
        %v2831 = vpop.f32.mrf.mxu0
        %v2832 = vpop.f32.mrf.mxu0
        %v2833 = vadd.f32 %v1899, %v2832
        %v2834 = vpop.f32.mrf.mxu0
        %2835 = vmatprep.mubr.bf16.mxu0 %v2432
        %2836 = vmatmul.mubr.bf16.gmra.mxu0 %v2431
        %v2837 = vpop.f32.mrf.mxu0
        %v2838 = vadd.f32 %v1904, %v2837
        %v2839 = vpop.f32.mrf.mxu0
        %v2840 = vpop.f32.mrf.mxu0
        %v2841 = vadd.f32 %v1909, %v2840
        %v2842 = vpop.f32.mrf.mxu0
        %2843 = vmatprep.mubr.bf16.mxu0 %v2436
        %2844 = vmatmul.mubr.bf16.gmra.mxu0 %v2435
        %v2845 = vpop.f32.mrf.mxu0
        %v2846 = vadd.f32 %v1914, %v2845
        %v2847 = vpop.f32.mrf.mxu0
        %v2848 = vpop.f32.mrf.mxu0
        %v2849 = vadd.f32 %v1919, %v2848
        %v2850 = vpop.f32.mrf.mxu0
        %2851 = vmatprep.mubr.bf16.mxu0 %v2440
        %2852 = vmatmul.mubr.bf16.gmra.mxu0 %v2439
        %v2853 = vpop.f32.mrf.mxu0
        %v2854 = vadd.f32 %v1924, %v2853
        %v2855 = vpop.f32.mrf.mxu0
        %v2856 = vpop.f32.mrf.mxu0
        %v2857 = vadd.f32 %v1929, %v2856
        %v2858 = vpop.f32.mrf.mxu0
        %2859 = vdwg.mxu0
        %2860 = vmatprep.subr.bf16.mxu0 0
        %2861 = vmatpush1.bf16.msra.mxu0 %v1410
        %2862 = vmatprep.subr.bf16.mxu0 0
        %2863 = vmatpush1.bf16.msra.mxu0 %v1409
        %2864 = vmatprep.subr.bf16.mxu0 0
        %2865 = vmatpush1.bf16.msra.mxu0 %v1408
        %2866 = vmatprep.subr.bf16.mxu0 0
        %2867 = vmatpush1.bf16.msra.mxu0 %v1407
        %2868 = vmatprep.subr.bf16.mxu0 0
        %2869 = vmatpush1.bf16.msra.mxu0 %v1406
        %2870 = vmatprep.subr.bf16.mxu0 0
        %2871 = vmatpush1.bf16.msra.mxu0 %v1405
        %2872 = vmatprep.subr.bf16.mxu0 0
        %2873 = vmatpush1.bf16.msra.mxu0 %v1404
        %2874 = vmatprep.subr.bf16.mxu0 0
        %2875 = vmatpush1.bf16.msra.mxu0 %v1403
        %2876 = vmatprep.subr.bf16.mxu0 0
        %2877 = vmatpush2.bf16.msra.mxu0 %v1418
        %2878 = vmatprep.subr.bf16.mxu0 0
        %2879 = vmatpush2.bf16.msra.mxu0 %v1417
        %2880 = vmatprep.subr.bf16.mxu0 0
        %2881 = vmatpush2.bf16.msra.mxu0 %v1416
        %2882 = vmatprep.subr.bf16.mxu0 0
        %2883 = vmatpush2.bf16.msra.mxu0 %v1415
        %2884 = vmatprep.subr.bf16.mxu0 0
        %2885 = vmatpush2.bf16.msra.mxu0 %v1414
        %2886 = vmatprep.subr.bf16.mxu0 0
        %2887 = vmatpush2.bf16.msra.mxu0 %v1413
        %2888 = vmatprep.subr.bf16.mxu0 0
        %2889 = vmatpush2.bf16.msra.mxu0 %v1412
        %2890 = vmatprep.subr.bf16.mxu0 0
        %2891 = vmatpush2.bf16.msra.mxu0 %v1411
        %2892 = vmatprep.mubr.bf16.mxu0 %v2318
        %2893 = vmatmul.mubr.bf16.gmra.mxu0 %v2317
        %v2894 = vpop.f32.mrf.mxu0
        %v2895 = vadd.f32 %v2606, %v2894
        %v2896 = vpop.f32.mrf.mxu0
        %v2897 = vpop.f32.mrf.mxu0
        %v2898 = vadd.f32 %v2609, %v2897
        %v2899 = vpop.f32.mrf.mxu0
        %2900 = vmatprep.mubr.bf16.mxu0 %v2322
        %2901 = vmatmul.mubr.bf16.gmra.mxu0 %v2321
        %v2902 = vpop.f32.mrf.mxu0
        %v2903 = vadd.f32 %v2614, %v2902
        %v2904 = vpop.f32.mrf.mxu0
        %v2905 = vpop.f32.mrf.mxu0
        %v2906 = vadd.f32 %v2617, %v2905
        %v2907 = vpop.f32.mrf.mxu0
        %2908 = vmatprep.mubr.bf16.mxu0 %v2326
        %2909 = vmatmul.mubr.bf16.gmra.mxu0 %v2325
        %v2910 = vpop.f32.mrf.mxu0
        %v2911 = vadd.f32 %v2622, %v2910
        %v2912 = vpop.f32.mrf.mxu0
        %v2913 = vpop.f32.mrf.mxu0
        %v2914 = vadd.f32 %v2625, %v2913
        %v2915 = vpop.f32.mrf.mxu0
        %2916 = vmatprep.mubr.bf16.mxu0 %v2330
        %2917 = vmatmul.mubr.bf16.gmra.mxu0 %v2329
        %v2918 = vpop.f32.mrf.mxu0
        %v2919 = vadd.f32 %v2630, %v2918
        %v2920 = vpop.f32.mrf.mxu0
        %v2921 = vpop.f32.mrf.mxu0
        %v2922 = vadd.f32 %v2633, %v2921
        %v2923 = vpop.f32.mrf.mxu0
        %2924 = vmatprep.mubr.bf16.mxu0 %v2334
        %2925 = vmatmul.mubr.bf16.gmra.mxu0 %v2333
        %v2926 = vpop.f32.mrf.mxu0
        %v2927 = vadd.f32 %v2638, %v2926
        %v2928 = vpop.f32.mrf.mxu0
        %v2929 = vpop.f32.mrf.mxu0
        %v2930 = vadd.f32 %v2641, %v2929
        %v2931 = vpop.f32.mrf.mxu0
        %2932 = vmatprep.mubr.bf16.mxu0 %v2338
        %2933 = vmatmul.mubr.bf16.gmra.mxu0 %v2337
        %v2934 = vpop.f32.mrf.mxu0
        %v2935 = vadd.f32 %v2646, %v2934
        %v2936 = vpop.f32.mrf.mxu0
        %v2937 = vpop.f32.mrf.mxu0
        %v2938 = vadd.f32 %v2649, %v2937
        %v2939 = vpop.f32.mrf.mxu0
        %2940 = vmatprep.mubr.bf16.mxu0 %v2342
        %2941 = vmatmul.mubr.bf16.gmra.mxu0 %v2341
        %v2942 = vpop.f32.mrf.mxu0
        %v2943 = vadd.f32 %v2654, %v2942
        %v2944 = vpop.f32.mrf.mxu0
        %v2945 = vpop.f32.mrf.mxu0
        %v2946 = vadd.f32 %v2657, %v2945
        %v2947 = vpop.f32.mrf.mxu0
        %2948 = vmatprep.mubr.bf16.mxu0 %v2346
        %2949 = vmatmul.mubr.bf16.gmra.mxu0 %v2345
        %v2950 = vpop.f32.mrf.mxu0
        %v2951 = vadd.f32 %v2662, %v2950
        %v2952 = vpop.f32.mrf.mxu0
        %v2953 = vpop.f32.mrf.mxu0
        %v2954 = vadd.f32 %v2665, %v2953
        %v2955 = vpop.f32.mrf.mxu0
        %2956 = vmatprep.mubr.bf16.mxu0 %v2350
        %2957 = vmatmul.mubr.bf16.gmra.mxu0 %v2349
        %v2958 = vpop.f32.mrf.mxu0
        %v2959 = vadd.f32 %v2670, %v2958
        %v2960 = vpop.f32.mrf.mxu0
        %v2961 = vpop.f32.mrf.mxu0
        %v2962 = vadd.f32 %v2673, %v2961
        %v2963 = vpop.f32.mrf.mxu0
        %2964 = vmatprep.mubr.bf16.mxu0 %v2354
        %2965 = vmatmul.mubr.bf16.gmra.mxu0 %v2353
        %v2966 = vpop.f32.mrf.mxu0
        %v2967 = vadd.f32 %v2678, %v2966
        %v2968 = vpop.f32.mrf.mxu0
        %v2969 = vpop.f32.mrf.mxu0
        %v2970 = vadd.f32 %v2681, %v2969
        %v2971 = vpop.f32.mrf.mxu0
        %2972 = vmatprep.mubr.bf16.mxu0 %v2358
        %2973 = vmatmul.mubr.bf16.gmra.mxu0 %v2357
        %v2974 = vpop.f32.mrf.mxu0
        %v2975 = vadd.f32 %v2686, %v2974
        %v2976 = vpop.f32.mrf.mxu0
        %v2977 = vpop.f32.mrf.mxu0
        %v2978 = vadd.f32 %v2689, %v2977
        %v2979 = vpop.f32.mrf.mxu0
        %2980 = vmatprep.mubr.bf16.mxu0 %v2362
        %2981 = vmatmul.mubr.bf16.gmra.mxu0 %v2361
        %v2982 = vpop.f32.mrf.mxu0
        %v2983 = vadd.f32 %v2694, %v2982
        %v2984 = vpop.f32.mrf.mxu0
        %v2985 = vpop.f32.mrf.mxu0
        %v2986 = vadd.f32 %v2697, %v2985
        %v2987 = vpop.f32.mrf.mxu0
        %2988 = vmatprep.mubr.bf16.mxu0 %v2366
        %2989 = vmatmul.mubr.bf16.gmra.mxu0 %v2365
        %v2990 = vpop.f32.mrf.mxu0
        %v2991 = vadd.f32 %v2702, %v2990
        %v2992 = vpop.f32.mrf.mxu0
        %v2993 = vpop.f32.mrf.mxu0
        %v2994 = vadd.f32 %v2705, %v2993
        %v2995 = vpop.f32.mrf.mxu0
        %2996 = vmatprep.mubr.bf16.mxu0 %v2370
        %2997 = vmatmul.mubr.bf16.gmra.mxu0 %v2369
        %v2998 = vpop.f32.mrf.mxu0
        %v2999 = vadd.f32 %v2710, %v2998
        %v3000 = vpop.f32.mrf.mxu0
        %v3001 = vpop.f32.mrf.mxu0
        %v3002 = vadd.f32 %v2713, %v3001
        %v3003 = vpop.f32.mrf.mxu0
        %3004 = vmatprep.mubr.bf16.mxu0 %v2374
        %3005 = vmatmul.mubr.bf16.gmra.mxu0 %v2373
        %v3006 = vpop.f32.mrf.mxu0
        %v3007 = vadd.f32 %v2718, %v3006
        %v3008 = vpop.f32.mrf.mxu0
        %v3009 = vpop.f32.mrf.mxu0
        %v3010 = vadd.f32 %v2721, %v3009
        %v3011 = vpop.f32.mrf.mxu0
        %3012 = vmatprep.mubr.bf16.mxu0 %v2378
        %3013 = vmatmul.mubr.bf16.gmra.mxu0 %v2377
        %v3014 = vpop.f32.mrf.mxu0
        %v3015 = vadd.f32 %v2726, %v3014
        %v3016 = vpop.f32.mrf.mxu0
        %v3017 = vpop.f32.mrf.mxu0
        %v3018 = vadd.f32 %v2729, %v3017
        %v3019 = vpop.f32.mrf.mxu0
        %3020 = vmatprep.mubr.bf16.mxu0 %v2382
        %3021 = vmatmul.mubr.bf16.gmra.mxu0 %v2381
        %v3022 = vpop.f32.mrf.mxu0
        %v3023 = vadd.f32 %v2734, %v3022
        %v3024 = vpop.f32.mrf.mxu0
        %v3025 = vpop.f32.mrf.mxu0
        %v3026 = vadd.f32 %v2737, %v3025
        %v3027 = vpop.f32.mrf.mxu0
        %3028 = vmatprep.mubr.bf16.mxu0 %v2386
        %3029 = vmatmul.mubr.bf16.gmra.mxu0 %v2385
        %v3030 = vpop.f32.mrf.mxu0
        %v3031 = vadd.f32 %v2742, %v3030
        %v3032 = vpop.f32.mrf.mxu0
        %v3033 = vpop.f32.mrf.mxu0
        %v3034 = vadd.f32 %v2745, %v3033
        %v3035 = vpop.f32.mrf.mxu0
        %3036 = vmatprep.mubr.bf16.mxu0 %v2390
        %3037 = vmatmul.mubr.bf16.gmra.mxu0 %v2389
        %v3038 = vpop.f32.mrf.mxu0
        %v3039 = vadd.f32 %v2750, %v3038
        %v3040 = vpop.f32.mrf.mxu0
        %v3041 = vpop.f32.mrf.mxu0
        %v3042 = vadd.f32 %v2753, %v3041
        %v3043 = vpop.f32.mrf.mxu0
        %3044 = vmatprep.mubr.bf16.mxu0 %v2394
        %3045 = vmatmul.mubr.bf16.gmra.mxu0 %v2393
        %v3046 = vpop.f32.mrf.mxu0
        %v3047 = vadd.f32 %v2758, %v3046
        %v3048 = vpop.f32.mrf.mxu0
        %v3049 = vpop.f32.mrf.mxu0
        %v3050 = vadd.f32 %v2761, %v3049
        %v3051 = vpop.f32.mrf.mxu0
        %3052 = vmatprep.mubr.bf16.mxu0 %v2398
        %3053 = vmatmul.mubr.bf16.gmra.mxu0 %v2397
        %v3054 = vpop.f32.mrf.mxu0
        %v3055 = vadd.f32 %v2766, %v3054
        %v3056 = vpop.f32.mrf.mxu0
        %v3057 = vpop.f32.mrf.mxu0
        %v3058 = vadd.f32 %v2769, %v3057
        %v3059 = vpop.f32.mrf.mxu0
        %3060 = vmatprep.mubr.bf16.mxu0 %v2402
        %3061 = vmatmul.mubr.bf16.gmra.mxu0 %v2401
        %v3062 = vpop.f32.mrf.mxu0
        %v3063 = vadd.f32 %v2774, %v3062
        %v3064 = vpop.f32.mrf.mxu0
        %v3065 = vpop.f32.mrf.mxu0
        %v3066 = vadd.f32 %v2777, %v3065
        %v3067 = vpop.f32.mrf.mxu0
        %3068 = vmatprep.mubr.bf16.mxu0 %v2406
        %3069 = vmatmul.mubr.bf16.gmra.mxu0 %v2405
        %v3070 = vpop.f32.mrf.mxu0
        %v3071 = vadd.f32 %v2782, %v3070
        %v3072 = vpop.f32.mrf.mxu0
        %v3073 = vpop.f32.mrf.mxu0
        %v3074 = vadd.f32 %v2785, %v3073
        %v3075 = vpop.f32.mrf.mxu0
        %3076 = vmatprep.mubr.bf16.mxu0 %v2410
        %3077 = vmatmul.mubr.bf16.gmra.mxu0 %v2409
        %v3078 = vpop.f32.mrf.mxu0
        %v3079 = vadd.f32 %v2790, %v3078
        %v3080 = vpop.f32.mrf.mxu0
        %v3081 = vpop.f32.mrf.mxu0
        %v3082 = vadd.f32 %v2793, %v3081
        %v3083 = vpop.f32.mrf.mxu0
        %3084 = vmatprep.mubr.bf16.mxu0 %v2414
        %3085 = vmatmul.mubr.bf16.gmra.mxu0 %v2413
        %v3086 = vpop.f32.mrf.mxu0
        %v3087 = vadd.f32 %v2798, %v3086
        %v3088 = vpop.f32.mrf.mxu0
        %v3089 = vpop.f32.mrf.mxu0
        %v3090 = vadd.f32 %v2801, %v3089
        %v3091 = vpop.f32.mrf.mxu0
        %3092 = vmatprep.mubr.bf16.mxu0 %v2418
        %3093 = vmatmul.mubr.bf16.gmra.mxu0 %v2417
        %v3094 = vpop.f32.mrf.mxu0
        %v3095 = vadd.f32 %v2806, %v3094
        %v3096 = vpop.f32.mrf.mxu0
        %v3097 = vpop.f32.mrf.mxu0
        %v3098 = vadd.f32 %v2809, %v3097
        %v3099 = vpop.f32.mrf.mxu0
        %3100 = vmatprep.mubr.bf16.mxu0 %v2422
        %3101 = vmatmul.mubr.bf16.gmra.mxu0 %v2421
        %v3102 = vpop.f32.mrf.mxu0
        %v3103 = vadd.f32 %v2814, %v3102
        %v3104 = vpop.f32.mrf.mxu0
        %v3105 = vpop.f32.mrf.mxu0
        %v3106 = vadd.f32 %v2817, %v3105
        %v3107 = vpop.f32.mrf.mxu0
        %3108 = vmatprep.mubr.bf16.mxu0 %v2426
        %3109 = vmatmul.mubr.bf16.gmra.mxu0 %v2425
        %v3110 = vpop.f32.mrf.mxu0
        %v3111 = vadd.f32 %v2822, %v3110
        %v3112 = vpop.f32.mrf.mxu0
        %v3113 = vpop.f32.mrf.mxu0
        %v3114 = vadd.f32 %v2825, %v3113
        %v3115 = vpop.f32.mrf.mxu0
        %3116 = vmatprep.mubr.bf16.mxu0 %v2430
        %3117 = vmatmul.mubr.bf16.gmra.mxu0 %v2429
        %v3118 = vpop.f32.mrf.mxu0
        %v3119 = vadd.f32 %v2830, %v3118
        %v3120 = vpop.f32.mrf.mxu0
        %v3121 = vpop.f32.mrf.mxu0
        %v3122 = vadd.f32 %v2833, %v3121
        %v3123 = vpop.f32.mrf.mxu0
        %3124 = vmatprep.mubr.bf16.mxu0 %v2434
        %3125 = vmatmul.mubr.bf16.gmra.mxu0 %v2433
        %v3126 = vpop.f32.mrf.mxu0
        %v3127 = vadd.f32 %v2838, %v3126
        %v3128 = vpop.f32.mrf.mxu0
        %v3129 = vpop.f32.mrf.mxu0
        %v3130 = vadd.f32 %v2841, %v3129
        %v3131 = vpop.f32.mrf.mxu0
        %3132 = vmatprep.mubr.bf16.mxu0 %v2438
        %3133 = vmatmul.mubr.bf16.gmra.mxu0 %v2437
        %v3134 = vpop.f32.mrf.mxu0
        %v3135 = vadd.f32 %v2846, %v3134
        %v3136 = vpop.f32.mrf.mxu0
        %v3137 = vpop.f32.mrf.mxu0
        %v3138 = vadd.f32 %v2849, %v3137
        %v3139 = vpop.f32.mrf.mxu0
        %3140 = vmatprep.mubr.bf16.mxu0 %v2442
        %3141 = vmatmul.mubr.bf16.gmra.mxu0 %v2441
        %v3142 = vpop.f32.mrf.mxu0
        %v3143 = vadd.f32 %v2854, %v3142
        %v3144 = vpop.f32.mrf.mxu0
        %v3145 = vpop.f32.mrf.mxu0
        %v3146 = vadd.f32 %v2857, %v3145
        %v3147 = vpop.f32.mrf.mxu0
        %3148 = vdwg.mxu0
        %v3149 = vmax.f32 %v2895, 0.0
        %v3150 = vmax.f32 %v2898, 0.0
        %v3151 = vmax.f32 %v2903, 0.0
        %v3152 = vmax.f32 %v2906, 0.0
        %v3153 = vmax.f32 %v2911, 0.0
        %v3154 = vmax.f32 %v2914, 0.0
        %v3155 = vmax.f32 %v2919, 0.0
        %v3156 = vmax.f32 %v2922, 0.0
        %v3157 = vmax.f32 %v2927, 0.0
        %v3158 = vmax.f32 %v2930, 0.0
        %v3159 = vmax.f32 %v2935, 0.0
        %v3160 = vmax.f32 %v2938, 0.0
        %v3161 = vmax.f32 %v2943, 0.0
        %v3162 = vmax.f32 %v2946, 0.0
        %v3163 = vmax.f32 %v2951, 0.0
        %v3164 = vmax.f32 %v2954, 0.0
        %v3165 = vmax.f32 %v2959, 0.0
        %v3166 = vmax.f32 %v2962, 0.0
        %v3167 = vmax.f32 %v2967, 0.0
        %v3168 = vmax.f32 %v2970, 0.0
        %v3169 = vmax.f32 %v2975, 0.0
        %v3170 = vmax.f32 %v2978, 0.0
        %v3171 = vmax.f32 %v2983, 0.0
        %v3172 = vmax.f32 %v2986, 0.0
        %v3173 = vmax.f32 %v2991, 0.0
        %v3174 = vmax.f32 %v2994, 0.0
        %v3175 = vmax.f32 %v2999, 0.0
        %v3176 = vmax.f32 %v3002, 0.0
        %v3177 = vmax.f32 %v3007, 0.0
        %v3178 = vmax.f32 %v3010, 0.0
        %v3179 = vmax.f32 %v3015, 0.0
        %v3180 = vmax.f32 %v3018, 0.0
        %v3181 = vmax.f32 %v3023, 0.0
        %v3182 = vmax.f32 %v3026, 0.0
        %v3183 = vmax.f32 %v3031, 0.0
        %v3184 = vmax.f32 %v3034, 0.0
        %v3185 = vmax.f32 %v3039, 0.0
        %v3186 = vmax.f32 %v3042, 0.0
        %v3187 = vmax.f32 %v3047, 0.0
        %v3188 = vmax.f32 %v3050, 0.0
        %v3189 = vmax.f32 %v3055, 0.0
        %v3190 = vmax.f32 %v3058, 0.0
        %v3191 = vmax.f32 %v3063, 0.0
        %v3192 = vmax.f32 %v3066, 0.0
        %v3193 = vmax.f32 %v3071, 0.0
        %v3194 = vmax.f32 %v3074, 0.0
        %v3195 = vmax.f32 %v3079, 0.0
        %v3196 = vmax.f32 %v3082, 0.0
        %v3197 = vmax.f32 %v3087, 0.0
        %v3198 = vmax.f32 %v3090, 0.0
        %v3199 = vmax.f32 %v3095, 0.0
        %v3200 = vmax.f32 %v3098, 0.0
        %v3201 = vmax.f32 %v3103, 0.0
        %v3202 = vmax.f32 %v3106, 0.0
        %v3203 = vmax.f32 %v3111, 0.0
        %v3204 = vmax.f32 %v3114, 0.0
        %v3205 = vmax.f32 %v3119, 0.0
        %v3206 = vmax.f32 %v3122, 0.0
        %v3207 = vmax.f32 %v3127, 0.0
        %v3208 = vmax.f32 %v3130, 0.0
        %v3209 = vmax.f32 %v3135, 0.0
        %v3210 = vmax.f32 %v3138, 0.0
        %v3211 = vmax.f32 %v3143, 0.0
        %v3212 = vmax.f32 %v3146, 0.0
        %v3213 = vpack.c.bf16 %v3150, %v3149
        %v3214 = vpack.c.bf16 %v3152, %v3151
        %v3215 = vpack.c.bf16 %v3154, %v3153
        %v3216 = vpack.c.bf16 %v3156, %v3155
        %v3217 = vpack.c.bf16 %v3158, %v3157
        %v3218 = vpack.c.bf16 %v3160, %v3159
        %v3219 = vpack.c.bf16 %v3162, %v3161
        %v3220 = vpack.c.bf16 %v3164, %v3163
        %v3221 = vpack.c.bf16 %v3166, %v3165
        %v3222 = vpack.c.bf16 %v3168, %v3167
        %v3223 = vpack.c.bf16 %v3170, %v3169
        %v3224 = vpack.c.bf16 %v3172, %v3171
        %v3225 = vpack.c.bf16 %v3174, %v3173
        %v3226 = vpack.c.bf16 %v3176, %v3175
        %v3227 = vpack.c.bf16 %v3178, %v3177
        %v3228 = vpack.c.bf16 %v3180, %v3179
        %v3229 = vpack.c.bf16 %v3182, %v3181
        %v3230 = vpack.c.bf16 %v3184, %v3183
        %v3231 = vpack.c.bf16 %v3186, %v3185
        %v3232 = vpack.c.bf16 %v3188, %v3187
        %v3233 = vpack.c.bf16 %v3190, %v3189
        %v3234 = vpack.c.bf16 %v3192, %v3191
        %v3235 = vpack.c.bf16 %v3194, %v3193
        %v3236 = vpack.c.bf16 %v3196, %v3195
        %v3237 = vpack.c.bf16 %v3198, %v3197
        %v3238 = vpack.c.bf16 %v3200, %v3199
        %v3239 = vpack.c.bf16 %v3202, %v3201
        %v3240 = vpack.c.bf16 %v3204, %v3203
        %v3241 = vpack.c.bf16 %v3206, %v3205
        %v3242 = vpack.c.bf16 %v3208, %v3207
        %v3243 = vpack.c.bf16 %v3210, %v3209
        %v3244 = vpack.c.bf16 %v3212, %v3211
        %v3245 = vld [vmem:[%s5] sm:$0xff]
        %v3246 = vld [vmem:[%s5 + $0x8] sm:$0xff]
        %v3247 = vld [vmem:[%s6] sm:$0xff]
        %3249 = vset.pattern.permute.xlu0 0
        %3250 = vperm.xlu0 %3249, %v3247
        %v3251 = vpop.permute.xlu0 %3250
        %v3255 = vunpack.c.l.b16 %v3245
        %v3256 = vunpack.c.h.b16 %v3245
        %v3257 = vunpack.c.l.b16 %v3246
        %v3258 = vunpack.c.h.b16 %v3246
        %v3259 = vpack.c.b16 %v3255, %v3255
        %v3260 = vpack.c.b16 %v3256, %v3256
        %v3261 = vpack.c.b16 %v3257, %v3257
        %v3262 = vpack.c.b16 %v3258, %v3258
        %3267 = vmatprep.subr.bf16.mxu0 0
        %3268 = vmatpush1.bf16.msra.mxu0 %v3220
        %3269 = vmatprep.subr.bf16.mxu0 0
        %3270 = vmatpush1.bf16.msra.mxu0 %v3219
        %3271 = vmatprep.subr.bf16.mxu0 0
        %3272 = vmatpush1.bf16.msra.mxu0 %v3218
        %3273 = vmatprep.subr.bf16.mxu0 0
        %3274 = vmatpush1.bf16.msra.mxu0 %v3217
        %3275 = vmatprep.subr.bf16.mxu0 0
        %3276 = vmatpush1.bf16.msra.mxu0 %v3216
        %3277 = vmatprep.subr.bf16.mxu0 0
        %3278 = vmatpush1.bf16.msra.mxu0 %v3215
        %3279 = vmatprep.subr.bf16.mxu0 0
        %3280 = vmatpush1.bf16.msra.mxu0 %v3214
        %3281 = vmatprep.subr.bf16.mxu0 0
        %3282 = vmatpush1.bf16.msra.mxu0 %v3213
        %3283 = vmatprep.subr.bf16.mxu0 0
        %3284 = vmatpush2.bf16.msra.mxu0 %v3228
        %3285 = vmatprep.subr.bf16.mxu0 0
        %3286 = vmatpush2.bf16.msra.mxu0 %v3227
        %3287 = vmatprep.subr.bf16.mxu0 0
        %3288 = vmatpush2.bf16.msra.mxu0 %v3226
        %3289 = vmatprep.subr.bf16.mxu0 0
        %3290 = vmatpush2.bf16.msra.mxu0 %v3225
        %3291 = vmatprep.subr.bf16.mxu0 0
        %3292 = vmatpush2.bf16.msra.mxu0 %v3224
        %3293 = vmatprep.subr.bf16.mxu0 0
        %3294 = vmatpush2.bf16.msra.mxu0 %v3223
        %3295 = vmatprep.subr.bf16.mxu0 0
        %3296 = vmatpush2.bf16.msra.mxu0 %v3222
        %3297 = vmatprep.subr.bf16.mxu0 0
        %3298 = vmatpush2.bf16.msra.mxu0 %v3221
        %3299 = vmatprep.mubr.bf16.mxu0 %v3260
        %3300 = vmatmul.mubr.bf16.gmra.mxu0 %v3259
        %v3301 = vpop.f32.mrf.mxu0
        %v3302 = vadd.f32 %v3251, %v3301
        %v3303 = vpop.f32.mrf.mxu0
        %v3304 = vpop.f32.mrf.mxu0
        %v3305 = vpop.f32.mrf.mxu0
        %3306 = vdwg.mxu0
        %3307 = vmatprep.subr.bf16.mxu0 0
        %3308 = vmatpush1.bf16.msra.mxu0 %v3236
        %3309 = vmatprep.subr.bf16.mxu0 0
        %3310 = vmatpush1.bf16.msra.mxu0 %v3235
        %3311 = vmatprep.subr.bf16.mxu0 0
        %3312 = vmatpush1.bf16.msra.mxu0 %v3234
        %3313 = vmatprep.subr.bf16.mxu0 0
        %3314 = vmatpush1.bf16.msra.mxu0 %v3233
        %3315 = vmatprep.subr.bf16.mxu0 0
        %3316 = vmatpush1.bf16.msra.mxu0 %v3232
        %3317 = vmatprep.subr.bf16.mxu0 0
        %3318 = vmatpush1.bf16.msra.mxu0 %v3231
        %3319 = vmatprep.subr.bf16.mxu0 0
        %3320 = vmatpush1.bf16.msra.mxu0 %v3230
        %3321 = vmatprep.subr.bf16.mxu0 0
        %3322 = vmatpush1.bf16.msra.mxu0 %v3229
        %3323 = vmatprep.subr.bf16.mxu0 0
        %3324 = vmatpush2.bf16.msra.mxu0 %v3244
        %3325 = vmatprep.subr.bf16.mxu0 0
        %3326 = vmatpush2.bf16.msra.mxu0 %v3243
        %3327 = vmatprep.subr.bf16.mxu0 0
        %3328 = vmatpush2.bf16.msra.mxu0 %v3242
        %3329 = vmatprep.subr.bf16.mxu0 0
        %3330 = vmatpush2.bf16.msra.mxu0 %v3241
        %3331 = vmatprep.subr.bf16.mxu0 0
        %3332 = vmatpush2.bf16.msra.mxu0 %v3240
        %3333 = vmatprep.subr.bf16.mxu0 0
        %3334 = vmatpush2.bf16.msra.mxu0 %v3239
        %3335 = vmatprep.subr.bf16.mxu0 0
        %3336 = vmatpush2.bf16.msra.mxu0 %v3238
        %3337 = vmatprep.subr.bf16.mxu0 0
        %3338 = vmatpush2.bf16.msra.mxu0 %v3237
        %3339 = vmatprep.mubr.bf16.mxu0 %v3262
        %3340 = vmatmul.mubr.bf16.gmra.mxu0 %v3261
        %v3341 = vpop.f32.mrf.mxu0
        %v3342 = vadd.f32 %v3302, %v3341
        %v3343 = vpop.f32.mrf.mxu0
        %v3344 = vpop.f32.mrf.mxu0
        %v3345 = vpop.f32.mrf.mxu0
        %3346 = vdwg.mxu0
        %3347 = vst [vmem:[%s328] sm:$0xff] %v3342
        %s3348 = sand.u32 %s201, 1
        %s3349 = scalar_lea.sflag [#allocation4], %s3348
        %s3350 = sand.u32 %s201, 1
        %s3351 = smul.addr %s3350, 8
        %s3352 = scalar_lea.vmem [#allocation7], %s3351
        // Predicated region
        $region57: #{tpu_custom_call.1} parent=47 // pred_check
          %p3353 = pneg %p211
        $region58: #{tpu_custom_call.1} parent=47 // pred_check_branch
          %3355 = sbr.rel (%p3353) target = $region60
        $region59: #{tpu_custom_call.1} parent=47 // pred_region
          %s3357 = ssub.s32 128, 128
          %3358 = vsyncadd %s3349, %s3357
          %s3359 = sadd.s32 %s30, %s29
          %s3360 = smul.addr %s3359, 128
          %s3361 = scalar_lea.hbm %s7, %s3360
          %s3363 = sshll.u32 %s3352, 4
          %s3364 = int_to_ptr.vmem [resolvable:$true] %s3363
          %3366 = dma.vmem_to_hbm [thread:$0]  %s3364, 128, %s3361, %s3349
        $region60: #{tpu_custom_call.1} parent=47 // pred_fallthru
          _
      $region48: #{tpu_custom_call.1} parent=5 // pred_fallthru
        _
      %p3367 = scmp.le.s32.totalorder 2, %s20
      // Predicated region
      $region61: #{tpu_custom_call.1} parent=5 // pred_check
        %p3368 = pneg %p3367
      $region62: #{tpu_custom_call.1} parent=5 // pred_check_branch
        %3370 = sbr.rel (%p3368) target = $region64
      $region63: #{tpu_custom_call.1} parent=5 // pred_region
        %s3371 = ssub.s32 %s20, 2
        // Predicated region
        $region65: #{tpu_custom_call.1} parent=63 // pred_check
          %p3372 = pneg %p217
        $region66: #{tpu_custom_call.1} parent=63 // pred_check_branch
          %3374 = sbr.rel (%p3372) target = $region68
        $region67: #{tpu_custom_call.1} parent=63 // pred_region
          %s3375 = sand.u32 %s202, 1
          %s3376 = scalar_lea.sflag [#allocation4], %s3375
          %s3377 = sand.u32 %s202, 1
          %s3378 = smul.addr %s3377, 8
          %s3379 = scalar_lea.vmem [#allocation7], %s3378
          %3380 = dma.done %s3376, 128
        $region68: #{tpu_custom_call.1} parent=63 // pred_fallthru
          _
      $region64: #{tpu_custom_call.1} parent=5 // pred_fallthru
        _
    $region6: #{tpu_custom_call.1} parent=1 // loop_footer
      %s24 = sadd.s32 1, %s20
    $region7: #{tpu_custom_call.1} parent=1 // loop_footer_branch
      %19 = sbr.rel target = $region3
    $region8: #{tpu_custom_call.1} parent=1 // loop_exit
      _
    %3381 = vsyncpa [#allocation3], 1
    %s3382 = scalar_lea.sflag [#allocation3], 1
    %3383 = vsyncpa %s3382, 1
    %3384 = vsyncpa [#allocation6], 1
    %3385 = vsyncpa [#allocation4], 1
    %s3386 = scalar_lea.sflag [#allocation4], 1
    %3387 = vsyncpa %s3386, 1

// kernel: tpu_custom_call.1
$region0: #{tpu_custom_call.1}
  #allocation0 [shape = 'u32[]', space=smem, size = 0x4, offset = 0x4, fixed_abs, tag = 'smem constant byte address 0x4 - core index']
  #allocation1 [shape = 'u32[144,128]{1,0:T(1,128)}', space=vmem, size = 0x12000, scoped, tag = 'internal scratch']
  %s0 = inlined_call_operand.hbm [shape: bf16[2,128,128], index: 0, kind: input, shape index: {}]
  %s1 = inlined_call_operand.hbm [shape: bf16[512,128], index: 1, kind: input, shape index: {}]
  %s2 = inlined_call_operand.vmem [shape: f32[512,1], index: 2, kind: input, shape index: {}]
  %s3 = inlined_call_operand.vmem [shape: bf16[512,512], index: 3, kind: input, shape index: {}]
  %s4 = inlined_call_operand.vmem [shape: f32[512,1], index: 4, kind: input, shape index: {}]
  %s5 = inlined_call_operand.vmem [shape: bf16[8,512], index: 5, kind: input, shape index: {}]
  %s6 = inlined_call_operand.vmem [shape: f32[8,1], index: 6, kind: input, shape index: {}]
  %s7 = inlined_call_operand.hbm [shape: f32[2,8,128], index: 7, kind: output, shape index: {}]
  %s8 = sld [smem:[#allocation0]]
  $region69: #{tpu_custom_call.1} parent=0
    _
  %s10 = ssub.s32 1, %s8
  %s11 = scalar_select 0, %s10, %s8
  $region1: #{tpu_custom_call.1} parent=0
    #allocation2 [shape = 'u8[65536]{0}', space=vmem, size = 0x10000, scoped, tag = 'input window, operand 0']
    #allocation3 [shape = 's32[2]{0}', space=sflag, size = 0x8, scoped, tag = 'scoped memory for tpu_custom_call.1']
    #allocation4 [shape = 's32[2]{0}', space=sflag, size = 0x8, scoped, tag = 'scoped memory for tpu_custom_call.1']
    #allocation5 [shape = 'u8[131072]{0}', space=vmem, size = 0x20000, scoped, tag = 'input window, operand 1, single buffered']
    #allocation6 [shape = 's32[1]{0}', space=sflag, size = 0x4, scoped, tag = 'scoped memory for tpu_custom_call.1']
    #allocation7 [shape = 'u8[8192]{0}', space=vmem, size = 0x2000, scoped, tag = 'output window, operand 0']
    %12 = vsyncpa [#allocation3], 0
    %s13 = scalar_lea.sflag [#allocation3], 1
    %14 = vsyncpa %s13, 0
    %15 = vsyncpa [#allocation6], 0
    %16 = vsyncpa [#allocation4], 0
    %s17 = scalar_lea.sflag [#allocation4], 1
    %18 = vsyncpa %s17, 0
    loop: start=0, step=1, limit=4
    $region2: #{tpu_custom_call.1} parent=1 // loop_pre_header
      _
    $region3: #{tpu_custom_call.1} parent=1 // loop_header
      %s20 = sphi 0, %s24
      %p21 = scmp.ge.s32.totalorder %s20, 4
      %s27 = sphi 0, %s39
      %s28 = sphi 0, %s35
      %s29 = sphi 0, %s27
      %s30 = sphi 0, %s28
      %s31 = sphi 0, %s29
      %s32 = sphi 0, %s30
      %s44 = sphi 0, %s46
      %s47 = sphi 0, %s44
      %s48 = sphi 0, %s47
      %s64 = sphi 0, %s48
      %s68 = sphi 0, %s68
      %s70 = sphi 0, %s68
      %s71 = sphi 0, %s70
      %s85 = sphi 0, %s71
      %s89 = sphi 0, %s89
      %s91 = sphi 0, %s89
      %s92 = sphi 0, %s91
      %s106 = sphi 0, %s92
      %s110 = sphi 0, %s110
      %s112 = sphi 0, %s110
      %s113 = sphi 0, %s112
      %s127 = sphi 0, %s113
      %s131 = sphi 0, %s131
      %s133 = sphi 0, %s131
      %s134 = sphi 0, %s133
      %s148 = sphi 0, %s134
      %s152 = sphi 0, %s152
      %s154 = sphi 0, %s152
      %s155 = sphi 0, %s154
      %s169 = sphi 0, %s155
      %s173 = sphi 0, %s173
      %s175 = sphi 0, %s173
      %s176 = sphi 0, %s175
      %s190 = sphi 0, %s176
      %s198 = sphi 0, %s200
      %s201 = sphi 0, %s198
      %s202 = sphi 0, %s201
      %s218 = sphi 0, %s202
    $region4: #{tpu_custom_call.1} parent=1 // loop_header_branch
      %23 = sbr.rel (%p21) target = $region8
    $region5: #{tpu_custom_call.1} parent=1 // loop_body
      %s25 = ssub.s32 %s20, 1
      %s26 = ssub.s32 %s20, 2
      %s33 = sadd.s32 1, %s28
      %p34 = scmp.ge.s32.totalorder %s33, 1
      %s35 = scalar_select %p34, 0, %s33
      %s36 = sadd.s32 1, %s27
      %s37 = scalar_select %p34, %s36, %s27
      %p38 = scmp.ge.s32.totalorder %s37, 2
      %s39 = scalar_select %p38, 0, %s37
      %s40 = ssub.s32 %s27, %s39
      %s41 = ssub.s32 %s28, %s35
      %s42 = sor.u32 %s40, %s41
      %p43 = scmp.eq.s32.totalorder %s42, 0
      %s45 = sadd.s32 %s44, 1
      %s46 = scalar_select %p43, %s44, %s45
      %p49 = pneg %p43
      %p50 = scmp.eq.s32.totalorder %s20, 1
      %p51 = por %p49, %p50
      %p52 = scmp.ne.s32.totalorder %s44, %s47
      %p53 = scmp.eq.s32.totalorder %s20, 0
      %p54 = por %p52, %p53
      %p55 = scmp.ne.s32.totalorder %s44, %s47
      %p56 = scmp.eq.s32.totalorder %s25, 1
      %p57 = por %p55, %p56
      %p58 = scmp.ne.s32.totalorder %s47, %s48
      %p59 = scmp.eq.s32.totalorder %s25, 0
      %p60 = por %p58, %p59
      %p61 = scmp.ne.s32.totalorder %s47, %s48
      %p62 = scmp.eq.s32.totalorder %s26, 1
      %p63 = por %p61, %p62
      %p65 = scmp.ne.s32.totalorder %s48, %s64
      %p66 = scmp.eq.s32.totalorder %s26, 0
      %p67 = por %p65, %p66
      %s69 = sadd.s32 %s68, 1
      %p72 = scmp.eq.s32.totalorder %s20, 1
      %p73 = scmp.ne.s32.totalorder %s68, %s70
      %p74 = scmp.eq.s32.totalorder %s20, 0
      %p75 = por %p73, %p74
      %p76 = scmp.ne.s32.totalorder %s68, %s70
      %p77 = scmp.eq.s32.totalorder %s25, 1
      %p78 = por %p76, %p77
      %p79 = scmp.ne.s32.totalorder %s70, %s71
      %p80 = scmp.eq.s32.totalorder %s25, 0
      %p81 = por %p79, %p80
      %p82 = scmp.ne.s32.totalorder %s70, %s71
      %p83 = scmp.eq.s32.totalorder %s26, 1
      %p84 = por %p82, %p83
      %p86 = scmp.ne.s32.totalorder %s71, %s85
      %p87 = scmp.eq.s32.totalorder %s26, 0
      %p88 = por %p86, %p87
      %s90 = sadd.s32 %s89, 1
      %p93 = scmp.eq.s32.totalorder %s20, 1
      %p94 = scmp.ne.s32.totalorder %s89, %s91
      %p95 = scmp.eq.s32.totalorder %s20, 0
      %p96 = por %p94, %p95
      %p97 = scmp.ne.s32.totalorder %s89, %s91
      %p98 = scmp.eq.s32.totalorder %s25, 1
      %p99 = por %p97, %p98
      %p100 = scmp.ne.s32.totalorder %s91, %s92
      %p101 = scmp.eq.s32.totalorder %s25, 0
      %p102 = por %p100, %p101
      %p103 = scmp.ne.s32.totalorder %s91, %s92
      %p104 = scmp.eq.s32.totalorder %s26, 1
      %p105 = por %p103, %p104
      %p107 = scmp.ne.s32.totalorder %s92, %s106
      %p108 = scmp.eq.s32.totalorder %s26, 0
      %p109 = por %p107, %p108
      %s111 = sadd.s32 %s110, 1
      %p114 = scmp.eq.s32.totalorder %s20, 1
      %p115 = scmp.ne.s32.totalorder %s110, %s112
      %p116 = scmp.eq.s32.totalorder %s20, 0
      %p117 = por %p115, %p116
      %p118 = scmp.ne.s32.totalorder %s110, %s112
      %p119 = scmp.eq.s32.totalorder %s25, 1
      %p120 = por %p118, %p119
      %p121 = scmp.ne.s32.totalorder %s112, %s113
      %p122 = scmp.eq.s32.totalorder %s25, 0
      %p123 = por %p121, %p122
      %p124 = scmp.ne.s32.totalorder %s112, %s113
      %p125 = scmp.eq.s32.totalorder %s26, 1
      %p126 = por %p124, %p125
      %p128 = scmp.ne.s32.totalorder %s113, %s127
      %p129 = scmp.eq.s32.totalorder %s26, 0
      %p130 = por %p128, %p129
      %s132 = sadd.s32 %s131, 1
      %p135 = scmp.eq.s32.totalorder %s20, 1
      %p136 = scmp.ne.s32.totalorder %s131, %s133
      %p137 = scmp.eq.s32.totalorder %s20, 0
      %p138 = por %p136, %p137
      %p139 = scmp.ne.s32.totalorder %s131, %s133
      %p140 = scmp.eq.s32.totalorder %s25, 1
      %p141 = por %p139, %p140
      %p142 = scmp.ne.s32.totalorder %s133, %s134
      %p143 = scmp.eq.s32.totalorder %s25, 0
      %p144 = por %p142, %p143
      %p145 = scmp.ne.s32.totalorder %s133, %s134
      %p146 = scmp.eq.s32.totalorder %s26, 1
      %p147 = por %p145, %p146
      %p149 = scmp.ne.s32.totalorder %s134, %s148
      %p150 = scmp.eq.s32.totalorder %s26, 0
      %p151 = por %p149, %p150
      %s153 = sadd.s32 %s152, 1
      %p156 = scmp.eq.s32.totalorder %s20, 1
      %p157 = scmp.ne.s32.totalorder %s152, %s154
      %p158 = scmp.eq.s32.totalorder %s20, 0
      %p159 = por %p157, %p158
      %p160 = scmp.ne.s32.totalorder %s152, %s154
      %p161 = scmp.eq.s32.totalorder %s25, 1
      %p162 = por %p160, %p161
      %p163 = scmp.ne.s32.totalorder %s154, %s155
      %p164 = scmp.eq.s32.totalorder %s25, 0
      %p165 = por %p163, %p164
      %p166 = scmp.ne.s32.totalorder %s154, %s155
      %p167 = scmp.eq.s32.totalorder %s26, 1
      %p168 = por %p166, %p167
      %p170 = scmp.ne.s32.totalorder %s155, %s169
      %p171 = scmp.eq.s32.totalorder %s26, 0
      %p172 = por %p170, %p171
      %s174 = sadd.s32 %s173, 1
      %p177 = scmp.eq.s32.totalorder %s20, 1
      %p178 = scmp.ne.s32.totalorder %s173, %s175
      %p179 = scmp.eq.s32.totalorder %s20, 0
      %p180 = por %p178, %p179
      %p181 = scmp.ne.s32.totalorder %s173, %s175
      %p182 = scmp.eq.s32.totalorder %s25, 1
      %p183 = por %p181, %p182
      %p184 = scmp.ne.s32.totalorder %s175, %s176
      %p185 = scmp.eq.s32.totalorder %s25, 0
      %p186 = por %p184, %p185
      %p187 = scmp.ne.s32.totalorder %s175, %s176
      %p188 = scmp.eq.s32.totalorder %s26, 1
      %p189 = por %p187, %p188
      %p191 = scmp.ne.s32.totalorder %s176, %s190
      %p192 = scmp.eq.s32.totalorder %s26, 0
      %p193 = por %p191, %p192
      %s194 = ssub.s32 %s27, %s39
      %s195 = ssub.s32 %s28, %s35
      %s196 = sor.u32 %s194, %s195
      %p197 = scmp.eq.s32.totalorder %s196, 0
      %s199 = sadd.s32 %s198, 1
      %s200 = scalar_select %p197, %s198, %s199
      %p203 = pneg %p197
      %p204 = scmp.eq.s32.totalorder %s20, 1
      %p205 = por %p203, %p204
      %p206 = scmp.ne.s32.totalorder %s198, %s201
      %p207 = scmp.eq.s32.totalorder %s20, 0
      %p208 = por %p206, %p207
      %p209 = scmp.ne.s32.totalorder %s198, %s201
      %p210 = scmp.eq.s32.totalorder %s25, 1
      %p211 = por %p209, %p210
      %p212 = scmp.ne.s32.totalorder %s201, %s202
      %p213 = scmp.eq.s32.totalorder %s25, 0
      %p214 = por %p212, %p213
      %p215 = scmp.ne.s32.totalorder %s201, %s202
      %p216 = scmp.eq.s32.totalorder %s26, 1
      %p217 = por %p215, %p216
      %p219 = scmp.ne.s32.totalorder %s202, %s218
      %p220 = scmp.eq.s32.totalorder %s26, 0
      %p221 = por %p219, %p220
      %p222 = scmp.le.s32.totalorder 1, %s20
      %p223 = scmp.lt.s32.totalorder %s20, 3
      %p224 = pnand %p222, %p223
      %p225 = pneg %p224
      // Predicated region
      $region9: #{tpu_custom_call.1} parent=5 // pred_check
        _
      $region10: #{tpu_custom_call.1} parent=5 // pred_check_branch
        %227 = sbr.rel (%p224) target = $region12
      $region11: #{tpu_custom_call.1} parent=5 // pred_region
        %s228 = ssub.s32 %s20, 1
        // Predicated region
        $region13: #{tpu_custom_call.1} parent=11 // pred_check
          %p229 = pneg %p81
        $region14: #{tpu_custom_call.1} parent=11 // pred_check_branch
          %231 = sbr.rel (%p229) target = $region16
        $region15: #{tpu_custom_call.1} parent=11 // pred_region
          %s233 = ssub.s32 4096, 4096
          %234 = vsyncadd [#allocation6], %s233
          %s235 = sshll.u32 [#allocation5], 4
          %s236 = int_to_ptr.vmem [resolvable:$true] %s235
          %241 = dma.hbm_to_vmem [thread:$0]  %s1, 4096, %s236, [#allocation6], 64, 64, 4
        $region16: #{tpu_custom_call.1} parent=11 // pred_fallthru
          _
        // Predicated region
        $region17: #{tpu_custom_call.1} parent=11 // pred_check
          %p242 = pneg %p102
        $region18: #{tpu_custom_call.1} parent=11 // pred_check_branch
          %244 = sbr.rel (%p242) target = $region20
        $region19: #{tpu_custom_call.1} parent=11 // pred_region
          _
        $region20: #{tpu_custom_call.1} parent=11 // pred_fallthru
          _
        // Predicated region
        $region21: #{tpu_custom_call.1} parent=11 // pred_check
          %p245 = pneg %p123
        $region22: #{tpu_custom_call.1} parent=11 // pred_check_branch
          %247 = sbr.rel (%p245) target = $region24
        $region23: #{tpu_custom_call.1} parent=11 // pred_region
          _
        $region24: #{tpu_custom_call.1} parent=11 // pred_fallthru
          _
        // Predicated region
        $region25: #{tpu_custom_call.1} parent=11 // pred_check
          %p248 = pneg %p144
        $region26: #{tpu_custom_call.1} parent=11 // pred_check_branch
          %250 = sbr.rel (%p248) target = $region28
        $region27: #{tpu_custom_call.1} parent=11 // pred_region
          _
        $region28: #{tpu_custom_call.1} parent=11 // pred_fallthru
          _
        // Predicated region
        $region29: #{tpu_custom_call.1} parent=11 // pred_check
          %p251 = pneg %p165
        $region30: #{tpu_custom_call.1} parent=11 // pred_check_branch
          %253 = sbr.rel (%p251) target = $region32
        $region31: #{tpu_custom_call.1} parent=11 // pred_region
          _
        $region32: #{tpu_custom_call.1} parent=11 // pred_fallthru
          _
        // Predicated region
        $region33: #{tpu_custom_call.1} parent=11 // pred_check
          %p254 = pneg %p186
        $region34: #{tpu_custom_call.1} parent=11 // pred_check_branch
          %256 = sbr.rel (%p254) target = $region36
        $region35: #{tpu_custom_call.1} parent=11 // pred_region
          _
        $region36: #{tpu_custom_call.1} parent=11 // pred_fallthru
          _
      $region12: #{tpu_custom_call.1} parent=5 // pred_fallthru
        _
      %p257 = scmp.lt.s32.totalorder %s20, 2
      // Predicated region
      $region37: #{tpu_custom_call.1} parent=5 // pred_check
        %p258 = pneg %p257
      $region38: #{tpu_custom_call.1} parent=5 // pred_check_branch
        %260 = sbr.rel (%p258) target = $region40
      $region39: #{tpu_custom_call.1} parent=5 // pred_region
        // Predicated region
        $region41: #{tpu_custom_call.1} parent=39 // pred_check
          %p261 = pneg %p54
        $region42: #{tpu_custom_call.1} parent=39 // pred_check_branch
          %263 = sbr.rel (%p261) target = $region44
        $region43: #{tpu_custom_call.1} parent=39 // pred_region
          %s264 = sand.u32 %s44, 1
          %s265 = scalar_lea.sflag [#allocation3], %s264
          %s266 = sand.u32 %s44, 1
          %s267 = smul.addr %s266, 64
          %s268 = scalar_lea.vmem [#allocation2], %s267
          %s270 = ssub.s32 1024, 1024
          %271 = vsyncadd %s265, %s270
          %s272 = smul.addr %s27, 16
          %s273 = sadd.s32 %s28, %s272
          %s274 = smul.addr %s273, 64
          %s275 = scalar_lea.hbm %s0, %s274
          %s276 = sshll.u32 %s268, 4
          %s277 = int_to_ptr.vmem [resolvable:$true] %s276
          %282 = dma.hbm_to_vmem [thread:$0]  %s275, 1024, %s277, %s265, 64, 64, 4
        $region44: #{tpu_custom_call.1} parent=39 // pred_fallthru
          _
      $region40: #{tpu_custom_call.1} parent=5 // pred_fallthru
        _
      %p283 = scmp.le.s32.totalorder 1, %s20
      %p284 = scmp.lt.s32.totalorder %s20, 3
      %p285 = pnand %p283, %p284
      %p286 = pneg %p285
      // Predicated region
      $region45: #{tpu_custom_call.1} parent=5 // pred_check
        _
      $region46: #{tpu_custom_call.1} parent=5 // pred_check_branch
        %288 = sbr.rel (%p285) target = $region48
      $region47: #{tpu_custom_call.1} parent=5 // pred_region
        %s289 = ssub.s32 %s20, 1
        %s290 = sand.u32 %s47, 1
        %s291 = scalar_lea.sflag [#allocation3], %s290
        %s292 = sand.u32 %s47, 1
        %s293 = smul.addr %s292, 64
        %s294 = scalar_lea.vmem [#allocation2], %s293
        // Predicated region
        $region49: #{tpu_custom_call.1} parent=47 // pred_check
          %p295 = pneg %p60
        $region50: #{tpu_custom_call.1} parent=47 // pred_check_branch
          %297 = sbr.rel (%p295) target = $region52
        $region51: #{tpu_custom_call.1} parent=47 // pred_region
          %298 = dma.done %s291, 1024
        $region52: #{tpu_custom_call.1} parent=47 // pred_fallthru
          _
        // Predicated region
        $region53: #{tpu_custom_call.1} parent=47 // pred_check
          %p299 = pneg %p81
        $region54: #{tpu_custom_call.1} parent=47 // pred_check_branch
          %301 = sbr.rel (%p299) target = $region56
        $region55: #{tpu_custom_call.1} parent=47 // pred_region
          %302 = dma.done [#allocation6], 4096
        $region56: #{tpu_custom_call.1} parent=47 // pred_fallthru
          _
        %s303 = sand.u32 %s47, 1
        %s304 = scalar_lea.sflag [#allocation3], %s303
        %s305 = sand.u32 %s47, 1
        %s306 = smul.addr %s305, 64
        %s307 = scalar_lea.vmem [#allocation2], %s306
        %p308 = pneg %p60
        %p309 = pneg %p57
        %p310 = pneg %p81
        %p311 = pneg %p78
        %p312 = pneg %p102
        %p313 = pneg %p99
        %p314 = pneg %p123
        %p315 = pneg %p120
        %p316 = pneg %p144
        %p317 = pneg %p141
        %p318 = pneg %p165
        %p319 = pneg %p162
        %p320 = pneg %p186
        %p321 = pneg %p183
        %p322 = pneg %p214
        %p323 = pneg %p211
        %s324 = sand.u32 %s201, 1
        %s325 = scalar_lea.sflag [#allocation4], %s324
        %s326 = sand.u32 %s201, 1
        %s327 = smul.addr %s326, 8
        %s328 = scalar_lea.vmem [#allocation7], %s327
        %v330 = vld [vmem:[%s294] sm:$0xf]
        %v331 = vld [vmem:[%s294 + $0x4] sm:$0xf]
        %v332 = vld [vmem:[%s294 + $0x8] sm:$0xf]
        %v333 = vld [vmem:[%s294 + $0xc] sm:$0xf]
        %v334 = vld [vmem:[%s294 + $0x10] sm:$0xf]
        %v335 = vld [vmem:[%s294 + $0x14] sm:$0xf]
        %v336 = vld [vmem:[%s294 + $0x18] sm:$0xf]
        %v337 = vld [vmem:[%s294 + $0x1c] sm:$0xf]
        %v338 = vld [vmem:[%s294 + $0x20] sm:$0xf]
        %v339 = vld [vmem:[%s294 + $0x24] sm:$0xf]
        %v340 = vld [vmem:[%s294 + $0x28] sm:$0xf]
        %v341 = vld [vmem:[%s294 + $0x2c] sm:$0xf]
        %v342 = vld [vmem:[%s294 + $0x30] sm:$0xf]
        %v343 = vld [vmem:[%s294 + $0x34] sm:$0xf]
        %v344 = vld [vmem:[%s294 + $0x38] sm:$0xf]
        %v345 = vld [vmem:[%s294 + $0x3c] sm:$0xf]
        %v346 = vld [vmem:[#allocation5] sm:$0xf]
        %v347 = vld [vmem:[#allocation5 + $0x4] sm:$0xf]
        %v348 = vld [vmem:[#allocation5 + $0x8] sm:$0xf]
        %v349 = vld [vmem:[#allocation5 + $0xc] sm:$0xf]
        %v350 = vld [vmem:[#allocation5 + $0x10] sm:$0xf]
        %v351 = vld [vmem:[#allocation5 + $0x14] sm:$0xf]
        %v352 = vld [vmem:[#allocation5 + $0x18] sm:$0xf]
        %v353 = vld [vmem:[#allocation5 + $0x1c] sm:$0xf]
        %v354 = vld [vmem:[#allocation5 + $0x20] sm:$0xf]
        %v355 = vld [vmem:[#allocation5 + $0x24] sm:$0xf]
        %v356 = vld [vmem:[#allocation5 + $0x28] sm:$0xf]
        %v357 = vld [vmem:[#allocation5 + $0x2c] sm:$0xf]
        %v358 = vld [vmem:[#allocation5 + $0x30] sm:$0xf]
        %v359 = vld [vmem:[#allocation5 + $0x34] sm:$0xf]
        %v360 = vld [vmem:[#allocation5 + $0x38] sm:$0xf]
        %v361 = vld [vmem:[#allocation5 + $0x3c] sm:$0xf]
        %v362 = vld [vmem:[#allocation5 + $0x40] sm:$0xf]
        %v363 = vld [vmem:[#allocation5 + $0x44] sm:$0xf]
        %v364 = vld [vmem:[#allocation5 + $0x48] sm:$0xf]
        %v365 = vld [vmem:[#allocation5 + $0x4c] sm:$0xf]
        %v366 = vld [vmem:[#allocation5 + $0x50] sm:$0xf]
        %v367 = vld [vmem:[#allocation5 + $0x54] sm:$0xf]
        %v368 = vld [vmem:[#allocation5 + $0x58] sm:$0xf]
        %v369 = vld [vmem:[#allocation5 + $0x5c] sm:$0xf]
        %v370 = vld [vmem:[#allocation5 + $0x60] sm:$0xf]
        %v371 = vld [vmem:[#allocation5 + $0x64] sm:$0xf]
        %v372 = vld [vmem:[#allocation5 + $0x68] sm:$0xf]
        %v373 = vld [vmem:[#allocation5 + $0x6c] sm:$0xf]
        %v374 = vld [vmem:[#allocation5 + $0x70] sm:$0xf]
        %v375 = vld [vmem:[#allocation5 + $0x74] sm:$0xf]
        %v376 = vld [vmem:[#allocation5 + $0x78] sm:$0xf]
        %v377 = vld [vmem:[#allocation5 + $0x7c] sm:$0xf]
        %v378 = vld [vmem:[#allocation5 + $0x80] sm:$0xf]
        %v379 = vld [vmem:[#allocation5 + $0x84] sm:$0xf]
        %v380 = vld [vmem:[#allocation5 + $0x88] sm:$0xf]
        %v381 = vld [vmem:[#allocation5 + $0x8c] sm:$0xf]
        %v382 = vld [vmem:[#allocation5 + $0x90] sm:$0xf]
        %v383 = vld [vmem:[#allocation5 + $0x94] sm:$0xf]
        %v384 = vld [vmem:[#allocation5 + $0x98] sm:$0xf]
        %v385 = vld [vmem:[#allocation5 + $0x9c] sm:$0xf]
        %v386 = vld [vmem:[#allocation5 + $0xa0] sm:$0xf]
        %v387 = vld [vmem:[#allocation5 + $0xa4] sm:$0xf]
        %v388 = vld [vmem:[#allocation5 + $0xa8] sm:$0xf]
        %v389 = vld [vmem:[#allocation5 + $0xac] sm:$0xf]
        %v390 = vld [vmem:[#allocation5 + $0xb0] sm:$0xf]
        %v391 = vld [vmem:[#allocation5 + $0xb4] sm:$0xf]
        %v392 = vld [vmem:[#allocation5 + $0xb8] sm:$0xf]
        %v393 = vld [vmem:[#allocation5 + $0xbc] sm:$0xf]
        %v394 = vld [vmem:[#allocation5 + $0xc0] sm:$0xf]
        %v395 = vld [vmem:[#allocation5 + $0xc4] sm:$0xf]
        %v396 = vld [vmem:[#allocation5 + $0xc8] sm:$0xf]
        %v397 = vld [vmem:[#allocation5 + $0xcc] sm:$0xf]
        %v398 = vld [vmem:[#allocation5 + $0xd0] sm:$0xf]
        %v399 = vld [vmem:[#allocation5 + $0xd4] sm:$0xf]
        %v400 = vld [vmem:[#allocation5 + $0xd8] sm:$0xf]
        %v401 = vld [vmem:[#allocation5 + $0xdc] sm:$0xf]
        %v402 = vld [vmem:[#allocation5 + $0xe0] sm:$0xf]
        %v403 = vld [vmem:[#allocation5 + $0xe4] sm:$0xf]
        %v404 = vld [vmem:[#allocation5 + $0xe8] sm:$0xf]
        %v405 = vld [vmem:[#allocation5 + $0xec] sm:$0xf]
        %v406 = vld [vmem:[#allocation5 + $0xf0] sm:$0xf]
        %v407 = vld [vmem:[#allocation5 + $0xf4] sm:$0xf]
        %v408 = vld [vmem:[#allocation5 + $0xf8] sm:$0xf]
        %v409 = vld [vmem:[#allocation5 + $0xfc] sm:$0xf]
        %v410 = vld [vmem:[%s2] sm:$0xff]
        %v411 = vld [vmem:[%s2 + $0x8] sm:$0xff]
        %v412 = vld [vmem:[%s2 + $0x10] sm:$0xff]
        %v413 = vld [vmem:[%s2 + $0x18] sm:$0xff]
        %v414 = vld [vmem:[%s2 + $0x20] sm:$0xff]
        %v415 = vld [vmem:[%s2 + $0x28] sm:$0xff]
        %v416 = vld [vmem:[%s2 + $0x30] sm:$0xff]
        %v417 = vld [vmem:[%s2 + $0x38] sm:$0xff]
        %v418 = vld [vmem:[%s2 + $0x40] sm:$0xff]
        %v419 = vld [vmem:[%s2 + $0x48] sm:$0xff]
        %v420 = vld [vmem:[%s2 + $0x50] sm:$0xff]
        %v421 = vld [vmem:[%s2 + $0x58] sm:$0xff]
        %v422 = vld [vmem:[%s2 + $0x60] sm:$0xff]
        %v423 = vld [vmem:[%s2 + $0x68] sm:$0xff]
        %v424 = vld [vmem:[%s2 + $0x70] sm:$0xff]
        %v425 = vld [vmem:[%s2 + $0x78] sm:$0xff]
        %v426 = vld [vmem:[%s2 + $0x80] sm:$0xff]
        %v427 = vld [vmem:[%s2 + $0x88] sm:$0xff]
        %v428 = vld [vmem:[%s2 + $0x90] sm:$0xff]
        %v429 = vld [vmem:[%s2 + $0x98] sm:$0xff]
        %v430 = vld [vmem:[%s2 + $0xa0] sm:$0xff]
        %v431 = vld [vmem:[%s2 + $0xa8] sm:$0xff]
        %v432 = vld [vmem:[%s2 + $0xb0] sm:$0xff]
        %v433 = vld [vmem:[%s2 + $0xb8] sm:$0xff]
        %v434 = vld [vmem:[%s2 + $0xc0] sm:$0xff]
        %v435 = vld [vmem:[%s2 + $0xc8] sm:$0xff]
        %v436 = vld [vmem:[%s2 + $0xd0] sm:$0xff]
        %v437 = vld [vmem:[%s2 + $0xd8] sm:$0xff]
        %v438 = vld [vmem:[%s2 + $0xe0] sm:$0xff]
        %v439 = vld [vmem:[%s2 + $0xe8] sm:$0xff]
        %v440 = vld [vmem:[%s2 + $0xf0] sm:$0xff]
        %v441 = vld [vmem:[%s2 + $0xf8] sm:$0xff]
        %v442 = vld [vmem:[%s2 + $0x100] sm:$0xff]
        %v443 = vld [vmem:[%s2 + $0x108] sm:$0xff]
        %v444 = vld [vmem:[%s2 + $0x110] sm:$0xff]
        %v445 = vld [vmem:[%s2 + $0x118] sm:$0xff]
        %v446 = vld [vmem:[%s2 + $0x120] sm:$0xff]
        %v447 = vld [vmem:[%s2 + $0x128] sm:$0xff]
        %v448 = vld [vmem:[%s2 + $0x130] sm:$0xff]
        %v449 = vld [vmem:[%s2 + $0x138] sm:$0xff]
        %v450 = vld [vmem:[%s2 + $0x140] sm:$0xff]
        %v451 = vld [vmem:[%s2 + $0x148] sm:$0xff]
        %v452 = vld [vmem:[%s2 + $0x150] sm:$0xff]
        %v453 = vld [vmem:[%s2 + $0x158] sm:$0xff]
        %v454 = vld [vmem:[%s2 + $0x160] sm:$0xff]
        %v455 = vld [vmem:[%s2 + $0x168] sm:$0xff]
        %v456 = vld [vmem:[%s2 + $0x170] sm:$0xff]
        %v457 = vld [vmem:[%s2 + $0x178] sm:$0xff]
        %v458 = vld [vmem:[%s2 + $0x180] sm:$0xff]
        %v459 = vld [vmem:[%s2 + $0x188] sm:$0xff]
        %v460 = vld [vmem:[%s2 + $0x190] sm:$0xff]
        %v461 = vld [vmem:[%s2 + $0x198] sm:$0xff]
        %v462 = vld [vmem:[%s2 + $0x1a0] sm:$0xff]
        %v463 = vld [vmem:[%s2 + $0x1a8] sm:$0xff]
        %v464 = vld [vmem:[%s2 + $0x1b0] sm:$0xff]
        %v465 = vld [vmem:[%s2 + $0x1b8] sm:$0xff]
        %v466 = vld [vmem:[%s2 + $0x1c0] sm:$0xff]
        %v467 = vld [vmem:[%s2 + $0x1c8] sm:$0xff]
        %v468 = vld [vmem:[%s2 + $0x1d0] sm:$0xff]
        %v469 = vld [vmem:[%s2 + $0x1d8] sm:$0xff]
        %v470 = vld [vmem:[%s2 + $0x1e0] sm:$0xff]
        %v471 = vld [vmem:[%s2 + $0x1e8] sm:$0xff]
        %v472 = vld [vmem:[%s2 + $0x1f0] sm:$0xff]
        %v473 = vld [vmem:[%s2 + $0x1f8] sm:$0xff]
        %475 = vset.pattern.permute.xlu0 0
        %476 = vperm.xlu0 %475, %v410
        %v477 = vpop.permute.xlu0 %476
        %480 = vset.pattern.permute.xlu0 0
        %481 = vperm.xlu0 %480, %v411
        %v482 = vpop.permute.xlu0 %481
        %485 = vset.pattern.permute.xlu0 0
        %486 = vperm.xlu0 %485, %v412
        %v487 = vpop.permute.xlu0 %486
        %490 = vset.pattern.permute.xlu0 0
        %491 = vperm.xlu0 %490, %v413
        %v492 = vpop.permute.xlu0 %491
        %495 = vset.pattern.permute.xlu0 0
        %496 = vperm.xlu0 %495, %v414
        %v497 = vpop.permute.xlu0 %496
        %500 = vset.pattern.permute.xlu0 0
        %501 = vperm.xlu0 %500, %v415
        %v502 = vpop.permute.xlu0 %501
        %505 = vset.pattern.permute.xlu0 0
        %506 = vperm.xlu0 %505, %v416
        %v507 = vpop.permute.xlu0 %506
        %510 = vset.pattern.permute.xlu0 0
        %511 = vperm.xlu0 %510, %v417
        %v512 = vpop.permute.xlu0 %511
        %515 = vset.pattern.permute.xlu0 0
        %516 = vperm.xlu0 %515, %v418
        %v517 = vpop.permute.xlu0 %516
        %520 = vset.pattern.permute.xlu0 0
        %521 = vperm.xlu0 %520, %v419
        %v522 = vpop.permute.xlu0 %521
        %525 = vset.pattern.permute.xlu0 0
        %526 = vperm.xlu0 %525, %v420
        %v527 = vpop.permute.xlu0 %526
        %530 = vset.pattern.permute.xlu0 0
        %531 = vperm.xlu0 %530, %v421
        %v532 = vpop.permute.xlu0 %531
        %535 = vset.pattern.permute.xlu0 0
        %536 = vperm.xlu0 %535, %v422
        %v537 = vpop.permute.xlu0 %536
        %540 = vset.pattern.permute.xlu0 0
        %541 = vperm.xlu0 %540, %v423
        %v542 = vpop.permute.xlu0 %541
        %545 = vset.pattern.permute.xlu0 0
        %546 = vperm.xlu0 %545, %v424
        %v547 = vpop.permute.xlu0 %546
        %550 = vset.pattern.permute.xlu0 0
        %551 = vperm.xlu0 %550, %v425
        %v552 = vpop.permute.xlu0 %551
        %555 = vset.pattern.permute.xlu0 0
        %556 = vperm.xlu0 %555, %v426
        %v557 = vpop.permute.xlu0 %556
        %560 = vset.pattern.permute.xlu0 0
        %561 = vperm.xlu0 %560, %v427
        %v562 = vpop.permute.xlu0 %561
        %565 = vset.pattern.permute.xlu0 0
        %566 = vperm.xlu0 %565, %v428
        %v567 = vpop.permute.xlu0 %566
        %570 = vset.pattern.permute.xlu0 0
        %571 = vperm.xlu0 %570, %v429
        %v572 = vpop.permute.xlu0 %571
        %575 = vset.pattern.permute.xlu0 0
        %576 = vperm.xlu0 %575, %v430
        %v577 = vpop.permute.xlu0 %576
        %580 = vset.pattern.permute.xlu0 0
        %581 = vperm.xlu0 %580, %v431
        %v582 = vpop.permute.xlu0 %581
        %585 = vset.pattern.permute.xlu0 0
        %586 = vperm.xlu0 %585, %v432
        %v587 = vpop.permute.xlu0 %586
        %590 = vset.pattern.permute.xlu0 0
        %591 = vperm.xlu0 %590, %v433
        %v592 = vpop.permute.xlu0 %591
        %595 = vset.pattern.permute.xlu0 0
        %596 = vperm.xlu0 %595, %v434
        %v597 = vpop.permute.xlu0 %596
        %600 = vset.pattern.permute.xlu0 0
        %601 = vperm.xlu0 %600, %v435
        %v602 = vpop.permute.xlu0 %601
        %605 = vset.pattern.permute.xlu0 0
        %606 = vperm.xlu0 %605, %v436
        %v607 = vpop.permute.xlu0 %606
        %610 = vset.pattern.permute.xlu0 0
        %611 = vperm.xlu0 %610, %v437
        %v612 = vpop.permute.xlu0 %611
        %615 = vset.pattern.permute.xlu0 0
        %616 = vperm.xlu0 %615, %v438
        %v617 = vpop.permute.xlu0 %616
        %620 = vset.pattern.permute.xlu0 0
        %621 = vperm.xlu0 %620, %v439
        %v622 = vpop.permute.xlu0 %621
        %625 = vset.pattern.permute.xlu0 0
        %626 = vperm.xlu0 %625, %v440
        %v627 = vpop.permute.xlu0 %626
        %630 = vset.pattern.permute.xlu0 0
        %631 = vperm.xlu0 %630, %v441
        %v632 = vpop.permute.xlu0 %631
        %635 = vset.pattern.permute.xlu0 0
        %636 = vperm.xlu0 %635, %v442
        %v637 = vpop.permute.xlu0 %636
        %640 = vset.pattern.permute.xlu0 0
        %641 = vperm.xlu0 %640, %v443
        %v642 = vpop.permute.xlu0 %641
        %645 = vset.pattern.permute.xlu0 0
        %646 = vperm.xlu0 %645, %v444
        %v647 = vpop.permute.xlu0 %646
        %650 = vset.pattern.permute.xlu0 0
        %651 = vperm.xlu0 %650, %v445
        %v652 = vpop.permute.xlu0 %651
        %655 = vset.pattern.permute.xlu0 0
        %656 = vperm.xlu0 %655, %v446
        %v657 = vpop.permute.xlu0 %656
        %660 = vset.pattern.permute.xlu0 0
        %661 = vperm.xlu0 %660, %v447
        %v662 = vpop.permute.xlu0 %661
        %665 = vset.pattern.permute.xlu0 0
        %666 = vperm.xlu0 %665, %v448
        %v667 = vpop.permute.xlu0 %666
        %670 = vset.pattern.permute.xlu0 0
        %671 = vperm.xlu0 %670, %v449
        %v672 = vpop.permute.xlu0 %671
        %675 = vset.pattern.permute.xlu0 0
        %676 = vperm.xlu0 %675, %v450
        %v677 = vpop.permute.xlu0 %676
        %680 = vset.pattern.permute.xlu0 0
        %681 = vperm.xlu0 %680, %v451
        %v682 = vpop.permute.xlu0 %681
        %685 = vset.pattern.permute.xlu0 0
        %686 = vperm.xlu0 %685, %v452
        %v687 = vpop.permute.xlu0 %686
        %690 = vset.pattern.permute.xlu0 0
        %691 = vperm.xlu0 %690, %v453
        %v692 = vpop.permute.xlu0 %691
        %695 = vset.pattern.permute.xlu0 0
        %696 = vperm.xlu0 %695, %v454
        %v697 = vpop.permute.xlu0 %696
        %700 = vset.pattern.permute.xlu0 0
        %701 = vperm.xlu0 %700, %v455
        %v702 = vpop.permute.xlu0 %701
        %705 = vset.pattern.permute.xlu0 0
        %706 = vperm.xlu0 %705, %v456
        %v707 = vpop.permute.xlu0 %706
        %710 = vset.pattern.permute.xlu0 0
        %711 = vperm.xlu0 %710, %v457
        %v712 = vpop.permute.xlu0 %711
        %715 = vset.pattern.permute.xlu0 0
        %716 = vperm.xlu0 %715, %v458
        %v717 = vpop.permute.xlu0 %716
        %720 = vset.pattern.permute.xlu0 0
        %721 = vperm.xlu0 %720, %v459
        %v722 = vpop.permute.xlu0 %721
        %725 = vset.pattern.permute.xlu0 0
        %726 = vperm.xlu0 %725, %v460
        %v727 = vpop.permute.xlu0 %726
        %730 = vset.pattern.permute.xlu0 0
        %731 = vperm.xlu0 %730, %v461
        %v732 = vpop.permute.xlu0 %731
        %735 = vset.pattern.permute.xlu0 0
        %736 = vperm.xlu0 %735, %v462
        %v737 = vpop.permute.xlu0 %736
        %740 = vset.pattern.permute.xlu0 0
        %741 = vperm.xlu0 %740, %v463
        %v742 = vpop.permute.xlu0 %741
        %745 = vset.pattern.permute.xlu0 0
        %746 = vperm.xlu0 %745, %v464
        %v747 = vpop.permute.xlu0 %746
        %750 = vset.pattern.permute.xlu0 0
        %751 = vperm.xlu0 %750, %v465
        %v752 = vpop.permute.xlu0 %751
        %755 = vset.pattern.permute.xlu0 0
        %756 = vperm.xlu0 %755, %v466
        %v757 = vpop.permute.xlu0 %756
        %760 = vset.pattern.permute.xlu0 0
        %761 = vperm.xlu0 %760, %v467
        %v762 = vpop.permute.xlu0 %761
        %765 = vset.pattern.permute.xlu0 0
        %766 = vperm.xlu0 %765, %v468
        %v767 = vpop.permute.xlu0 %766
        %770 = vset.pattern.permute.xlu0 0
        %771 = vperm.xlu0 %770, %v469
        %v772 = vpop.permute.xlu0 %771
        %775 = vset.pattern.permute.xlu0 0
        %776 = vperm.xlu0 %775, %v470
        %v777 = vpop.permute.xlu0 %776
        %780 = vset.pattern.permute.xlu0 0
        %781 = vperm.xlu0 %780, %v471
        %v782 = vpop.permute.xlu0 %781
        %785 = vset.pattern.permute.xlu0 0
        %786 = vperm.xlu0 %785, %v472
        %v787 = vpop.permute.xlu0 %786
        %790 = vset.pattern.permute.xlu0 0
        %791 = vperm.xlu0 %790, %v473
        %v792 = vpop.permute.xlu0 %791
        %v858 = vunpack.c.l.b16 %v346
        %v859 = vunpack.c.l.b16 %v347
        %v860 = vunpack.c.l.b16 %v348
        %v861 = vunpack.c.l.b16 %v349
        %v862 = vunpack.c.l.b16 %v350
        %v863 = vunpack.c.l.b16 %v351
        %v864 = vunpack.c.l.b16 %v352
        %v865 = vunpack.c.l.b16 %v353
        %v866 = vunpack.c.l.b16 %v354
        %v867 = vunpack.c.l.b16 %v355
        %v868 = vunpack.c.l.b16 %v356
        %v869 = vunpack.c.l.b16 %v357
        %v870 = vunpack.c.l.b16 %v358
        %v871 = vunpack.c.l.b16 %v359
        %v872 = vunpack.c.l.b16 %v360
        %v873 = vunpack.c.l.b16 %v361
        %v874 = vunpack.c.l.b16 %v362
        %v875 = vunpack.c.l.b16 %v363
        %v876 = vunpack.c.l.b16 %v364
        %v877 = vunpack.c.l.b16 %v365
        %v878 = vunpack.c.l.b16 %v366
        %v879 = vunpack.c.l.b16 %v367
        %v880 = vunpack.c.l.b16 %v368
        %v881 = vunpack.c.l.b16 %v369
        %v882 = vunpack.c.l.b16 %v370
        %v883 = vunpack.c.l.b16 %v371
        %v884 = vunpack.c.l.b16 %v372
        %v885 = vunpack.c.l.b16 %v373
        %v886 = vunpack.c.l.b16 %v374
        %v887 = vunpack.c.l.b16 %v375
        %v888 = vunpack.c.l.b16 %v376
        %v889 = vunpack.c.l.b16 %v377
        %v890 = vunpack.c.l.b16 %v378
        %v891 = vunpack.c.l.b16 %v379
        %v892 = vunpack.c.l.b16 %v380
        %v893 = vunpack.c.l.b16 %v381
        %v894 = vunpack.c.l.b16 %v382
        %v895 = vunpack.c.l.b16 %v383
        %v896 = vunpack.c.l.b16 %v384
        %v897 = vunpack.c.l.b16 %v385
        %v898 = vunpack.c.l.b16 %v386
        %v899 = vunpack.c.l.b16 %v387
        %v900 = vunpack.c.l.b16 %v388
        %v901 = vunpack.c.l.b16 %v389
        %v902 = vunpack.c.l.b16 %v390
        %v903 = vunpack.c.l.b16 %v391
        %v904 = vunpack.c.l.b16 %v392
        %v905 = vunpack.c.l.b16 %v393
        %v906 = vunpack.c.l.b16 %v394
        %v907 = vunpack.c.l.b16 %v395
        %v908 = vunpack.c.l.b16 %v396
        %v909 = vunpack.c.l.b16 %v397
        %v910 = vunpack.c.l.b16 %v398
        %v911 = vunpack.c.l.b16 %v399
        %v912 = vunpack.c.l.b16 %v400
        %v913 = vunpack.c.l.b16 %v401
        %v914 = vunpack.c.l.b16 %v402
        %v915 = vunpack.c.l.b16 %v403
        %v916 = vunpack.c.l.b16 %v404
        %v917 = vunpack.c.l.b16 %v405
        %v918 = vunpack.c.l.b16 %v406
        %v919 = vunpack.c.l.b16 %v407
        %v920 = vunpack.c.l.b16 %v408
        %v921 = vunpack.c.l.b16 %v409
        %v922 = vpack.c.b16 %v859, %v858
        %v923 = vpack.c.b16 %v861, %v860
        %v924 = vpack.c.b16 %v863, %v862
        %v925 = vpack.c.b16 %v865, %v864
        %v926 = vpack.c.b16 %v867, %v866
        %v927 = vpack.c.b16 %v869, %v868
        %v928 = vpack.c.b16 %v871, %v870
        %v929 = vpack.c.b16 %v873, %v872
        %v930 = vpack.c.b16 %v875, %v874
        %v931 = vpack.c.b16 %v877, %v876
        %v932 = vpack.c.b16 %v879, %v878
        %v933 = vpack.c.b16 %v881, %v880
        %v934 = vpack.c.b16 %v883, %v882
        %v935 = vpack.c.b16 %v885, %v884
        %v936 = vpack.c.b16 %v887, %v886
        %v937 = vpack.c.b16 %v889, %v888
        %v938 = vpack.c.b16 %v891, %v890
        %v939 = vpack.c.b16 %v893, %v892
        %v940 = vpack.c.b16 %v895, %v894
        %v941 = vpack.c.b16 %v897, %v896
        %v942 = vpack.c.b16 %v899, %v898
        %v943 = vpack.c.b16 %v901, %v900
        %v944 = vpack.c.b16 %v903, %v902
        %v945 = vpack.c.b16 %v905, %v904
        %v946 = vpack.c.b16 %v907, %v906
        %v947 = vpack.c.b16 %v909, %v908
        %v948 = vpack.c.b16 %v911, %v910
        %v949 = vpack.c.b16 %v913, %v912
        %v950 = vpack.c.b16 %v915, %v914
        %v951 = vpack.c.b16 %v917, %v916
        %v952 = vpack.c.b16 %v919, %v918
        %v953 = vpack.c.b16 %v921, %v920
        %v1002 = vunpack.c.l.b16 %v330
        %v1003 = vunpack.c.l.b16 %v331
        %v1004 = vunpack.c.l.b16 %v332
        %v1005 = vunpack.c.l.b16 %v333
        %v1006 = vunpack.c.l.b16 %v334
        %v1007 = vunpack.c.l.b16 %v335
        %v1008 = vunpack.c.l.b16 %v336
        %v1009 = vunpack.c.l.b16 %v337
        %v1010 = vunpack.c.l.b16 %v338
        %v1011 = vunpack.c.l.b16 %v339
        %v1012 = vunpack.c.l.b16 %v340
        %v1013 = vunpack.c.l.b16 %v341
        %v1014 = vunpack.c.l.b16 %v342
        %v1015 = vunpack.c.l.b16 %v343
        %v1016 = vunpack.c.l.b16 %v344
        %v1017 = vunpack.c.l.b16 %v345
        %v1018 = vpack.c.b16 %v1003, %v1002
        %v1019 = vpack.c.b16 %v1005, %v1004
        %v1020 = vpack.c.b16 %v1007, %v1006
        %v1021 = vpack.c.b16 %v1009, %v1008
        %v1022 = vpack.c.b16 %v1011, %v1010
        %v1023 = vpack.c.b16 %v1013, %v1012
        %v1024 = vpack.c.b16 %v1015, %v1014
        %v1025 = vpack.c.b16 %v1017, %v1016
        %1034 = vmatprep.subr.bf16.mxu0 0
        %1035 = vmatpush1.bf16.msra.mxu0 %v1025
        %1036 = vmatprep.subr.bf16.mxu0 0
        %1037 = vmatpush1.bf16.msra.mxu0 %v1024
        %1038 = vmatprep.subr.bf16.mxu0 0
        %1039 = vmatpush1.bf16.msra.mxu0 %v1023
        %1040 = vmatprep.subr.bf16.mxu0 0
        %1041 = vmatpush1.bf16.msra.mxu0 %v1022
        %1042 = vmatprep.subr.bf16.mxu0 0
        %1043 = vmatpush1.bf16.msra.mxu0 %v1021
        %1044 = vmatprep.subr.bf16.mxu0 0
        %1045 = vmatpush1.bf16.msra.mxu0 %v1020
        %1046 = vmatprep.subr.bf16.mxu0 0
        %1047 = vmatpush1.bf16.msra.mxu0 %v1019
        %1048 = vmatprep.subr.bf16.mxu0 0
        %1049 = vmatpush1.bf16.msra.mxu0 %v1018
        %1050 = vmatprep.subr.bf16.mxu0 0
        %1051 = vmatpush2.bf16.msra.mxu0 0
        %1052 = vmatprep.subr.bf16.mxu0 0
        %1053 = vmatpush2.bf16.msra.mxu0 0
        %1054 = vmatprep.subr.bf16.mxu0 0
        %1055 = vmatpush2.bf16.msra.mxu0 0
        %1056 = vmatprep.subr.bf16.mxu0 0
        %1057 = vmatpush2.bf16.msra.mxu0 0
        %1058 = vmatprep.subr.bf16.mxu0 0
        %1059 = vmatpush2.bf16.msra.mxu0 0
        %1060 = vmatprep.subr.bf16.mxu0 0
        %1061 = vmatpush2.bf16.msra.mxu0 0
        %1062 = vmatprep.subr.bf16.mxu0 0
        %1063 = vmatpush2.bf16.msra.mxu0 0
        %1064 = vmatprep.subr.bf16.mxu0 0
        %1065 = vmatpush2.bf16.msra.mxu0 0
        %1066 = vmatprep.mubr.bf16.mxu0 0
        %1067 = vmatmul.mubr.bf16.gmra.mxu0 %v922
        %v1068 = vpop.f32.mrf.mxu0
        %v1069 = vadd.f32 %v477, %v1068
        %v1070 = vpop.f32.mrf.mxu0
        %v1071 = vpop.f32.mrf.mxu0
        %v1072 = vadd.f32 %v482, %v1071
        %v1073 = vpop.f32.mrf.mxu0
        %1074 = vmatprep.mubr.bf16.mxu0 0
        %1075 = vmatmul.mubr.bf16.gmra.mxu0 %v923
        %v1076 = vpop.f32.mrf.mxu0
        %v1077 = vadd.f32 %v487, %v1076
        %v1078 = vpop.f32.mrf.mxu0
        %v1079 = vpop.f32.mrf.mxu0
        %v1080 = vadd.f32 %v492, %v1079
        %v1081 = vpop.f32.mrf.mxu0
        %1082 = vmatprep.mubr.bf16.mxu0 0
        %1083 = vmatmul.mubr.bf16.gmra.mxu0 %v924
        %v1084 = vpop.f32.mrf.mxu0
        %v1085 = vadd.f32 %v497, %v1084
        %v1086 = vpop.f32.mrf.mxu0
        %v1087 = vpop.f32.mrf.mxu0
        %v1088 = vadd.f32 %v502, %v1087
        %v1089 = vpop.f32.mrf.mxu0
        %1090 = vmatprep.mubr.bf16.mxu0 0
        %1091 = vmatmul.mubr.bf16.gmra.mxu0 %v925
        %v1092 = vpop.f32.mrf.mxu0
        %v1093 = vadd.f32 %v507, %v1092
        %v1094 = vpop.f32.mrf.mxu0
        %v1095 = vpop.f32.mrf.mxu0
        %v1096 = vadd.f32 %v512, %v1095
        %v1097 = vpop.f32.mrf.mxu0
        %1098 = vmatprep.mubr.bf16.mxu0 0
        %1099 = vmatmul.mubr.bf16.gmra.mxu0 %v926
        %v1100 = vpop.f32.mrf.mxu0
        %v1101 = vadd.f32 %v517, %v1100
        %v1102 = vpop.f32.mrf.mxu0
        %v1103 = vpop.f32.mrf.mxu0
        %v1104 = vadd.f32 %v522, %v1103
        %v1105 = vpop.f32.mrf.mxu0
        %1106 = vmatprep.mubr.bf16.mxu0 0
        %1107 = vmatmul.mubr.bf16.gmra.mxu0 %v927
        %v1108 = vpop.f32.mrf.mxu0
        %v1109 = vadd.f32 %v527, %v1108
        %v1110 = vpop.f32.mrf.mxu0
        %v1111 = vpop.f32.mrf.mxu0
        %v1112 = vadd.f32 %v532, %v1111
        %v1113 = vpop.f32.mrf.mxu0
        %1114 = vmatprep.mubr.bf16.mxu0 0
        %1115 = vmatmul.mubr.bf16.gmra.mxu0 %v928
        %v1116 = vpop.f32.mrf.mxu0
        %v1117 = vadd.f32 %v537, %v1116
        %v1118 = vpop.f32.mrf.mxu0
        %v1119 = vpop.f32.mrf.mxu0
        %v1120 = vadd.f32 %v542, %v1119
        %v1121 = vpop.f32.mrf.mxu0
        %1122 = vmatprep.mubr.bf16.mxu0 0
        %1123 = vmatmul.mubr.bf16.gmra.mxu0 %v929
        %v1124 = vpop.f32.mrf.mxu0
        %v1125 = vadd.f32 %v547, %v1124
        %v1126 = vpop.f32.mrf.mxu0
        %v1127 = vpop.f32.mrf.mxu0
        %v1128 = vadd.f32 %v552, %v1127
        %v1129 = vpop.f32.mrf.mxu0
        %1130 = vmatprep.mubr.bf16.mxu0 0
        %1131 = vmatmul.mubr.bf16.gmra.mxu0 %v930
        %v1132 = vpop.f32.mrf.mxu0
        %v1133 = vadd.f32 %v557, %v1132
        %v1134 = vpop.f32.mrf.mxu0
        %v1135 = vpop.f32.mrf.mxu0
        %v1136 = vadd.f32 %v562, %v1135
        %v1137 = vpop.f32.mrf.mxu0
        %1138 = vmatprep.mubr.bf16.mxu0 0
        %1139 = vmatmul.mubr.bf16.gmra.mxu0 %v931
        %v1140 = vpop.f32.mrf.mxu0
        %v1141 = vadd.f32 %v567, %v1140
        %v1142 = vpop.f32.mrf.mxu0
        %v1143 = vpop.f32.mrf.mxu0
        %v1144 = vadd.f32 %v572, %v1143
        %v1145 = vpop.f32.mrf.mxu0
        %1146 = vmatprep.mubr.bf16.mxu0 0
        %1147 = vmatmul.mubr.bf16.gmra.mxu0 %v932
        %v1148 = vpop.f32.mrf.mxu0
        %v1149 = vadd.f32 %v577, %v1148
        %v1150 = vpop.f32.mrf.mxu0
        %v1151 = vpop.f32.mrf.mxu0
        %v1152 = vadd.f32 %v582, %v1151
        %v1153 = vpop.f32.mrf.mxu0
        %1154 = vmatprep.mubr.bf16.mxu0 0
        %1155 = vmatmul.mubr.bf16.gmra.mxu0 %v933
        %v1156 = vpop.f32.mrf.mxu0
        %v1157 = vadd.f32 %v587, %v1156
        %v1158 = vpop.f32.mrf.mxu0
        %v1159 = vpop.f32.mrf.mxu0
        %v1160 = vadd.f32 %v592, %v1159
        %v1161 = vpop.f32.mrf.mxu0
        %1162 = vmatprep.mubr.bf16.mxu0 0
        %1163 = vmatmul.mubr.bf16.gmra.mxu0 %v934
        %v1164 = vpop.f32.mrf.mxu0
        %v1165 = vadd.f32 %v597, %v1164
        %v1166 = vpop.f32.mrf.mxu0
        %v1167 = vpop.f32.mrf.mxu0
        %v1168 = vadd.f32 %v602, %v1167
        %v1169 = vpop.f32.mrf.mxu0
        %1170 = vmatprep.mubr.bf16.mxu0 0
        %1171 = vmatmul.mubr.bf16.gmra.mxu0 %v935
        %v1172 = vpop.f32.mrf.mxu0
        %v1173 = vadd.f32 %v607, %v1172
        %v1174 = vpop.f32.mrf.mxu0
        %v1175 = vpop.f32.mrf.mxu0
        %v1176 = vadd.f32 %v612, %v1175
        %v1177 = vpop.f32.mrf.mxu0
        %1178 = vmatprep.mubr.bf16.mxu0 0
        %1179 = vmatmul.mubr.bf16.gmra.mxu0 %v936
        %v1180 = vpop.f32.mrf.mxu0
        %v1181 = vadd.f32 %v617, %v1180
        %v1182 = vpop.f32.mrf.mxu0
        %v1183 = vpop.f32.mrf.mxu0
        %v1184 = vadd.f32 %v622, %v1183
        %v1185 = vpop.f32.mrf.mxu0
        %1186 = vmatprep.mubr.bf16.mxu0 0
        %1187 = vmatmul.mubr.bf16.gmra.mxu0 %v937
        %v1188 = vpop.f32.mrf.mxu0
        %v1189 = vadd.f32 %v627, %v1188
        %v1190 = vpop.f32.mrf.mxu0
        %v1191 = vpop.f32.mrf.mxu0
        %v1192 = vadd.f32 %v632, %v1191
        %v1193 = vpop.f32.mrf.mxu0
        %1194 = vmatprep.mubr.bf16.mxu0 0
        %1195 = vmatmul.mubr.bf16.gmra.mxu0 %v938
        %v1196 = vpop.f32.mrf.mxu0
        %v1197 = vadd.f32 %v637, %v1196
        %v1198 = vpop.f32.mrf.mxu0
        %v1199 = vpop.f32.mrf.mxu0
        %v1200 = vadd.f32 %v642, %v1199
        %v1201 = vpop.f32.mrf.mxu0
        %1202 = vmatprep.mubr.bf16.mxu0 0
        %1203 = vmatmul.mubr.bf16.gmra.mxu0 %v939
        %v1204 = vpop.f32.mrf.mxu0
        %v1205 = vadd.f32 %v647, %v1204
        %v1206 = vpop.f32.mrf.mxu0
        %v1207 = vpop.f32.mrf.mxu0
        %v1208 = vadd.f32 %v652, %v1207
        %v1209 = vpop.f32.mrf.mxu0
        %1210 = vmatprep.mubr.bf16.mxu0 0
        %1211 = vmatmul.mubr.bf16.gmra.mxu0 %v940
        %v1212 = vpop.f32.mrf.mxu0
        %v1213 = vadd.f32 %v657, %v1212
        %v1214 = vpop.f32.mrf.mxu0
        %v1215 = vpop.f32.mrf.mxu0
        %v1216 = vadd.f32 %v662, %v1215
        %v1217 = vpop.f32.mrf.mxu0
        %1218 = vmatprep.mubr.bf16.mxu0 0
        %1219 = vmatmul.mubr.bf16.gmra.mxu0 %v941
        %v1220 = vpop.f32.mrf.mxu0
        %v1221 = vadd.f32 %v667, %v1220
        %v1222 = vpop.f32.mrf.mxu0
        %v1223 = vpop.f32.mrf.mxu0
        %v1224 = vadd.f32 %v672, %v1223
        %v1225 = vpop.f32.mrf.mxu0
        %1226 = vmatprep.mubr.bf16.mxu0 0
        %1227 = vmatmul.mubr.bf16.gmra.mxu0 %v942
        %v1228 = vpop.f32.mrf.mxu0
        %v1229 = vadd.f32 %v677, %v1228
        %v1230 = vpop.f32.mrf.mxu0
        %v1231 = vpop.f32.mrf.mxu0
        %v1232 = vadd.f32 %v682, %v1231
        %v1233 = vpop.f32.mrf.mxu0
        %1234 = vmatprep.mubr.bf16.mxu0 0
        %1235 = vmatmul.mubr.bf16.gmra.mxu0 %v943
        %v1236 = vpop.f32.mrf.mxu0
        %v1237 = vadd.f32 %v687, %v1236
        %v1238 = vpop.f32.mrf.mxu0
        %v1239 = vpop.f32.mrf.mxu0
        %v1240 = vadd.f32 %v692, %v1239
        %v1241 = vpop.f32.mrf.mxu0
        %1242 = vmatprep.mubr.bf16.mxu0 0
        %1243 = vmatmul.mubr.bf16.gmra.mxu0 %v944
        %v1244 = vpop.f32.mrf.mxu0
        %v1245 = vadd.f32 %v697, %v1244
        %v1246 = vpop.f32.mrf.mxu0
        %v1247 = vpop.f32.mrf.mxu0
        %v1248 = vadd.f32 %v702, %v1247
        %v1249 = vpop.f32.mrf.mxu0
        %1250 = vmatprep.mubr.bf16.mxu0 0
        %1251 = vmatmul.mubr.bf16.gmra.mxu0 %v945
        %v1252 = vpop.f32.mrf.mxu0
        %v1253 = vadd.f32 %v707, %v1252
        %v1254 = vpop.f32.mrf.mxu0
        %v1255 = vpop.f32.mrf.mxu0
        %v1256 = vadd.f32 %v712, %v1255
        %v1257 = vpop.f32.mrf.mxu0
        %1258 = vmatprep.mubr.bf16.mxu0 0
        %1259 = vmatmul.mubr.bf16.gmra.mxu0 %v946
        %v1260 = vpop.f32.mrf.mxu0
        %v1261 = vadd.f32 %v717, %v1260
        %v1262 = vpop.f32.mrf.mxu0
        %v1263 = vpop.f32.mrf.mxu0
        %v1264 = vadd.f32 %v722, %v1263
        %v1265 = vpop.f32.mrf.mxu0
        %1266 = vmatprep.mubr.bf16.mxu0 0
        %1267 = vmatmul.mubr.bf16.gmra.mxu0 %v947
        %v1268 = vpop.f32.mrf.mxu0
        %v1269 = vadd.f32 %v727, %v1268
        %v1270 = vpop.f32.mrf.mxu0
        %v1271 = vpop.f32.mrf.mxu0
        %v1272 = vadd.f32 %v732, %v1271
        %v1273 = vpop.f32.mrf.mxu0
        %1274 = vmatprep.mubr.bf16.mxu0 0
        %1275 = vmatmul.mubr.bf16.gmra.mxu0 %v948
        %v1276 = vpop.f32.mrf.mxu0
        %v1277 = vadd.f32 %v737, %v1276
        %v1278 = vpop.f32.mrf.mxu0
        %v1279 = vpop.f32.mrf.mxu0
        %v1280 = vadd.f32 %v742, %v1279
        %v1281 = vpop.f32.mrf.mxu0
        %1282 = vmatprep.mubr.bf16.mxu0 0
        %1283 = vmatmul.mubr.bf16.gmra.mxu0 %v949
        %v1284 = vpop.f32.mrf.mxu0
        %v1285 = vadd.f32 %v747, %v1284
        %v1286 = vpop.f32.mrf.mxu0
        %v1287 = vpop.f32.mrf.mxu0
        %v1288 = vadd.f32 %v752, %v1287
        %v1289 = vpop.f32.mrf.mxu0
        %1290 = vmatprep.mubr.bf16.mxu0 0
        %1291 = vmatmul.mubr.bf16.gmra.mxu0 %v950
        %v1292 = vpop.f32.mrf.mxu0
        %v1293 = vadd.f32 %v757, %v1292
        %v1294 = vpop.f32.mrf.mxu0
        %v1295 = vpop.f32.mrf.mxu0
        %v1296 = vadd.f32 %v762, %v1295
        %v1297 = vpop.f32.mrf.mxu0
        %1298 = vmatprep.mubr.bf16.mxu0 0
        %1299 = vmatmul.mubr.bf16.gmra.mxu0 %v951
        %v1300 = vpop.f32.mrf.mxu0
        %v1301 = vadd.f32 %v767, %v1300
        %v1302 = vpop.f32.mrf.mxu0
        %v1303 = vpop.f32.mrf.mxu0
        %v1304 = vadd.f32 %v772, %v1303
        %v1305 = vpop.f32.mrf.mxu0
        %1306 = vmatprep.mubr.bf16.mxu0 0
        %1307 = vmatmul.mubr.bf16.gmra.mxu0 %v952
        %v1308 = vpop.f32.mrf.mxu0
        %v1309 = vadd.f32 %v777, %v1308
        %v1310 = vpop.f32.mrf.mxu0
        %v1311 = vpop.f32.mrf.mxu0
        %v1312 = vadd.f32 %v782, %v1311
        %v1313 = vpop.f32.mrf.mxu0
        %1314 = vmatprep.mubr.bf16.mxu0 0
        %1315 = vmatmul.mubr.bf16.gmra.mxu0 %v953
        %v1316 = vpop.f32.mrf.mxu0
        %v1317 = vadd.f32 %v787, %v1316
        %v1318 = vpop.f32.mrf.mxu0
        %v1319 = vpop.f32.mrf.mxu0
        %v1320 = vadd.f32 %v792, %v1319
        %v1321 = vpop.f32.mrf.mxu0
        %1322 = vdwg.mxu0
        %v1323 = vmax.f32 %v1069, 0.0
        %v1324 = vmax.f32 %v1072, 0.0
        %v1325 = vmax.f32 %v1077, 0.0
        %v1326 = vmax.f32 %v1080, 0.0
        %v1327 = vmax.f32 %v1085, 0.0
        %v1328 = vmax.f32 %v1088, 0.0
        %v1329 = vmax.f32 %v1093, 0.0
        %v1330 = vmax.f32 %v1096, 0.0
        %v1331 = vmax.f32 %v1101, 0.0
        %v1332 = vmax.f32 %v1104, 0.0
        %v1333 = vmax.f32 %v1109, 0.0
        %v1334 = vmax.f32 %v1112, 0.0
        %v1335 = vmax.f32 %v1117, 0.0
        %v1336 = vmax.f32 %v1120, 0.0
        %v1337 = vmax.f32 %v1125, 0.0
        %v1338 = vmax.f32 %v1128, 0.0
        %v1339 = vmax.f32 %v1133, 0.0
        %v1340 = vmax.f32 %v1136, 0.0
        %v1341 = vmax.f32 %v1141, 0.0
        %v1342 = vmax.f32 %v1144, 0.0
        %v1343 = vmax.f32 %v1149, 0.0
        %v1344 = vmax.f32 %v1152, 0.0
        %v1345 = vmax.f32 %v1157, 0.0
        %v1346 = vmax.f32 %v1160, 0.0
        %v1347 = vmax.f32 %v1165, 0.0
        %v1348 = vmax.f32 %v1168, 0.0
        %v1349 = vmax.f32 %v1173, 0.0
        %v1350 = vmax.f32 %v1176, 0.0
        %v1351 = vmax.f32 %v1181, 0.0
        %v1352 = vmax.f32 %v1184, 0.0
        %v1353 = vmax.f32 %v1189, 0.0
        %v1354 = vmax.f32 %v1192, 0.0
        %v1355 = vmax.f32 %v1197, 0.0
        %v1356 = vmax.f32 %v1200, 0.0
        %v1357 = vmax.f32 %v1205, 0.0
        %v1358 = vmax.f32 %v1208, 0.0
        %v1359 = vmax.f32 %v1213, 0.0
        %v1360 = vmax.f32 %v1216, 0.0
        %v1361 = vmax.f32 %v1221, 0.0
        %v1362 = vmax.f32 %v1224, 0.0
        %v1363 = vmax.f32 %v1229, 0.0
        %v1364 = vmax.f32 %v1232, 0.0
        %v1365 = vmax.f32 %v1237, 0.0
        %v1366 = vmax.f32 %v1240, 0.0
        %v1367 = vmax.f32 %v1245, 0.0
        %v1368 = vmax.f32 %v1248, 0.0
        %v1369 = vmax.f32 %v1253, 0.0
        %v1370 = vmax.f32 %v1256, 0.0
        %v1371 = vmax.f32 %v1261, 0.0
        %v1372 = vmax.f32 %v1264, 0.0
        %v1373 = vmax.f32 %v1269, 0.0
        %v1374 = vmax.f32 %v1272, 0.0
        %v1375 = vmax.f32 %v1277, 0.0
        %v1376 = vmax.f32 %v1280, 0.0
        %v1377 = vmax.f32 %v1285, 0.0
        %v1378 = vmax.f32 %v1288, 0.0
        %v1379 = vmax.f32 %v1293, 0.0
        %v1380 = vmax.f32 %v1296, 0.0
        %v1381 = vmax.f32 %v1301, 0.0
        %v1382 = vmax.f32 %v1304, 0.0
        %v1383 = vmax.f32 %v1309, 0.0
        %v1384 = vmax.f32 %v1312, 0.0
        %v1385 = vmax.f32 %v1317, 0.0
        %v1386 = vmax.f32 %v1320, 0.0
        %v1387 = vpack.c.bf16 %v1324, %v1323
        %v1388 = vpack.c.bf16 %v1326, %v1325
        %v1389 = vpack.c.bf16 %v1328, %v1327
        %v1390 = vpack.c.bf16 %v1330, %v1329
        %v1391 = vpack.c.bf16 %v1332, %v1331
        %v1392 = vpack.c.bf16 %v1334, %v1333
        %v1393 = vpack.c.bf16 %v1336, %v1335
        %v1394 = vpack.c.bf16 %v1338, %v1337
        %v1395 = vpack.c.bf16 %v1340, %v1339
        %v1396 = vpack.c.bf16 %v1342, %v1341
        %v1397 = vpack.c.bf16 %v1344, %v1343
        %v1398 = vpack.c.bf16 %v1346, %v1345
        %v1399 = vpack.c.bf16 %v1348, %v1347
        %v1400 = vpack.c.bf16 %v1350, %v1349
        %v1401 = vpack.c.bf16 %v1352, %v1351
        %v1402 = vpack.c.bf16 %v1354, %v1353
        %v1403 = vpack.c.bf16 %v1356, %v1355
        %v1404 = vpack.c.bf16 %v1358, %v1357
        %v1405 = vpack.c.bf16 %v1360, %v1359
        %v1406 = vpack.c.bf16 %v1362, %v1361
        %v1407 = vpack.c.bf16 %v1364, %v1363
        %v1408 = vpack.c.bf16 %v1366, %v1365
        %v1409 = vpack.c.bf16 %v1368, %v1367
        %v1410 = vpack.c.bf16 %v1370, %v1369
        %v1411 = vpack.c.bf16 %v1372, %v1371
        %v1412 = vpack.c.bf16 %v1374, %v1373
        %v1413 = vpack.c.bf16 %v1376, %v1375
        %v1414 = vpack.c.bf16 %v1378, %v1377
        %v1415 = vpack.c.bf16 %v1380, %v1379
        %v1416 = vpack.c.bf16 %v1382, %v1381
        %v1417 = vpack.c.bf16 %v1384, %v1383
        %v1418 = vpack.c.bf16 %v1386, %v1385
        %v1419 = vld [vmem:[%s3] sm:$0xff]
        %v1420 = vld [vmem:[%s3 + $0x8] sm:$0xff]
        %v1421 = vld [vmem:[%s3 + $0x10] sm:$0xff]
        %v1422 = vld [vmem:[%s3 + $0x18] sm:$0xff]
        %v1423 = vld [vmem:[%s3 + $0x20] sm:$0xff]
        %v1424 = vld [vmem:[%s3 + $0x28] sm:$0xff]
        %v1425 = vld [vmem:[%s3 + $0x30] sm:$0xff]
        %v1426 = vld [vmem:[%s3 + $0x38] sm:$0xff]
        %v1427 = vld [vmem:[%s3 + $0x40] sm:$0xff]
        %v1428 = vld [vmem:[%s3 + $0x48] sm:$0xff]
        %v1429 = vld [vmem:[%s3 + $0x50] sm:$0xff]
        %v1430 = vld [vmem:[%s3 + $0x58] sm:$0xff]
        %v1431 = vld [vmem:[%s3 + $0x60] sm:$0xff]
        %v1432 = vld [vmem:[%s3 + $0x68] sm:$0xff]
        %v1433 = vld [vmem:[%s3 + $0x70] sm:$0xff]
        %v1434 = vld [vmem:[%s3 + $0x78] sm:$0xff]
        %v1435 = vld [vmem:[%s3 + $0x80] sm:$0xff]
        %v1436 = vld [vmem:[%s3 + $0x88] sm:$0xff]
        %v1437 = vld [vmem:[%s3 + $0x90] sm:$0xff]
        %v1438 = vld [vmem:[%s3 + $0x98] sm:$0xff]
        %v1439 = vld [vmem:[%s3 + $0xa0] sm:$0xff]
        %v1440 = vld [vmem:[%s3 + $0xa8] sm:$0xff]
        %v1441 = vld [vmem:[%s3 + $0xb0] sm:$0xff]
        %v1442 = vld [vmem:[%s3 + $0xb8] sm:$0xff]
        %v1443 = vld [vmem:[%s3 + $0xc0] sm:$0xff]
        %v1444 = vld [vmem:[%s3 + $0xc8] sm:$0xff]
        %v1445 = vld [vmem:[%s3 + $0xd0] sm:$0xff]
        %v1446 = vld [vmem:[%s3 + $0xd8] sm:$0xff]
        %v1447 = vld [vmem:[%s3 + $0xe0] sm:$0xff]
        %v1448 = vld [vmem:[%s3 + $0xe8] sm:$0xff]
        %v1449 = vld [vmem:[%s3 + $0xf0] sm:$0xff]
        %v1450 = vld [vmem:[%s3 + $0xf8] sm:$0xff]
        %v1451 = vld [vmem:[%s3 + $0x100] sm:$0xff]
        %v1452 = vld [vmem:[%s3 + $0x108] sm:$0xff]
        %v1453 = vld [vmem:[%s3 + $0x110] sm:$0xff]
        %v1454 = vld [vmem:[%s3 + $0x118] sm:$0xff]
        %v1455 = vld [vmem:[%s3 + $0x120] sm:$0xff]
        %v1456 = vld [vmem:[%s3 + $0x128] sm:$0xff]
        %v1457 = vld [vmem:[%s3 + $0x130] sm:$0xff]
        %v1458 = vld [vmem:[%s3 + $0x138] sm:$0xff]
        %v1459 = vld [vmem:[%s3 + $0x140] sm:$0xff]
        %v1460 = vld [vmem:[%s3 + $0x148] sm:$0xff]
        %v1461 = vld [vmem:[%s3 + $0x150] sm:$0xff]
        %v1462 = vld [vmem:[%s3 + $0x158] sm:$0xff]
        %v1463 = vld [vmem:[%s3 + $0x160] sm:$0xff]
        %v1464 = vld [vmem:[%s3 + $0x168] sm:$0xff]
        %v1465 = vld [vmem:[%s3 + $0x170] sm:$0xff]
        %v1466 = vld [vmem:[%s3 + $0x178] sm:$0xff]
        %v1467 = vld [vmem:[%s3 + $0x180] sm:$0xff]
        %v1468 = vld [vmem:[%s3 + $0x188] sm:$0xff]
        %v1469 = vld [vmem:[%s3 + $0x190] sm:$0xff]
        %v1470 = vld [vmem:[%s3 + $0x198] sm:$0xff]
        %v1471 = vld [vmem:[%s3 + $0x1a0] sm:$0xff]
        %v1472 = vld [vmem:[%s3 + $0x1a8] sm:$0xff]
        %v1473 = vld [vmem:[%s3 + $0x1b0] sm:$0xff]
        %v1474 = vld [vmem:[%s3 + $0x1b8] sm:$0xff]
        %v1475 = vld [vmem:[%s3 + $0x1c0] sm:$0xff]
        %v1476 = vld [vmem:[%s3 + $0x1c8] sm:$0xff]
        %v1477 = vld [vmem:[%s3 + $0x1d0] sm:$0xff]
        %v1478 = vld [vmem:[%s3 + $0x1d8] sm:$0xff]
        %v1479 = vld [vmem:[%s3 + $0x1e0] sm:$0xff]
        %v1480 = vld [vmem:[%s3 + $0x1e8] sm:$0xff]
        %v1481 = vld [vmem:[%s3 + $0x1f0] sm:$0xff]
        %v1482 = vld [vmem:[%s3 + $0x1f8] sm:$0xff]
        %v1483 = vld [vmem:[%s3 + $0x200] sm:$0xff]
        %v1484 = vld [vmem:[%s3 + $0x208] sm:$0xff]
        %v1485 = vld [vmem:[%s3 + $0x210] sm:$0xff]
        %v1486 = vld [vmem:[%s3 + $0x218] sm:$0xff]
        %v1487 = vld [vmem:[%s3 + $0x220] sm:$0xff]
        %v1488 = vld [vmem:[%s3 + $0x228] sm:$0xff]
        %v1489 = vld [vmem:[%s3 + $0x230] sm:$0xff]
        %v1490 = vld [vmem:[%s3 + $0x238] sm:$0xff]
        %v1491 = vld [vmem:[%s3 + $0x240] sm:$0xff]
        %v1492 = vld [vmem:[%s3 + $0x248] sm:$0xff]
        %v1493 = vld [vmem:[%s3 + $0x250] sm:$0xff]
        %v1494 = vld [vmem:[%s3 + $0x258] sm:$0xff]
        %v1495 = vld [vmem:[%s3 + $0x260] sm:$0xff]
        %v1496 = vld [vmem:[%s3 + $0x268] sm:$0xff]
        %v1497 = vld [vmem:[%s3 + $0x270] sm:$0xff]
        %v1498 = vld [vmem:[%s3 + $0x278] sm:$0xff]
        %v1499 = vld [vmem:[%s3 + $0x280] sm:$0xff]
        %v1500 = vld [vmem:[%s3 + $0x288] sm:$0xff]
        %v1501 = vld [vmem:[%s3 + $0x290] sm:$0xff]
        %v1502 = vld [vmem:[%s3 + $0x298] sm:$0xff]
        %v1503 = vld [vmem:[%s3 + $0x2a0] sm:$0xff]
        %v1504 = vld [vmem:[%s3 + $0x2a8] sm:$0xff]
        %v1505 = vld [vmem:[%s3 + $0x2b0] sm:$0xff]
        %v1506 = vld [vmem:[%s3 + $0x2b8] sm:$0xff]
        %v1507 = vld [vmem:[%s3 + $0x2c0] sm:$0xff]
        %v1508 = vld [vmem:[%s3 + $0x2c8] sm:$0xff]
        %v1509 = vld [vmem:[%s3 + $0x2d0] sm:$0xff]
        %v1510 = vld [vmem:[%s3 + $0x2d8] sm:$0xff]
        %v1511 = vld [vmem:[%s3 + $0x2e0] sm:$0xff]
        %v1512 = vld [vmem:[%s3 + $0x2e8] sm:$0xff]
        %v1513 = vld [vmem:[%s3 + $0x2f0] sm:$0xff]
        %v1514 = vld [vmem:[%s3 + $0x2f8] sm:$0xff]
        %v1515 = vld [vmem:[%s3 + $0x300] sm:$0xff]
        %v1516 = vld [vmem:[%s3 + $0x308] sm:$0xff]
        %v1517 = vld [vmem:[%s3 + $0x310] sm:$0xff]
        %v1518 = vld [vmem:[%s3 + $0x318] sm:$0xff]
        %v1519 = vld [vmem:[%s3 + $0x320] sm:$0xff]
        %v1520 = vld [vmem:[%s3 + $0x328] sm:$0xff]
        %v1521 = vld [vmem:[%s3 + $0x330] sm:$0xff]
        %v1522 = vld [vmem:[%s3 + $0x338] sm:$0xff]
        %v1523 = vld [vmem:[%s3 + $0x340] sm:$0xff]
        %v1524 = vld [vmem:[%s3 + $0x348] sm:$0xff]
        %v1525 = vld [vmem:[%s3 + $0x350] sm:$0xff]
        %v1526 = vld [vmem:[%s3 + $0x358] sm:$0xff]
        %v1527 = vld [vmem:[%s3 + $0x360] sm:$0xff]
        %v1528 = vld [vmem:[%s3 + $0x368] sm:$0xff]
        %v1529 = vld [vmem:[%s3 + $0x370] sm:$0xff]
        %v1530 = vld [vmem:[%s3 + $0x378] sm:$0xff]
        %v1531 = vld [vmem:[%s3 + $0x380] sm:$0xff]
        %v1532 = vld [vmem:[%s3 + $0x388] sm:$0xff]
        %v1533 = vld [vmem:[%s3 + $0x390] sm:$0xff]
        %v1534 = vld [vmem:[%s3 + $0x398] sm:$0xff]
        %v1535 = vld [vmem:[%s3 + $0x3a0] sm:$0xff]
        %v1536 = vld [vmem:[%s3 + $0x3a8] sm:$0xff]
        %v1537 = vld [vmem:[%s3 + $0x3b0] sm:$0xff]
        %v1538 = vld [vmem:[%s3 + $0x3b8] sm:$0xff]
        %v1539 = vld [vmem:[%s3 + $0x3c0] sm:$0xff]
        %v1540 = vld [vmem:[%s3 + $0x3c8] sm:$0xff]
        %v1541 = vld [vmem:[%s3 + $0x3d0] sm:$0xff]
        %v1542 = vld [vmem:[%s3 + $0x3d8] sm:$0xff]
        %v1543 = vld [vmem:[%s3 + $0x3e0] sm:$0xff]
        %v1544 = vld [vmem:[%s3 + $0x3e8] sm:$0xff]
        %v1545 = vld [vmem:[%s3 + $0x3f0] sm:$0xff]
        %v1546 = vld [vmem:[%s3 + $0x3f8] sm:$0xff]
        %v1547 = vld [vmem:[%s4] sm:$0xff]
        %v1548 = vld [vmem:[%s4 + $0x8] sm:$0xff]
        %v1549 = vld [vmem:[%s4 + $0x10] sm:$0xff]
        %v1550 = vld [vmem:[%s4 + $0x18] sm:$0xff]
        %v1551 = vld [vmem:[%s4 + $0x20] sm:$0xff]
        %v1552 = vld [vmem:[%s4 + $0x28] sm:$0xff]
        %v1553 = vld [vmem:[%s4 + $0x30] sm:$0xff]
        %v1554 = vld [vmem:[%s4 + $0x38] sm:$0xff]
        %v1555 = vld [vmem:[%s4 + $0x40] sm:$0xff]
        %v1556 = vld [vmem:[%s4 + $0x48] sm:$0xff]
        %v1557 = vld [vmem:[%s4 + $0x50] sm:$0xff]
        %v1558 = vld [vmem:[%s4 + $0x58] sm:$0xff]
        %v1559 = vld [vmem:[%s4 + $0x60] sm:$0xff]
        %v1560 = vld [vmem:[%s4 + $0x68] sm:$0xff]
        %v1561 = vld [vmem:[%s4 + $0x70] sm:$0xff]
        %v1562 = vld [vmem:[%s4 + $0x78] sm:$0xff]
        %v1563 = vld [vmem:[%s4 + $0x80] sm:$0xff]
        %v1564 = vld [vmem:[%s4 + $0x88] sm:$0xff]
        %v1565 = vld [vmem:[%s4 + $0x90] sm:$0xff]
        %v1566 = vld [vmem:[%s4 + $0x98] sm:$0xff]
        %v1567 = vld [vmem:[%s4 + $0xa0] sm:$0xff]
        %v1568 = vld [vmem:[%s4 + $0xa8] sm:$0xff]
        %v1569 = vld [vmem:[%s4 + $0xb0] sm:$0xff]
        %v1570 = vld [vmem:[%s4 + $0xb8] sm:$0xff]
        %v1571 = vld [vmem:[%s4 + $0xc0] sm:$0xff]
        %v1572 = vld [vmem:[%s4 + $0xc8] sm:$0xff]
        %v1573 = vld [vmem:[%s4 + $0xd0] sm:$0xff]
        %v1574 = vld [vmem:[%s4 + $0xd8] sm:$0xff]
        %v1575 = vld [vmem:[%s4 + $0xe0] sm:$0xff]
        %v1576 = vld [vmem:[%s4 + $0xe8] sm:$0xff]
        %v1577 = vld [vmem:[%s4 + $0xf0] sm:$0xff]
        %v1578 = vld [vmem:[%s4 + $0xf8] sm:$0xff]
        %v1579 = vld [vmem:[%s4 + $0x100] sm:$0xff]
        %v1580 = vld [vmem:[%s4 + $0x108] sm:$0xff]
        %v1581 = vld [vmem:[%s4 + $0x110] sm:$0xff]
        %v1582 = vld [vmem:[%s4 + $0x118] sm:$0xff]
        %v1583 = vld [vmem:[%s4 + $0x120] sm:$0xff]
        %v1584 = vld [vmem:[%s4 + $0x128] sm:$0xff]
        %v1585 = vld [vmem:[%s4 + $0x130] sm:$0xff]
        %v1586 = vld [vmem:[%s4 + $0x138] sm:$0xff]
        %v1587 = vld [vmem:[%s4 + $0x140] sm:$0xff]
        %v1588 = vld [vmem:[%s4 + $0x148] sm:$0xff]
        %v1589 = vld [vmem:[%s4 + $0x150] sm:$0xff]
        %v1590 = vld [vmem:[%s4 + $0x158] sm:$0xff]
        %v1591 = vld [vmem:[%s4 + $0x160] sm:$0xff]
        %v1592 = vld [vmem:[%s4 + $0x168] sm:$0xff]
        %v1593 = vld [vmem:[%s4 + $0x170] sm:$0xff]
        %v1594 = vld [vmem:[%s4 + $0x178] sm:$0xff]
        %v1595 = vld [vmem:[%s4 + $0x180] sm:$0xff]
        %v1596 = vld [vmem:[%s4 + $0x188] sm:$0xff]
        %v1597 = vld [vmem:[%s4 + $0x190] sm:$0xff]
        %v1598 = vld [vmem:[%s4 + $0x198] sm:$0xff]
        %v1599 = vld [vmem:[%s4 + $0x1a0] sm:$0xff]
        %v1600 = vld [vmem:[%s4 + $0x1a8] sm:$0xff]
        %v1601 = vld [vmem:[%s4 + $0x1b0] sm:$0xff]
        %v1602 = vld [vmem:[%s4 + $0x1b8] sm:$0xff]
        %v1603 = vld [vmem:[%s4 + $0x1c0] sm:$0xff]
        %v1604 = vld [vmem:[%s4 + $0x1c8] sm:$0xff]
        %v1605 = vld [vmem:[%s4 + $0x1d0] sm:$0xff]
        %v1606 = vld [vmem:[%s4 + $0x1d8] sm:$0xff]
        %v1607 = vld [vmem:[%s4 + $0x1e0] sm:$0xff]
        %v1608 = vld [vmem:[%s4 + $0x1e8] sm:$0xff]
        %v1609 = vld [vmem:[%s4 + $0x1f0] sm:$0xff]
        %v1610 = vld [vmem:[%s4 + $0x1f8] sm:$0xff]
        %1612 = vset.pattern.permute.xlu0 0
        %1613 = vperm.xlu0 %1612, %v1547
        %v1614 = vpop.permute.xlu0 %1613
        %1617 = vset.pattern.permute.xlu0 0
        %1618 = vperm.xlu0 %1617, %v1548
        %v1619 = vpop.permute.xlu0 %1618
        %1622 = vset.pattern.permute.xlu0 0
        %1623 = vperm.xlu0 %1622, %v1549
        %v1624 = vpop.permute.xlu0 %1623
        %1627 = vset.pattern.permute.xlu0 0
        %1628 = vperm.xlu0 %1627, %v1550
        %v1629 = vpop.permute.xlu0 %1628
        %1632 = vset.pattern.permute.xlu0 0
        %1633 = vperm.xlu0 %1632, %v1551
        %v1634 = vpop.permute.xlu0 %1633
        %1637 = vset.pattern.permute.xlu0 0
        %1638 = vperm.xlu0 %1637, %v1552
        %v1639 = vpop.permute.xlu0 %1638
        %1642 = vset.pattern.permute.xlu0 0
        %1643 = vperm.xlu0 %1642, %v1553
        %v1644 = vpop.permute.xlu0 %1643
        %1647 = vset.pattern.permute.xlu0 0
        %1648 = vperm.xlu0 %1647, %v1554
        %v1649 = vpop.permute.xlu0 %1648
        %1652 = vset.pattern.permute.xlu0 0
        %1653 = vperm.xlu0 %1652, %v1555
        %v1654 = vpop.permute.xlu0 %1653
        %1657 = vset.pattern.permute.xlu0 0
        %1658 = vperm.xlu0 %1657, %v1556
        %v1659 = vpop.permute.xlu0 %1658
        %1662 = vset.pattern.permute.xlu0 0
        %1663 = vperm.xlu0 %1662, %v1557
        %v1664 = vpop.permute.xlu0 %1663
        %1667 = vset.pattern.permute.xlu0 0
        %1668 = vperm.xlu0 %1667, %v1558
        %v1669 = vpop.permute.xlu0 %1668
        %1672 = vset.pattern.permute.xlu0 0
        %1673 = vperm.xlu0 %1672, %v1559
        %v1674 = vpop.permute.xlu0 %1673
        %1677 = vset.pattern.permute.xlu0 0
        %1678 = vperm.xlu0 %1677, %v1560
        %v1679 = vpop.permute.xlu0 %1678
        %1682 = vset.pattern.permute.xlu0 0
        %1683 = vperm.xlu0 %1682, %v1561
        %v1684 = vpop.permute.xlu0 %1683
        %1687 = vset.pattern.permute.xlu0 0
        %1688 = vperm.xlu0 %1687, %v1562
        %v1689 = vpop.permute.xlu0 %1688
        %1692 = vset.pattern.permute.xlu0 0
        %1693 = vperm.xlu0 %1692, %v1563
        %v1694 = vpop.permute.xlu0 %1693
        %1697 = vset.pattern.permute.xlu0 0
        %1698 = vperm.xlu0 %1697, %v1564
        %v1699 = vpop.permute.xlu0 %1698
        %1702 = vset.pattern.permute.xlu0 0
        %1703 = vperm.xlu0 %1702, %v1565
        %v1704 = vpop.permute.xlu0 %1703
        %1707 = vset.pattern.permute.xlu0 0
        %1708 = vperm.xlu0 %1707, %v1566
        %v1709 = vpop.permute.xlu0 %1708
        %1712 = vset.pattern.permute.xlu0 0
        %1713 = vperm.xlu0 %1712, %v1567
        %v1714 = vpop.permute.xlu0 %1713
        %1717 = vset.pattern.permute.xlu0 0
        %1718 = vperm.xlu0 %1717, %v1568
        %v1719 = vpop.permute.xlu0 %1718
        %1722 = vset.pattern.permute.xlu0 0
        %1723 = vperm.xlu0 %1722, %v1569
        %v1724 = vpop.permute.xlu0 %1723
        %1727 = vset.pattern.permute.xlu0 0
        %1728 = vperm.xlu0 %1727, %v1570
        %v1729 = vpop.permute.xlu0 %1728
        %1732 = vset.pattern.permute.xlu0 0
        %1733 = vperm.xlu0 %1732, %v1571
        %v1734 = vpop.permute.xlu0 %1733
        %1737 = vset.pattern.permute.xlu0 0
        %1738 = vperm.xlu0 %1737, %v1572
        %v1739 = vpop.permute.xlu0 %1738
        %1742 = vset.pattern.permute.xlu0 0
        %1743 = vperm.xlu0 %1742, %v1573
        %v1744 = vpop.permute.xlu0 %1743
        %1747 = vset.pattern.permute.xlu0 0
        %1748 = vperm.xlu0 %1747, %v1574
        %v1749 = vpop.permute.xlu0 %1748
        %1752 = vset.pattern.permute.xlu0 0
        %1753 = vperm.xlu0 %1752, %v1575
        %v1754 = vpop.permute.xlu0 %1753
        %1757 = vset.pattern.permute.xlu0 0
        %1758 = vperm.xlu0 %1757, %v1576
        %v1759 = vpop.permute.xlu0 %1758
        %1762 = vset.pattern.permute.xlu0 0
        %1763 = vperm.xlu0 %1762, %v1577
        %v1764 = vpop.permute.xlu0 %1763
        %1767 = vset.pattern.permute.xlu0 0
        %1768 = vperm.xlu0 %1767, %v1578
        %v1769 = vpop.permute.xlu0 %1768
        %1772 = vset.pattern.permute.xlu0 0
        %1773 = vperm.xlu0 %1772, %v1579
        %v1774 = vpop.permute.xlu0 %1773
        %1777 = vset.pattern.permute.xlu0 0
        %1778 = vperm.xlu0 %1777, %v1580
        %v1779 = vpop.permute.xlu0 %1778
        %1782 = vset.pattern.permute.xlu0 0
        %1783 = vperm.xlu0 %1782, %v1581
        %v1784 = vpop.permute.xlu0 %1783
        %1787 = vset.pattern.permute.xlu0 0
        %1788 = vperm.xlu0 %1787, %v1582
        %v1789 = vpop.permute.xlu0 %1788
        %1792 = vset.pattern.permute.xlu0 0
        %1793 = vperm.xlu0 %1792, %v1583
        %v1794 = vpop.permute.xlu0 %1793
        %1797 = vset.pattern.permute.xlu0 0
        %1798 = vperm.xlu0 %1797, %v1584
        %v1799 = vpop.permute.xlu0 %1798
        %1802 = vset.pattern.permute.xlu0 0
        %1803 = vperm.xlu0 %1802, %v1585
        %v1804 = vpop.permute.xlu0 %1803
        %1807 = vset.pattern.permute.xlu0 0
        %1808 = vperm.xlu0 %1807, %v1586
        %v1809 = vpop.permute.xlu0 %1808
        %1812 = vset.pattern.permute.xlu0 0
        %1813 = vperm.xlu0 %1812, %v1587
        %v1814 = vpop.permute.xlu0 %1813
        %1817 = vset.pattern.permute.xlu0 0
        %1818 = vperm.xlu0 %1817, %v1588
        %v1819 = vpop.permute.xlu0 %1818
        %1822 = vset.pattern.permute.xlu0 0
        %1823 = vperm.xlu0 %1822, %v1589
        %v1824 = vpop.permute.xlu0 %1823
        %1827 = vset.pattern.permute.xlu0 0
        %1828 = vperm.xlu0 %1827, %v1590
        %v1829 = vpop.permute.xlu0 %1828
        %1832 = vset.pattern.permute.xlu0 0
        %1833 = vperm.xlu0 %1832, %v1591
        %v1834 = vpop.permute.xlu0 %1833
        %1837 = vset.pattern.permute.xlu0 0
        %1838 = vperm.xlu0 %1837, %v1592
        %v1839 = vpop.permute.xlu0 %1838
        %1842 = vset.pattern.permute.xlu0 0
        %1843 = vperm.xlu0 %1842, %v1593
        %v1844 = vpop.permute.xlu0 %1843
        %1847 = vset.pattern.permute.xlu0 0
        %1848 = vperm.xlu0 %1847, %v1594
        %v1849 = vpop.permute.xlu0 %1848
        %1852 = vset.pattern.permute.xlu0 0
        %1853 = vperm.xlu0 %1852, %v1595
        %v1854 = vpop.permute.xlu0 %1853
        %1857 = vset.pattern.permute.xlu0 0
        %1858 = vperm.xlu0 %1857, %v1596
        %v1859 = vpop.permute.xlu0 %1858
        %1862 = vset.pattern.permute.xlu0 0
        %1863 = vperm.xlu0 %1862, %v1597
        %v1864 = vpop.permute.xlu0 %1863
        %1867 = vset.pattern.permute.xlu0 0
        %1868 = vperm.xlu0 %1867, %v1598
        %v1869 = vpop.permute.xlu0 %1868
        %1872 = vset.pattern.permute.xlu0 0
        %1873 = vperm.xlu0 %1872, %v1599
        %v1874 = vpop.permute.xlu0 %1873
        %1877 = vset.pattern.permute.xlu0 0
        %1878 = vperm.xlu0 %1877, %v1600
        %v1879 = vpop.permute.xlu0 %1878
        %1882 = vset.pattern.permute.xlu0 0
        %1883 = vperm.xlu0 %1882, %v1601
        %v1884 = vpop.permute.xlu0 %1883
        %1887 = vset.pattern.permute.xlu0 0
        %1888 = vperm.xlu0 %1887, %v1602
        %v1889 = vpop.permute.xlu0 %1888
        %1892 = vset.pattern.permute.xlu0 0
        %1893 = vperm.xlu0 %1892, %v1603
        %v1894 = vpop.permute.xlu0 %1893
        %1897 = vset.pattern.permute.xlu0 0
        %1898 = vperm.xlu0 %1897, %v1604
        %v1899 = vpop.permute.xlu0 %1898
        %1902 = vset.pattern.permute.xlu0 0
        %1903 = vperm.xlu0 %1902, %v1605
        %v1904 = vpop.permute.xlu0 %1903
        %1907 = vset.pattern.permute.xlu0 0
        %1908 = vperm.xlu0 %1907, %v1606
        %v1909 = vpop.permute.xlu0 %1908
        %1912 = vset.pattern.permute.xlu0 0
        %1913 = vperm.xlu0 %1912, %v1607
        %v1914 = vpop.permute.xlu0 %1913
        %1917 = vset.pattern.permute.xlu0 0
        %1918 = vperm.xlu0 %1917, %v1608
        %v1919 = vpop.permute.xlu0 %1918
        %1922 = vset.pattern.permute.xlu0 0
        %1923 = vperm.xlu0 %1922, %v1609
        %v1924 = vpop.permute.xlu0 %1923
        %1927 = vset.pattern.permute.xlu0 0
        %1928 = vperm.xlu0 %1927, %v1610
        %v1929 = vpop.permute.xlu0 %1928
        %v2059 = vunpack.c.l.b16 %v1419
        %v2060 = vunpack.c.h.b16 %v1419
        %v2061 = vunpack.c.l.b16 %v1420
        %v2062 = vunpack.c.h.b16 %v1420
        %v2063 = vunpack.c.l.b16 %v1421
        %v2064 = vunpack.c.h.b16 %v1421
        %v2065 = vunpack.c.l.b16 %v1422
        %v2066 = vunpack.c.h.b16 %v1422
        %v2067 = vunpack.c.l.b16 %v1423
        %v2068 = vunpack.c.h.b16 %v1423
        %v2069 = vunpack.c.l.b16 %v1424
        %v2070 = vunpack.c.h.b16 %v1424
        %v2071 = vunpack.c.l.b16 %v1425
        %v2072 = vunpack.c.h.b16 %v1425
        %v2073 = vunpack.c.l.b16 %v1426
        %v2074 = vunpack.c.h.b16 %v1426
        %v2075 = vunpack.c.l.b16 %v1427
        %v2076 = vunpack.c.h.b16 %v1427
        %v2077 = vunpack.c.l.b16 %v1428
        %v2078 = vunpack.c.h.b16 %v1428
        %v2079 = vunpack.c.l.b16 %v1429
        %v2080 = vunpack.c.h.b16 %v1429
        %v2081 = vunpack.c.l.b16 %v1430
        %v2082 = vunpack.c.h.b16 %v1430
        %v2083 = vunpack.c.l.b16 %v1431
        %v2084 = vunpack.c.h.b16 %v1431
        %v2085 = vunpack.c.l.b16 %v1432
        %v2086 = vunpack.c.h.b16 %v1432
        %v2087 = vunpack.c.l.b16 %v1433
        %v2088 = vunpack.c.h.b16 %v1433
        %v2089 = vunpack.c.l.b16 %v1434
        %v2090 = vunpack.c.h.b16 %v1434
        %v2091 = vunpack.c.l.b16 %v1435
        %v2092 = vunpack.c.h.b16 %v1435
        %v2093 = vunpack.c.l.b16 %v1436
        %v2094 = vunpack.c.h.b16 %v1436
        %v2095 = vunpack.c.l.b16 %v1437
        %v2096 = vunpack.c.h.b16 %v1437
        %v2097 = vunpack.c.l.b16 %v1438
        %v2098 = vunpack.c.h.b16 %v1438
        %v2099 = vunpack.c.l.b16 %v1439
        %v2100 = vunpack.c.h.b16 %v1439
        %v2101 = vunpack.c.l.b16 %v1440
        %v2102 = vunpack.c.h.b16 %v1440
        %v2103 = vunpack.c.l.b16 %v1441
        %v2104 = vunpack.c.h.b16 %v1441
        %v2105 = vunpack.c.l.b16 %v1442
        %v2106 = vunpack.c.h.b16 %v1442
        %v2107 = vunpack.c.l.b16 %v1443
        %v2108 = vunpack.c.h.b16 %v1443
        %v2109 = vunpack.c.l.b16 %v1444
        %v2110 = vunpack.c.h.b16 %v1444
        %v2111 = vunpack.c.l.b16 %v1445
        %v2112 = vunpack.c.h.b16 %v1445
        %v2113 = vunpack.c.l.b16 %v1446
        %v2114 = vunpack.c.h.b16 %v1446
        %v2115 = vunpack.c.l.b16 %v1447
        %v2116 = vunpack.c.h.b16 %v1447
        %v2117 = vunpack.c.l.b16 %v1448
        %v2118 = vunpack.c.h.b16 %v1448
        %v2119 = vunpack.c.l.b16 %v1449
        %v2120 = vunpack.c.h.b16 %v1449
        %v2121 = vunpack.c.l.b16 %v1450
        %v2122 = vunpack.c.h.b16 %v1450
        %v2123 = vunpack.c.l.b16 %v1451
        %v2124 = vunpack.c.h.b16 %v1451
        %v2125 = vunpack.c.l.b16 %v1452
        %v2126 = vunpack.c.h.b16 %v1452
        %v2127 = vunpack.c.l.b16 %v1453
        %v2128 = vunpack.c.h.b16 %v1453
        %v2129 = vunpack.c.l.b16 %v1454
        %v2130 = vunpack.c.h.b16 %v1454
        %v2131 = vunpack.c.l.b16 %v1455
        %v2132 = vunpack.c.h.b16 %v1455
        %v2133 = vunpack.c.l.b16 %v1456
        %v2134 = vunpack.c.h.b16 %v1456
        %v2135 = vunpack.c.l.b16 %v1457
        %v2136 = vunpack.c.h.b16 %v1457
        %v2137 = vunpack.c.l.b16 %v1458
        %v2138 = vunpack.c.h.b16 %v1458
        %v2139 = vunpack.c.l.b16 %v1459
        %v2140 = vunpack.c.h.b16 %v1459
        %v2141 = vunpack.c.l.b16 %v1460
        %v2142 = vunpack.c.h.b16 %v1460
        %v2143 = vunpack.c.l.b16 %v1461
        %v2144 = vunpack.c.h.b16 %v1461
        %v2145 = vunpack.c.l.b16 %v1462
        %v2146 = vunpack.c.h.b16 %v1462
        %v2147 = vunpack.c.l.b16 %v1463
        %v2148 = vunpack.c.h.b16 %v1463
        %v2149 = vunpack.c.l.b16 %v1464
        %v2150 = vunpack.c.h.b16 %v1464
        %v2151 = vunpack.c.l.b16 %v1465
        %v2152 = vunpack.c.h.b16 %v1465
        %v2153 = vunpack.c.l.b16 %v1466
        %v2154 = vunpack.c.h.b16 %v1466
        %v2155 = vunpack.c.l.b16 %v1467
        %v2156 = vunpack.c.h.b16 %v1467
        %v2157 = vunpack.c.l.b16 %v1468
        %v2158 = vunpack.c.h.b16 %v1468
        %v2159 = vunpack.c.l.b16 %v1469
        %v2160 = vunpack.c.h.b16 %v1469
        %v2161 = vunpack.c.l.b16 %v1470
        %v2162 = vunpack.c.h.b16 %v1470
        %v2163 = vunpack.c.l.b16 %v1471
        %v2164 = vunpack.c.h.b16 %v1471
        %v2165 = vunpack.c.l.b16 %v1472
        %v2166 = vunpack.c.h.b16 %v1472
        %v2167 = vunpack.c.l.b16 %v1473
        %v2168 = vunpack.c.h.b16 %v1473
        %v2169 = vunpack.c.l.b16 %v1474
        %v2170 = vunpack.c.h.b16 %v1474
        %v2171 = vunpack.c.l.b16 %v1475
        %v2172 = vunpack.c.h.b16 %v1475
        %v2173 = vunpack.c.l.b16 %v1476
        %v2174 = vunpack.c.h.b16 %v1476
        %v2175 = vunpack.c.l.b16 %v1477
        %v2176 = vunpack.c.h.b16 %v1477
        %v2177 = vunpack.c.l.b16 %v1478
        %v2178 = vunpack.c.h.b16 %v1478
        %v2179 = vunpack.c.l.b16 %v1479
        %v2180 = vunpack.c.h.b16 %v1479
        %v2181 = vunpack.c.l.b16 %v1480
        %v2182 = vunpack.c.h.b16 %v1480
        %v2183 = vunpack.c.l.b16 %v1481
        %v2184 = vunpack.c.h.b16 %v1481
        %v2185 = vunpack.c.l.b16 %v1482
        %v2186 = vunpack.c.h.b16 %v1482
        %v2187 = vunpack.c.l.b16 %v1483
        %v2188 = vunpack.c.h.b16 %v1483
        %v2189 = vunpack.c.l.b16 %v1484
        %v2190 = vunpack.c.h.b16 %v1484
        %v2191 = vunpack.c.l.b16 %v1485
        %v2192 = vunpack.c.h.b16 %v1485
        %v2193 = vunpack.c.l.b16 %v1486
        %v2194 = vunpack.c.h.b16 %v1486
        %v2195 = vunpack.c.l.b16 %v1487
        %v2196 = vunpack.c.h.b16 %v1487
        %v2197 = vunpack.c.l.b16 %v1488
        %v2198 = vunpack.c.h.b16 %v1488
        %v2199 = vunpack.c.l.b16 %v1489
        %v2200 = vunpack.c.h.b16 %v1489
        %v2201 = vunpack.c.l.b16 %v1490
        %v2202 = vunpack.c.h.b16 %v1490
        %v2203 = vunpack.c.l.b16 %v1491
        %v2204 = vunpack.c.h.b16 %v1491
        %v2205 = vunpack.c.l.b16 %v1492
        %v2206 = vunpack.c.h.b16 %v1492
        %v2207 = vunpack.c.l.b16 %v1493
        %v2208 = vunpack.c.h.b16 %v1493
        %v2209 = vunpack.c.l.b16 %v1494
        %v2210 = vunpack.c.h.b16 %v1494
        %v2211 = vunpack.c.l.b16 %v1495
        %v2212 = vunpack.c.h.b16 %v1495
        %v2213 = vunpack.c.l.b16 %v1496
        %v2214 = vunpack.c.h.b16 %v1496
        %v2215 = vunpack.c.l.b16 %v1497
        %v2216 = vunpack.c.h.b16 %v1497
        %v2217 = vunpack.c.l.b16 %v1498
        %v2218 = vunpack.c.h.b16 %v1498
        %v2219 = vunpack.c.l.b16 %v1499
        %v2220 = vunpack.c.h.b16 %v1499
        %v2221 = vunpack.c.l.b16 %v1500
        %v2222 = vunpack.c.h.b16 %v1500
        %v2223 = vunpack.c.l.b16 %v1501
        %v2224 = vunpack.c.h.b16 %v1501
        %v2225 = vunpack.c.l.b16 %v1502
        %v2226 = vunpack.c.h.b16 %v1502
        %v2227 = vunpack.c.l.b16 %v1503
        %v2228 = vunpack.c.h.b16 %v1503
        %v2229 = vunpack.c.l.b16 %v1504
        %v2230 = vunpack.c.h.b16 %v1504
        %v2231 = vunpack.c.l.b16 %v1505
        %v2232 = vunpack.c.h.b16 %v1505
        %v2233 = vunpack.c.l.b16 %v1506
        %v2234 = vunpack.c.h.b16 %v1506
        %v2235 = vunpack.c.l.b16 %v1507
        %v2236 = vunpack.c.h.b16 %v1507
        %v2237 = vunpack.c.l.b16 %v1508
        %v2238 = vunpack.c.h.b16 %v1508
        %v2239 = vunpack.c.l.b16 %v1509
        %v2240 = vunpack.c.h.b16 %v1509
        %v2241 = vunpack.c.l.b16 %v1510
        %v2242 = vunpack.c.h.b16 %v1510
        %v2243 = vunpack.c.l.b16 %v1511
        %v2244 = vunpack.c.h.b16 %v1511
        %v2245 = vunpack.c.l.b16 %v1512
        %v2246 = vunpack.c.h.b16 %v1512
        %v2247 = vunpack.c.l.b16 %v1513
        %v2248 = vunpack.c.h.b16 %v1513
        %v2249 = vunpack.c.l.b16 %v1514
        %v2250 = vunpack.c.h.b16 %v1514
        %v2251 = vunpack.c.l.b16 %v1515
        %v2252 = vunpack.c.h.b16 %v1515
        %v2253 = vunpack.c.l.b16 %v1516
        %v2254 = vunpack.c.h.b16 %v1516
        %v2255 = vunpack.c.l.b16 %v1517
        %v2256 = vunpack.c.h.b16 %v1517
        %v2257 = vunpack.c.l.b16 %v1518
        %v2258 = vunpack.c.h.b16 %v1518
        %v2259 = vunpack.c.l.b16 %v1519
        %v2260 = vunpack.c.h.b16 %v1519
        %v2261 = vunpack.c.l.b16 %v1520
        %v2262 = vunpack.c.h.b16 %v1520
        %v2263 = vunpack.c.l.b16 %v1521
        %v2264 = vunpack.c.h.b16 %v1521
        %v2265 = vunpack.c.l.b16 %v1522
        %v2266 = vunpack.c.h.b16 %v1522
        %v2267 = vunpack.c.l.b16 %v1523
        %v2268 = vunpack.c.h.b16 %v1523
        %v2269 = vunpack.c.l.b16 %v1524
        %v2270 = vunpack.c.h.b16 %v1524
        %v2271 = vunpack.c.l.b16 %v1525
        %v2272 = vunpack.c.h.b16 %v1525
        %v2273 = vunpack.c.l.b16 %v1526
        %v2274 = vunpack.c.h.b16 %v1526
        %v2275 = vunpack.c.l.b16 %v1527
        %v2276 = vunpack.c.h.b16 %v1527
        %v2277 = vunpack.c.l.b16 %v1528
        %v2278 = vunpack.c.h.b16 %v1528
        %v2279 = vunpack.c.l.b16 %v1529
        %v2280 = vunpack.c.h.b16 %v1529
        %v2281 = vunpack.c.l.b16 %v1530
        %v2282 = vunpack.c.h.b16 %v1530
        %v2283 = vunpack.c.l.b16 %v1531
        %v2284 = vunpack.c.h.b16 %v1531
        %v2285 = vunpack.c.l.b16 %v1532
        %v2286 = vunpack.c.h.b16 %v1532
        %v2287 = vunpack.c.l.b16 %v1533
        %v2288 = vunpack.c.h.b16 %v1533
        %v2289 = vunpack.c.l.b16 %v1534
        %v2290 = vunpack.c.h.b16 %v1534
        %v2291 = vunpack.c.l.b16 %v1535
        %v2292 = vunpack.c.h.b16 %v1535
        %v2293 = vunpack.c.l.b16 %v1536
        %v2294 = vunpack.c.h.b16 %v1536
        %v2295 = vunpack.c.l.b16 %v1537
        %v2296 = vunpack.c.h.b16 %v1537
        %v2297 = vunpack.c.l.b16 %v1538
        %v2298 = vunpack.c.h.b16 %v1538
        %v2299 = vunpack.c.l.b16 %v1539
        %v2300 = vunpack.c.h.b16 %v1539
        %v2301 = vunpack.c.l.b16 %v1540
        %v2302 = vunpack.c.h.b16 %v1540
        %v2303 = vunpack.c.l.b16 %v1541
        %v2304 = vunpack.c.h.b16 %v1541
        %v2305 = vunpack.c.l.b16 %v1542
        %v2306 = vunpack.c.h.b16 %v1542
        %v2307 = vunpack.c.l.b16 %v1543
        %v2308 = vunpack.c.h.b16 %v1543
        %v2309 = vunpack.c.l.b16 %v1544
        %v2310 = vunpack.c.h.b16 %v1544
        %v2311 = vunpack.c.l.b16 %v1545
        %v2312 = vunpack.c.h.b16 %v1545
        %v2313 = vunpack.c.l.b16 %v1546
        %v2314 = vunpack.c.h.b16 %v1546
        %v2315 = vpack.c.b16 %v2063, %v2059
        %v2316 = vpack.c.b16 %v2064, %v2060
        %v2317 = vpack.c.b16 %v2065, %v2061
        %v2318 = vpack.c.b16 %v2066, %v2062
        %v2319 = vpack.c.b16 %v2071, %v2067
        %v2320 = vpack.c.b16 %v2072, %v2068
        %v2321 = vpack.c.b16 %v2073, %v2069
        %v2322 = vpack.c.b16 %v2074, %v2070
        %v2323 = vpack.c.b16 %v2079, %v2075
        %v2324 = vpack.c.b16 %v2080, %v2076
        %v2325 = vpack.c.b16 %v2081, %v2077
        %v2326 = vpack.c.b16 %v2082, %v2078
        %v2327 = vpack.c.b16 %v2087, %v2083
        %v2328 = vpack.c.b16 %v2088, %v2084
        %v2329 = vpack.c.b16 %v2089, %v2085
        %v2330 = vpack.c.b16 %v2090, %v2086
        %v2331 = vpack.c.b16 %v2095, %v2091
        %v2332 = vpack.c.b16 %v2096, %v2092
        %v2333 = vpack.c.b16 %v2097, %v2093
        %v2334 = vpack.c.b16 %v2098, %v2094
        %v2335 = vpack.c.b16 %v2103, %v2099
        %v2336 = vpack.c.b16 %v2104, %v2100
        %v2337 = vpack.c.b16 %v2105, %v2101
        %v2338 = vpack.c.b16 %v2106, %v2102
        %v2339 = vpack.c.b16 %v2111, %v2107
        %v2340 = vpack.c.b16 %v2112, %v2108
        %v2341 = vpack.c.b16 %v2113, %v2109
        %v2342 = vpack.c.b16 %v2114, %v2110
        %v2343 = vpack.c.b16 %v2119, %v2115
        %v2344 = vpack.c.b16 %v2120, %v2116
        %v2345 = vpack.c.b16 %v2121, %v2117
        %v2346 = vpack.c.b16 %v2122, %v2118
        %v2347 = vpack.c.b16 %v2127, %v2123
        %v2348 = vpack.c.b16 %v2128, %v2124
        %v2349 = vpack.c.b16 %v2129, %v2125
        %v2350 = vpack.c.b16 %v2130, %v2126
        %v2351 = vpack.c.b16 %v2135, %v2131
        %v2352 = vpack.c.b16 %v2136, %v2132
        %v2353 = vpack.c.b16 %v2137, %v2133
        %v2354 = vpack.c.b16 %v2138, %v2134
        %v2355 = vpack.c.b16 %v2143, %v2139
        %v2356 = vpack.c.b16 %v2144, %v2140
        %v2357 = vpack.c.b16 %v2145, %v2141
        %v2358 = vpack.c.b16 %v2146, %v2142
        %v2359 = vpack.c.b16 %v2151, %v2147
        %v2360 = vpack.c.b16 %v2152, %v2148
        %v2361 = vpack.c.b16 %v2153, %v2149
        %v2362 = vpack.c.b16 %v2154, %v2150
        %v2363 = vpack.c.b16 %v2159, %v2155
        %v2364 = vpack.c.b16 %v2160, %v2156
        %v2365 = vpack.c.b16 %v2161, %v2157
        %v2366 = vpack.c.b16 %v2162, %v2158
        %v2367 = vpack.c.b16 %v2167, %v2163
        %v2368 = vpack.c.b16 %v2168, %v2164
        %v2369 = vpack.c.b16 %v2169, %v2165
        %v2370 = vpack.c.b16 %v2170, %v2166
        %v2371 = vpack.c.b16 %v2175, %v2171
        %v2372 = vpack.c.b16 %v2176, %v2172
        %v2373 = vpack.c.b16 %v2177, %v2173
        %v2374 = vpack.c.b16 %v2178, %v2174
        %v2375 = vpack.c.b16 %v2183, %v2179
        %v2376 = vpack.c.b16 %v2184, %v2180
        %v2377 = vpack.c.b16 %v2185, %v2181
        %v2378 = vpack.c.b16 %v2186, %v2182
        %v2379 = vpack.c.b16 %v2191, %v2187
        %v2380 = vpack.c.b16 %v2192, %v2188
        %v2381 = vpack.c.b16 %v2193, %v2189
        %v2382 = vpack.c.b16 %v2194, %v2190
        %v2383 = vpack.c.b16 %v2199, %v2195
        %v2384 = vpack.c.b16 %v2200, %v2196
        %v2385 = vpack.c.b16 %v2201, %v2197
        %v2386 = vpack.c.b16 %v2202, %v2198
        %v2387 = vpack.c.b16 %v2207, %v2203
        %v2388 = vpack.c.b16 %v2208, %v2204
        %v2389 = vpack.c.b16 %v2209, %v2205
        %v2390 = vpack.c.b16 %v2210, %v2206
        %v2391 = vpack.c.b16 %v2215, %v2211
        %v2392 = vpack.c.b16 %v2216, %v2212
        %v2393 = vpack.c.b16 %v2217, %v2213
        %v2394 = vpack.c.b16 %v2218, %v2214
        %v2395 = vpack.c.b16 %v2223, %v2219
        %v2396 = vpack.c.b16 %v2224, %v2220
        %v2397 = vpack.c.b16 %v2225, %v2221
        %v2398 = vpack.c.b16 %v2226, %v2222
        %v2399 = vpack.c.b16 %v2231, %v2227
        %v2400 = vpack.c.b16 %v2232, %v2228
        %v2401 = vpack.c.b16 %v2233, %v2229
        %v2402 = vpack.c.b16 %v2234, %v2230
        %v2403 = vpack.c.b16 %v2239, %v2235
        %v2404 = vpack.c.b16 %v2240, %v2236
        %v2405 = vpack.c.b16 %v2241, %v2237
        %v2406 = vpack.c.b16 %v2242, %v2238
        %v2407 = vpack.c.b16 %v2247, %v2243
        %v2408 = vpack.c.b16 %v2248, %v2244
        %v2409 = vpack.c.b16 %v2249, %v2245
        %v2410 = vpack.c.b16 %v2250, %v2246
        %v2411 = vpack.c.b16 %v2255, %v2251
        %v2412 = vpack.c.b16 %v2256, %v2252
        %v2413 = vpack.c.b16 %v2257, %v2253
        %v2414 = vpack.c.b16 %v2258, %v2254
        %v2415 = vpack.c.b16 %v2263, %v2259
        %v2416 = vpack.c.b16 %v2264, %v2260
        %v2417 = vpack.c.b16 %v2265, %v2261
        %v2418 = vpack.c.b16 %v2266, %v2262
        %v2419 = vpack.c.b16 %v2271, %v2267
        %v2420 = vpack.c.b16 %v2272, %v2268
        %v2421 = vpack.c.b16 %v2273, %v2269
        %v2422 = vpack.c.b16 %v2274, %v2270
        %v2423 = vpack.c.b16 %v2279, %v2275
        %v2424 = vpack.c.b16 %v2280, %v2276
        %v2425 = vpack.c.b16 %v2281, %v2277
        %v2426 = vpack.c.b16 %v2282, %v2278
        %v2427 = vpack.c.b16 %v2287, %v2283
        %v2428 = vpack.c.b16 %v2288, %v2284
        %v2429 = vpack.c.b16 %v2289, %v2285
        %v2430 = vpack.c.b16 %v2290, %v2286
        %v2431 = vpack.c.b16 %v2295, %v2291
        %v2432 = vpack.c.b16 %v2296, %v2292
        %v2433 = vpack.c.b16 %v2297, %v2293
        %v2434 = vpack.c.b16 %v2298, %v2294
        %v2435 = vpack.c.b16 %v2303, %v2299
        %v2436 = vpack.c.b16 %v2304, %v2300
        %v2437 = vpack.c.b16 %v2305, %v2301
        %v2438 = vpack.c.b16 %v2306, %v2302
        %v2439 = vpack.c.b16 %v2311, %v2307
        %v2440 = vpack.c.b16 %v2312, %v2308
        %v2441 = vpack.c.b16 %v2313, %v2309
        %v2442 = vpack.c.b16 %v2314, %v2310
        %2571 = vmatprep.subr.bf16.mxu0 0
        %2572 = vmatpush1.bf16.msra.mxu0 %v1394
        %2573 = vmatprep.subr.bf16.mxu0 0
        %2574 = vmatpush1.bf16.msra.mxu0 %v1393
        %2575 = vmatprep.subr.bf16.mxu0 0
        %2576 = vmatpush1.bf16.msra.mxu0 %v1392
        %2577 = vmatprep.subr.bf16.mxu0 0
        %2578 = vmatpush1.bf16.msra.mxu0 %v1391
        %2579 = vmatprep.subr.bf16.mxu0 0
        %2580 = vmatpush1.bf16.msra.mxu0 %v1390
        %2581 = vmatprep.subr.bf16.mxu0 0
        %2582 = vmatpush1.bf16.msra.mxu0 %v1389
        %2583 = vmatprep.subr.bf16.mxu0 0
        %2584 = vmatpush1.bf16.msra.mxu0 %v1388
        %2585 = vmatprep.subr.bf16.mxu0 0
        %2586 = vmatpush1.bf16.msra.mxu0 %v1387
        %2587 = vmatprep.subr.bf16.mxu0 0
        %2588 = vmatpush2.bf16.msra.mxu0 %v1402
        %2589 = vmatprep.subr.bf16.mxu0 0
        %2590 = vmatpush2.bf16.msra.mxu0 %v1401
        %2591 = vmatprep.subr.bf16.mxu0 0
        %2592 = vmatpush2.bf16.msra.mxu0 %v1400
        %2593 = vmatprep.subr.bf16.mxu0 0
        %2594 = vmatpush2.bf16.msra.mxu0 %v1399
        %2595 = vmatprep.subr.bf16.mxu0 0
        %2596 = vmatpush2.bf16.msra.mxu0 %v1398
        %2597 = vmatprep.subr.bf16.mxu0 0
        %2598 = vmatpush2.bf16.msra.mxu0 %v1397
        %2599 = vmatprep.subr.bf16.mxu0 0
        %2600 = vmatpush2.bf16.msra.mxu0 %v1396
        %2601 = vmatprep.subr.bf16.mxu0 0
        %2602 = vmatpush2.bf16.msra.mxu0 %v1395
        %2603 = vmatprep.mubr.bf16.mxu0 %v2316
        %2604 = vmatmul.mubr.bf16.gmra.mxu0 %v2315
        %v2605 = vpop.f32.mrf.mxu0
        %v2606 = vadd.f32 %v1614, %v2605
        %v2607 = vpop.f32.mrf.mxu0
        %v2608 = vpop.f32.mrf.mxu0
        %v2609 = vadd.f32 %v1619, %v2608
        %v2610 = vpop.f32.mrf.mxu0
        %2611 = vmatprep.mubr.bf16.mxu0 %v2320
        %2612 = vmatmul.mubr.bf16.gmra.mxu0 %v2319
        %v2613 = vpop.f32.mrf.mxu0
        %v2614 = vadd.f32 %v1624, %v2613
        %v2615 = vpop.f32.mrf.mxu0
        %v2616 = vpop.f32.mrf.mxu0
        %v2617 = vadd.f32 %v1629, %v2616
        %v2618 = vpop.f32.mrf.mxu0
        %2619 = vmatprep.mubr.bf16.mxu0 %v2324
        %2620 = vmatmul.mubr.bf16.gmra.mxu0 %v2323
        %v2621 = vpop.f32.mrf.mxu0
        %v2622 = vadd.f32 %v1634, %v2621
        %v2623 = vpop.f32.mrf.mxu0
        %v2624 = vpop.f32.mrf.mxu0
        %v2625 = vadd.f32 %v1639, %v2624
        %v2626 = vpop.f32.mrf.mxu0
        %2627 = vmatprep.mubr.bf16.mxu0 %v2328
        %2628 = vmatmul.mubr.bf16.gmra.mxu0 %v2327
        %v2629 = vpop.f32.mrf.mxu0
        %v2630 = vadd.f32 %v1644, %v2629
        %v2631 = vpop.f32.mrf.mxu0
        %v2632 = vpop.f32.mrf.mxu0
        %v2633 = vadd.f32 %v1649, %v2632
        %v2634 = vpop.f32.mrf.mxu0
        %2635 = vmatprep.mubr.bf16.mxu0 %v2332
        %2636 = vmatmul.mubr.bf16.gmra.mxu0 %v2331
        %v2637 = vpop.f32.mrf.mxu0
        %v2638 = vadd.f32 %v1654, %v2637
        %v2639 = vpop.f32.mrf.mxu0
        %v2640 = vpop.f32.mrf.mxu0
        %v2641 = vadd.f32 %v1659, %v2640
        %v2642 = vpop.f32.mrf.mxu0
        %2643 = vmatprep.mubr.bf16.mxu0 %v2336
        %2644 = vmatmul.mubr.bf16.gmra.mxu0 %v2335
        %v2645 = vpop.f32.mrf.mxu0
        %v2646 = vadd.f32 %v1664, %v2645
        %v2647 = vpop.f32.mrf.mxu0
        %v2648 = vpop.f32.mrf.mxu0
        %v2649 = vadd.f32 %v1669, %v2648
        %v2650 = vpop.f32.mrf.mxu0
        %2651 = vmatprep.mubr.bf16.mxu0 %v2340
        %2652 = vmatmul.mubr.bf16.gmra.mxu0 %v2339
        %v2653 = vpop.f32.mrf.mxu0
        %v2654 = vadd.f32 %v1674, %v2653
        %v2655 = vpop.f32.mrf.mxu0
        %v2656 = vpop.f32.mrf.mxu0
        %v2657 = vadd.f32 %v1679, %v2656
        %v2658 = vpop.f32.mrf.mxu0
        %2659 = vmatprep.mubr.bf16.mxu0 %v2344
        %2660 = vmatmul.mubr.bf16.gmra.mxu0 %v2343
        %v2661 = vpop.f32.mrf.mxu0
        %v2662 = vadd.f32 %v1684, %v2661
        %v2663 = vpop.f32.mrf.mxu0
        %v2664 = vpop.f32.mrf.mxu0
        %v2665 = vadd.f32 %v1689, %v2664
        %v2666 = vpop.f32.mrf.mxu0
        %2667 = vmatprep.mubr.bf16.mxu0 %v2348
        %2668 = vmatmul.mubr.bf16.gmra.mxu0 %v2347
        %v2669 = vpop.f32.mrf.mxu0
        %v2670 = vadd.f32 %v1694, %v2669
        %v2671 = vpop.f32.mrf.mxu0
        %v2672 = vpop.f32.mrf.mxu0
        %v2673 = vadd.f32 %v1699, %v2672
        %v2674 = vpop.f32.mrf.mxu0
        %2675 = vmatprep.mubr.bf16.mxu0 %v2352
        %2676 = vmatmul.mubr.bf16.gmra.mxu0 %v2351
        %v2677 = vpop.f32.mrf.mxu0
        %v2678 = vadd.f32 %v1704, %v2677
        %v2679 = vpop.f32.mrf.mxu0
        %v2680 = vpop.f32.mrf.mxu0
        %v2681 = vadd.f32 %v1709, %v2680
        %v2682 = vpop.f32.mrf.mxu0
        %2683 = vmatprep.mubr.bf16.mxu0 %v2356
        %2684 = vmatmul.mubr.bf16.gmra.mxu0 %v2355
        %v2685 = vpop.f32.mrf.mxu0
        %v2686 = vadd.f32 %v1714, %v2685
        %v2687 = vpop.f32.mrf.mxu0
        %v2688 = vpop.f32.mrf.mxu0
        %v2689 = vadd.f32 %v1719, %v2688
        %v2690 = vpop.f32.mrf.mxu0
        %2691 = vmatprep.mubr.bf16.mxu0 %v2360
        %2692 = vmatmul.mubr.bf16.gmra.mxu0 %v2359
        %v2693 = vpop.f32.mrf.mxu0
        %v2694 = vadd.f32 %v1724, %v2693
        %v2695 = vpop.f32.mrf.mxu0
        %v2696 = vpop.f32.mrf.mxu0
        %v2697 = vadd.f32 %v1729, %v2696
        %v2698 = vpop.f32.mrf.mxu0
        %2699 = vmatprep.mubr.bf16.mxu0 %v2364
        %2700 = vmatmul.mubr.bf16.gmra.mxu0 %v2363
        %v2701 = vpop.f32.mrf.mxu0
        %v2702 = vadd.f32 %v1734, %v2701
        %v2703 = vpop.f32.mrf.mxu0
        %v2704 = vpop.f32.mrf.mxu0
        %v2705 = vadd.f32 %v1739, %v2704
        %v2706 = vpop.f32.mrf.mxu0
        %2707 = vmatprep.mubr.bf16.mxu0 %v2368
        %2708 = vmatmul.mubr.bf16.gmra.mxu0 %v2367
        %v2709 = vpop.f32.mrf.mxu0
        %v2710 = vadd.f32 %v1744, %v2709
        %v2711 = vpop.f32.mrf.mxu0
        %v2712 = vpop.f32.mrf.mxu0
        %v2713 = vadd.f32 %v1749, %v2712
        %v2714 = vpop.f32.mrf.mxu0
        %2715 = vmatprep.mubr.bf16.mxu0 %v2372
        %2716 = vmatmul.mubr.bf16.gmra.mxu0 %v2371
        %v2717 = vpop.f32.mrf.mxu0
        %v2718 = vadd.f32 %v1754, %v2717
        %v2719 = vpop.f32.mrf.mxu0
        %v2720 = vpop.f32.mrf.mxu0
        %v2721 = vadd.f32 %v1759, %v2720
        %v2722 = vpop.f32.mrf.mxu0
        %2723 = vmatprep.mubr.bf16.mxu0 %v2376
        %2724 = vmatmul.mubr.bf16.gmra.mxu0 %v2375
        %v2725 = vpop.f32.mrf.mxu0
        %v2726 = vadd.f32 %v1764, %v2725
        %v2727 = vpop.f32.mrf.mxu0
        %v2728 = vpop.f32.mrf.mxu0
        %v2729 = vadd.f32 %v1769, %v2728
        %v2730 = vpop.f32.mrf.mxu0
        %2731 = vmatprep.mubr.bf16.mxu0 %v2380
        %2732 = vmatmul.mubr.bf16.gmra.mxu0 %v2379
        %v2733 = vpop.f32.mrf.mxu0
        %v2734 = vadd.f32 %v1774, %v2733
        %v2735 = vpop.f32.mrf.mxu0
        %v2736 = vpop.f32.mrf.mxu0
        %v2737 = vadd.f32 %v1779, %v2736
        %v2738 = vpop.f32.mrf.mxu0
        %2739 = vmatprep.mubr.bf16.mxu0 %v2384
        %2740 = vmatmul.mubr.bf16.gmra.mxu0 %v2383
        %v2741 = vpop.f32.mrf.mxu0
        %v2742 = vadd.f32 %v1784, %v2741
        %v2743 = vpop.f32.mrf.mxu0
        %v2744 = vpop.f32.mrf.mxu0
        %v2745 = vadd.f32 %v1789, %v2744
        %v2746 = vpop.f32.mrf.mxu0
        %2747 = vmatprep.mubr.bf16.mxu0 %v2388
        %2748 = vmatmul.mubr.bf16.gmra.mxu0 %v2387
        %v2749 = vpop.f32.mrf.mxu0
        %v2750 = vadd.f32 %v1794, %v2749
        %v2751 = vpop.f32.mrf.mxu0
        %v2752 = vpop.f32.mrf.mxu0
        %v2753 = vadd.f32 %v1799, %v2752
        %v2754 = vpop.f32.mrf.mxu0
        %2755 = vmatprep.mubr.bf16.mxu0 %v2392
        %2756 = vmatmul.mubr.bf16.gmra.mxu0 %v2391
        %v2757 = vpop.f32.mrf.mxu0
        %v2758 = vadd.f32 %v1804, %v2757
        %v2759 = vpop.f32.mrf.mxu0
        %v2760 = vpop.f32.mrf.mxu0
        %v2761 = vadd.f32 %v1809, %v2760
        %v2762 = vpop.f32.mrf.mxu0
        %2763 = vmatprep.mubr.bf16.mxu0 %v2396
        %2764 = vmatmul.mubr.bf16.gmra.mxu0 %v2395
        %v2765 = vpop.f32.mrf.mxu0
        %v2766 = vadd.f32 %v1814, %v2765
        %v2767 = vpop.f32.mrf.mxu0
        %v2768 = vpop.f32.mrf.mxu0
        %v2769 = vadd.f32 %v1819, %v2768
        %v2770 = vpop.f32.mrf.mxu0
        %2771 = vmatprep.mubr.bf16.mxu0 %v2400
        %2772 = vmatmul.mubr.bf16.gmra.mxu0 %v2399
        %v2773 = vpop.f32.mrf.mxu0
        %v2774 = vadd.f32 %v1824, %v2773
        %v2775 = vpop.f32.mrf.mxu0
        %v2776 = vpop.f32.mrf.mxu0
        %v2777 = vadd.f32 %v1829, %v2776
        %v2778 = vpop.f32.mrf.mxu0
        %2779 = vmatprep.mubr.bf16.mxu0 %v2404
        %2780 = vmatmul.mubr.bf16.gmra.mxu0 %v2403
        %v2781 = vpop.f32.mrf.mxu0
        %v2782 = vadd.f32 %v1834, %v2781
        %v2783 = vpop.f32.mrf.mxu0
        %v2784 = vpop.f32.mrf.mxu0
        %v2785 = vadd.f32 %v1839, %v2784
        %v2786 = vpop.f32.mrf.mxu0
        %2787 = vmatprep.mubr.bf16.mxu0 %v2408
        %2788 = vmatmul.mubr.bf16.gmra.mxu0 %v2407
        %v2789 = vpop.f32.mrf.mxu0
        %v2790 = vadd.f32 %v1844, %v2789
        %v2791 = vpop.f32.mrf.mxu0
        %v2792 = vpop.f32.mrf.mxu0
        %v2793 = vadd.f32 %v1849, %v2792
        %v2794 = vpop.f32.mrf.mxu0
        %2795 = vmatprep.mubr.bf16.mxu0 %v2412
        %2796 = vmatmul.mubr.bf16.gmra.mxu0 %v2411
        %v2797 = vpop.f32.mrf.mxu0
        %v2798 = vadd.f32 %v1854, %v2797
        %v2799 = vpop.f32.mrf.mxu0
        %v2800 = vpop.f32.mrf.mxu0
        %v2801 = vadd.f32 %v1859, %v2800
        %v2802 = vpop.f32.mrf.mxu0
        %2803 = vmatprep.mubr.bf16.mxu0 %v2416
        %2804 = vmatmul.mubr.bf16.gmra.mxu0 %v2415
        %v2805 = vpop.f32.mrf.mxu0
        %v2806 = vadd.f32 %v1864, %v2805
        %v2807 = vpop.f32.mrf.mxu0
        %v2808 = vpop.f32.mrf.mxu0
        %v2809 = vadd.f32 %v1869, %v2808
        %v2810 = vpop.f32.mrf.mxu0
        %2811 = vmatprep.mubr.bf16.mxu0 %v2420
        %2812 = vmatmul.mubr.bf16.gmra.mxu0 %v2419
        %v2813 = vpop.f32.mrf.mxu0
        %v2814 = vadd.f32 %v1874, %v2813
        %v2815 = vpop.f32.mrf.mxu0
        %v2816 = vpop.f32.mrf.mxu0
        %v2817 = vadd.f32 %v1879, %v2816
        %v2818 = vpop.f32.mrf.mxu0
        %2819 = vmatprep.mubr.bf16.mxu0 %v2424
        %2820 = vmatmul.mubr.bf16.gmra.mxu0 %v2423
        %v2821 = vpop.f32.mrf.mxu0
        %v2822 = vadd.f32 %v1884, %v2821
        %v2823 = vpop.f32.mrf.mxu0
        %v2824 = vpop.f32.mrf.mxu0
        %v2825 = vadd.f32 %v1889, %v2824
        %v2826 = vpop.f32.mrf.mxu0
        %2827 = vmatprep.mubr.bf16.mxu0 %v2428
        %2828 = vmatmul.mubr.bf16.gmra.mxu0 %v2427
        %v2829 = vpop.f32.mrf.mxu0
        %v2830 = vadd.f32 %v1894, %v2829
        %v2831 = vpop.f32.mrf.mxu0
        %v2832 = vpop.f32.mrf.mxu0
        %v2833 = vadd.f32 %v1899, %v2832
        %v2834 = vpop.f32.mrf.mxu0
        %2835 = vmatprep.mubr.bf16.mxu0 %v2432
        %2836 = vmatmul.mubr.bf16.gmra.mxu0 %v2431
        %v2837 = vpop.f32.mrf.mxu0
        %v2838 = vadd.f32 %v1904, %v2837
        %v2839 = vpop.f32.mrf.mxu0
        %v2840 = vpop.f32.mrf.mxu0
        %v2841 = vadd.f32 %v1909, %v2840
        %v2842 = vpop.f32.mrf.mxu0
        %2843 = vmatprep.mubr.bf16.mxu0 %v2436
        %2844 = vmatmul.mubr.bf16.gmra.mxu0 %v2435
        %v2845 = vpop.f32.mrf.mxu0
        %v2846 = vadd.f32 %v1914, %v2845
        %v2847 = vpop.f32.mrf.mxu0
        %v2848 = vpop.f32.mrf.mxu0
        %v2849 = vadd.f32 %v1919, %v2848
        %v2850 = vpop.f32.mrf.mxu0
        %2851 = vmatprep.mubr.bf16.mxu0 %v2440
        %2852 = vmatmul.mubr.bf16.gmra.mxu0 %v2439
        %v2853 = vpop.f32.mrf.mxu0
        %v2854 = vadd.f32 %v1924, %v2853
        %v2855 = vpop.f32.mrf.mxu0
        %v2856 = vpop.f32.mrf.mxu0
        %v2857 = vadd.f32 %v1929, %v2856
        %v2858 = vpop.f32.mrf.mxu0
        %2859 = vdwg.mxu0
        %2860 = vmatprep.subr.bf16.mxu0 0
        %2861 = vmatpush1.bf16.msra.mxu0 %v1410
        %2862 = vmatprep.subr.bf16.mxu0 0
        %2863 = vmatpush1.bf16.msra.mxu0 %v1409
        %2864 = vmatprep.subr.bf16.mxu0 0
        %2865 = vmatpush1.bf16.msra.mxu0 %v1408
        %2866 = vmatprep.subr.bf16.mxu0 0
        %2867 = vmatpush1.bf16.msra.mxu0 %v1407
        %2868 = vmatprep.subr.bf16.mxu0 0
        %2869 = vmatpush1.bf16.msra.mxu0 %v1406
        %2870 = vmatprep.subr.bf16.mxu0 0
        %2871 = vmatpush1.bf16.msra.mxu0 %v1405
        %2872 = vmatprep.subr.bf16.mxu0 0
        %2873 = vmatpush1.bf16.msra.mxu0 %v1404
        %2874 = vmatprep.subr.bf16.mxu0 0
        %2875 = vmatpush1.bf16.msra.mxu0 %v1403
        %2876 = vmatprep.subr.bf16.mxu0 0
        %2877 = vmatpush2.bf16.msra.mxu0 %v1418
        %2878 = vmatprep.subr.bf16.mxu0 0
        %2879 = vmatpush2.bf16.msra.mxu0 %v1417
        %2880 = vmatprep.subr.bf16.mxu0 0
        %2881 = vmatpush2.bf16.msra.mxu0 %v1416
        %2882 = vmatprep.subr.bf16.mxu0 0
        %2883 = vmatpush2.bf16.msra.mxu0 %v1415
        %2884 = vmatprep.subr.bf16.mxu0 0
        %2885 = vmatpush2.bf16.msra.mxu0 %v1414
        %2886 = vmatprep.subr.bf16.mxu0 0
        %2887 = vmatpush2.bf16.msra.mxu0 %v1413
        %2888 = vmatprep.subr.bf16.mxu0 0
        %2889 = vmatpush2.bf16.msra.mxu0 %v1412
        %2890 = vmatprep.subr.bf16.mxu0 0
        %2891 = vmatpush2.bf16.msra.mxu0 %v1411
        %2892 = vmatprep.mubr.bf16.mxu0 %v2318
        %2893 = vmatmul.mubr.bf16.gmra.mxu0 %v2317
        %v2894 = vpop.f32.mrf.mxu0
        %v2895 = vadd.f32 %v2606, %v2894
        %v2896 = vpop.f32.mrf.mxu0
        %v2897 = vpop.f32.mrf.mxu0
        %v2898 = vadd.f32 %v2609, %v2897
        %v2899 = vpop.f32.mrf.mxu0
        %2900 = vmatprep.mubr.bf16.mxu0 %v2322
        %2901 = vmatmul.mubr.bf16.gmra.mxu0 %v2321
        %v2902 = vpop.f32.mrf.mxu0
        %v2903 = vadd.f32 %v2614, %v2902
        %v2904 = vpop.f32.mrf.mxu0
        %v2905 = vpop.f32.mrf.mxu0
        %v2906 = vadd.f32 %v2617, %v2905
        %v2907 = vpop.f32.mrf.mxu0
        %2908 = vmatprep.mubr.bf16.mxu0 %v2326
        %2909 = vmatmul.mubr.bf16.gmra.mxu0 %v2325
        %v2910 = vpop.f32.mrf.mxu0
        %v2911 = vadd.f32 %v2622, %v2910
        %v2912 = vpop.f32.mrf.mxu0
        %v2913 = vpop.f32.mrf.mxu0
        %v2914 = vadd.f32 %v2625, %v2913
        %v2915 = vpop.f32.mrf.mxu0
        %2916 = vmatprep.mubr.bf16.mxu0 %v2330
        %2917 = vmatmul.mubr.bf16.gmra.mxu0 %v2329
        %v2918 = vpop.f32.mrf.mxu0
        %v2919 = vadd.f32 %v2630, %v2918
        %v2920 = vpop.f32.mrf.mxu0
        %v2921 = vpop.f32.mrf.mxu0
        %v2922 = vadd.f32 %v2633, %v2921
        %v2923 = vpop.f32.mrf.mxu0
        %2924 = vmatprep.mubr.bf16.mxu0 %v2334
        %2925 = vmatmul.mubr.bf16.gmra.mxu0 %v2333
        %v2926 = vpop.f32.mrf.mxu0
        %v2927 = vadd.f32 %v2638, %v2926
        %v2928 = vpop.f32.mrf.mxu0
        %v2929 = vpop.f32.mrf.mxu0
        %v2930 = vadd.f32 %v2641, %v2929
        %v2931 = vpop.f32.mrf.mxu0
        %2932 = vmatprep.mubr.bf16.mxu0 %v2338
        %2933 = vmatmul.mubr.bf16.gmra.mxu0 %v2337
        %v2934 = vpop.f32.mrf.mxu0
        %v2935 = vadd.f32 %v2646, %v2934
        %v2936 = vpop.f32.mrf.mxu0
        %v2937 = vpop.f32.mrf.mxu0
        %v2938 = vadd.f32 %v2649, %v2937
        %v2939 = vpop.f32.mrf.mxu0
        %2940 = vmatprep.mubr.bf16.mxu0 %v2342
        %2941 = vmatmul.mubr.bf16.gmra.mxu0 %v2341
        %v2942 = vpop.f32.mrf.mxu0
        %v2943 = vadd.f32 %v2654, %v2942
        %v2944 = vpop.f32.mrf.mxu0
        %v2945 = vpop.f32.mrf.mxu0
        %v2946 = vadd.f32 %v2657, %v2945
        %v2947 = vpop.f32.mrf.mxu0
        %2948 = vmatprep.mubr.bf16.mxu0 %v2346
        %2949 = vmatmul.mubr.bf16.gmra.mxu0 %v2345
        %v2950 = vpop.f32.mrf.mxu0
        %v2951 = vadd.f32 %v2662, %v2950
        %v2952 = vpop.f32.mrf.mxu0
        %v2953 = vpop.f32.mrf.mxu0
        %v2954 = vadd.f32 %v2665, %v2953
        %v2955 = vpop.f32.mrf.mxu0
        %2956 = vmatprep.mubr.bf16.mxu0 %v2350
        %2957 = vmatmul.mubr.bf16.gmra.mxu0 %v2349
        %v2958 = vpop.f32.mrf.mxu0
        %v2959 = vadd.f32 %v2670, %v2958
        %v2960 = vpop.f32.mrf.mxu0
        %v2961 = vpop.f32.mrf.mxu0
        %v2962 = vadd.f32 %v2673, %v2961
        %v2963 = vpop.f32.mrf.mxu0
        %2964 = vmatprep.mubr.bf16.mxu0 %v2354
        %2965 = vmatmul.mubr.bf16.gmra.mxu0 %v2353
        %v2966 = vpop.f32.mrf.mxu0
        %v2967 = vadd.f32 %v2678, %v2966
        %v2968 = vpop.f32.mrf.mxu0
        %v2969 = vpop.f32.mrf.mxu0
        %v2970 = vadd.f32 %v2681, %v2969
        %v2971 = vpop.f32.mrf.mxu0
        %2972 = vmatprep.mubr.bf16.mxu0 %v2358
        %2973 = vmatmul.mubr.bf16.gmra.mxu0 %v2357
        %v2974 = vpop.f32.mrf.mxu0
        %v2975 = vadd.f32 %v2686, %v2974
        %v2976 = vpop.f32.mrf.mxu0
        %v2977 = vpop.f32.mrf.mxu0
        %v2978 = vadd.f32 %v2689, %v2977
        %v2979 = vpop.f32.mrf.mxu0
        %2980 = vmatprep.mubr.bf16.mxu0 %v2362
        %2981 = vmatmul.mubr.bf16.gmra.mxu0 %v2361
        %v2982 = vpop.f32.mrf.mxu0
        %v2983 = vadd.f32 %v2694, %v2982
        %v2984 = vpop.f32.mrf.mxu0
        %v2985 = vpop.f32.mrf.mxu0
        %v2986 = vadd.f32 %v2697, %v2985
        %v2987 = vpop.f32.mrf.mxu0
        %2988 = vmatprep.mubr.bf16.mxu0 %v2366
        %2989 = vmatmul.mubr.bf16.gmra.mxu0 %v2365
        %v2990 = vpop.f32.mrf.mxu0
        %v2991 = vadd.f32 %v2702, %v2990
        %v2992 = vpop.f32.mrf.mxu0
        %v2993 = vpop.f32.mrf.mxu0
        %v2994 = vadd.f32 %v2705, %v2993
        %v2995 = vpop.f32.mrf.mxu0
        %2996 = vmatprep.mubr.bf16.mxu0 %v2370
        %2997 = vmatmul.mubr.bf16.gmra.mxu0 %v2369
        %v2998 = vpop.f32.mrf.mxu0
        %v2999 = vadd.f32 %v2710, %v2998
        %v3000 = vpop.f32.mrf.mxu0
        %v3001 = vpop.f32.mrf.mxu0
        %v3002 = vadd.f32 %v2713, %v3001
        %v3003 = vpop.f32.mrf.mxu0
        %3004 = vmatprep.mubr.bf16.mxu0 %v2374
        %3005 = vmatmul.mubr.bf16.gmra.mxu0 %v2373
        %v3006 = vpop.f32.mrf.mxu0
        %v3007 = vadd.f32 %v2718, %v3006
        %v3008 = vpop.f32.mrf.mxu0
        %v3009 = vpop.f32.mrf.mxu0
        %v3010 = vadd.f32 %v2721, %v3009
        %v3011 = vpop.f32.mrf.mxu0
        %3012 = vmatprep.mubr.bf16.mxu0 %v2378
        %3013 = vmatmul.mubr.bf16.gmra.mxu0 %v2377
        %v3014 = vpop.f32.mrf.mxu0
        %v3015 = vadd.f32 %v2726, %v3014
        %v3016 = vpop.f32.mrf.mxu0
        %v3017 = vpop.f32.mrf.mxu0
        %v3018 = vadd.f32 %v2729, %v3017
        %v3019 = vpop.f32.mrf.mxu0
        %3020 = vmatprep.mubr.bf16.mxu0 %v2382
        %3021 = vmatmul.mubr.bf16.gmra.mxu0 %v2381
        %v3022 = vpop.f32.mrf.mxu0
        %v3023 = vadd.f32 %v2734, %v3022
        %v3024 = vpop.f32.mrf.mxu0
        %v3025 = vpop.f32.mrf.mxu0
        %v3026 = vadd.f32 %v2737, %v3025
        %v3027 = vpop.f32.mrf.mxu0
        %3028 = vmatprep.mubr.bf16.mxu0 %v2386
        %3029 = vmatmul.mubr.bf16.gmra.mxu0 %v2385
        %v3030 = vpop.f32.mrf.mxu0
        %v3031 = vadd.f32 %v2742, %v3030
        %v3032 = vpop.f32.mrf.mxu0
        %v3033 = vpop.f32.mrf.mxu0
        %v3034 = vadd.f32 %v2745, %v3033
        %v3035 = vpop.f32.mrf.mxu0
        %3036 = vmatprep.mubr.bf16.mxu0 %v2390
        %3037 = vmatmul.mubr.bf16.gmra.mxu0 %v2389
        %v3038 = vpop.f32.mrf.mxu0
        %v3039 = vadd.f32 %v2750, %v3038
        %v3040 = vpop.f32.mrf.mxu0
        %v3041 = vpop.f32.mrf.mxu0
        %v3042 = vadd.f32 %v2753, %v3041
        %v3043 = vpop.f32.mrf.mxu0
        %3044 = vmatprep.mubr.bf16.mxu0 %v2394
        %3045 = vmatmul.mubr.bf16.gmra.mxu0 %v2393
        %v3046 = vpop.f32.mrf.mxu0
        %v3047 = vadd.f32 %v2758, %v3046
        %v3048 = vpop.f32.mrf.mxu0
        %v3049 = vpop.f32.mrf.mxu0
        %v3050 = vadd.f32 %v2761, %v3049
        %v3051 = vpop.f32.mrf.mxu0
        %3052 = vmatprep.mubr.bf16.mxu0 %v2398
        %3053 = vmatmul.mubr.bf16.gmra.mxu0 %v2397
        %v3054 = vpop.f32.mrf.mxu0
        %v3055 = vadd.f32 %v2766, %v3054
        %v3056 = vpop.f32.mrf.mxu0
        %v3057 = vpop.f32.mrf.mxu0
        %v3058 = vadd.f32 %v2769, %v3057
        %v3059 = vpop.f32.mrf.mxu0
        %3060 = vmatprep.mubr.bf16.mxu0 %v2402
        %3061 = vmatmul.mubr.bf16.gmra.mxu0 %v2401
        %v3062 = vpop.f32.mrf.mxu0
        %v3063 = vadd.f32 %v2774, %v3062
        %v3064 = vpop.f32.mrf.mxu0
        %v3065 = vpop.f32.mrf.mxu0
        %v3066 = vadd.f32 %v2777, %v3065
        %v3067 = vpop.f32.mrf.mxu0
        %3068 = vmatprep.mubr.bf16.mxu0 %v2406
        %3069 = vmatmul.mubr.bf16.gmra.mxu0 %v2405
        %v3070 = vpop.f32.mrf.mxu0
        %v3071 = vadd.f32 %v2782, %v3070
        %v3072 = vpop.f32.mrf.mxu0
        %v3073 = vpop.f32.mrf.mxu0
        %v3074 = vadd.f32 %v2785, %v3073
        %v3075 = vpop.f32.mrf.mxu0
        %3076 = vmatprep.mubr.bf16.mxu0 %v2410
        %3077 = vmatmul.mubr.bf16.gmra.mxu0 %v2409
        %v3078 = vpop.f32.mrf.mxu0
        %v3079 = vadd.f32 %v2790, %v3078
        %v3080 = vpop.f32.mrf.mxu0
        %v3081 = vpop.f32.mrf.mxu0
        %v3082 = vadd.f32 %v2793, %v3081
        %v3083 = vpop.f32.mrf.mxu0
        %3084 = vmatprep.mubr.bf16.mxu0 %v2414
        %3085 = vmatmul.mubr.bf16.gmra.mxu0 %v2413
        %v3086 = vpop.f32.mrf.mxu0
        %v3087 = vadd.f32 %v2798, %v3086
        %v3088 = vpop.f32.mrf.mxu0
        %v3089 = vpop.f32.mrf.mxu0
        %v3090 = vadd.f32 %v2801, %v3089
        %v3091 = vpop.f32.mrf.mxu0
        %3092 = vmatprep.mubr.bf16.mxu0 %v2418
        %3093 = vmatmul.mubr.bf16.gmra.mxu0 %v2417
        %v3094 = vpop.f32.mrf.mxu0
        %v3095 = vadd.f32 %v2806, %v3094
        %v3096 = vpop.f32.mrf.mxu0
        %v3097 = vpop.f32.mrf.mxu0
        %v3098 = vadd.f32 %v2809, %v3097
        %v3099 = vpop.f32.mrf.mxu0
        %3100 = vmatprep.mubr.bf16.mxu0 %v2422
        %3101 = vmatmul.mubr.bf16.gmra.mxu0 %v2421
        %v3102 = vpop.f32.mrf.mxu0
        %v3103 = vadd.f32 %v2814, %v3102
        %v3104 = vpop.f32.mrf.mxu0
        %v3105 = vpop.f32.mrf.mxu0
        %v3106 = vadd.f32 %v2817, %v3105
        %v3107 = vpop.f32.mrf.mxu0
        %3108 = vmatprep.mubr.bf16.mxu0 %v2426
        %3109 = vmatmul.mubr.bf16.gmra.mxu0 %v2425
        %v3110 = vpop.f32.mrf.mxu0
        %v3111 = vadd.f32 %v2822, %v3110
        %v3112 = vpop.f32.mrf.mxu0
        %v3113 = vpop.f32.mrf.mxu0
        %v3114 = vadd.f32 %v2825, %v3113
        %v3115 = vpop.f32.mrf.mxu0
        %3116 = vmatprep.mubr.bf16.mxu0 %v2430
        %3117 = vmatmul.mubr.bf16.gmra.mxu0 %v2429
        %v3118 = vpop.f32.mrf.mxu0
        %v3119 = vadd.f32 %v2830, %v3118
        %v3120 = vpop.f32.mrf.mxu0
        %v3121 = vpop.f32.mrf.mxu0
        %v3122 = vadd.f32 %v2833, %v3121
        %v3123 = vpop.f32.mrf.mxu0
        %3124 = vmatprep.mubr.bf16.mxu0 %v2434
        %3125 = vmatmul.mubr.bf16.gmra.mxu0 %v2433
        %v3126 = vpop.f32.mrf.mxu0
        %v3127 = vadd.f32 %v2838, %v3126
        %v3128 = vpop.f32.mrf.mxu0
        %v3129 = vpop.f32.mrf.mxu0
        %v3130 = vadd.f32 %v2841, %v3129
        %v3131 = vpop.f32.mrf.mxu0
        %3132 = vmatprep.mubr.bf16.mxu0 %v2438
        %3133 = vmatmul.mubr.bf16.gmra.mxu0 %v2437
        %v3134 = vpop.f32.mrf.mxu0
        %v3135 = vadd.f32 %v2846, %v3134
        %v3136 = vpop.f32.mrf.mxu0
        %v3137 = vpop.f32.mrf.mxu0
        %v3138 = vadd.f32 %v2849, %v3137
        %v3139 = vpop.f32.mrf.mxu0
        %3140 = vmatprep.mubr.bf16.mxu0 %v2442
        %3141 = vmatmul.mubr.bf16.gmra.mxu0 %v2441
        %v3142 = vpop.f32.mrf.mxu0
        %v3143 = vadd.f32 %v2854, %v3142
        %v3144 = vpop.f32.mrf.mxu0
        %v3145 = vpop.f32.mrf.mxu0
        %v3146 = vadd.f32 %v2857, %v3145
        %v3147 = vpop.f32.mrf.mxu0
        %3148 = vdwg.mxu0
        %v3149 = vmax.f32 %v2895, 0.0
        %v3150 = vmax.f32 %v2898, 0.0
        %v3151 = vmax.f32 %v2903, 0.0
        %v3152 = vmax.f32 %v2906, 0.0
        %v3153 = vmax.f32 %v2911, 0.0
        %v3154 = vmax.f32 %v2914, 0.0
        %v3155 = vmax.f32 %v2919, 0.0
        %v3156 = vmax.f32 %v2922, 0.0
        %v3157 = vmax.f32 %v2927, 0.0
        %v3158 = vmax.f32 %v2930, 0.0
        %v3159 = vmax.f32 %v2935, 0.0
        %v3160 = vmax.f32 %v2938, 0.0
        %v3161 = vmax.f32 %v2943, 0.0
        %v3162 = vmax.f32 %v2946, 0.0
        %v3163 = vmax.f32 %v2951, 0.0
        %v3164 = vmax.f32 %v2954, 0.0
        %v3165 = vmax.f32 %v2959, 0.0
        %v3166 = vmax.f32 %v2962, 0.0
        %v3167 = vmax.f32 %v2967, 0.0
        %v3168 = vmax.f32 %v2970, 0.0
        %v3169 = vmax.f32 %v2975, 0.0
        %v3170 = vmax.f32 %v2978, 0.0
        %v3171 = vmax.f32 %v2983, 0.0
        %v3172 = vmax.f32 %v2986, 0.0
        %v3173 = vmax.f32 %v2991, 0.0
        %v3174 = vmax.f32 %v2994, 0.0
        %v3175 = vmax.f32 %v2999, 0.0
        %v3176 = vmax.f32 %v3002, 0.0
        %v3177 = vmax.f32 %v3007, 0.0
        %v3178 = vmax.f32 %v3010, 0.0
        %v3179 = vmax.f32 %v3015, 0.0
        %v3180 = vmax.f32 %v3018, 0.0
        %v3181 = vmax.f32 %v3023, 0.0
        %v3182 = vmax.f32 %v3026, 0.0
        %v3183 = vmax.f32 %v3031, 0.0
        %v3184 = vmax.f32 %v3034, 0.0
        %v3185 = vmax.f32 %v3039, 0.0
        %v3186 = vmax.f32 %v3042, 0.0
        %v3187 = vmax.f32 %v3047, 0.0
        %v3188 = vmax.f32 %v3050, 0.0
        %v3189 = vmax.f32 %v3055, 0.0
        %v3190 = vmax.f32 %v3058, 0.0
        %v3191 = vmax.f32 %v3063, 0.0
        %v3192 = vmax.f32 %v3066, 0.0
        %v3193 = vmax.f32 %v3071, 0.0
        %v3194 = vmax.f32 %v3074, 0.0
        %v3195 = vmax.f32 %v3079, 0.0
        %v3196 = vmax.f32 %v3082, 0.0
        %v3197 = vmax.f32 %v3087, 0.0
        %v3198 = vmax.f32 %v3090, 0.0
        %v3199 = vmax.f32 %v3095, 0.0
        %v3200 = vmax.f32 %v3098, 0.0
        %v3201 = vmax.f32 %v3103, 0.0
        %v3202 = vmax.f32 %v3106, 0.0
        %v3203 = vmax.f32 %v3111, 0.0
        %v3204 = vmax.f32 %v3114, 0.0
        %v3205 = vmax.f32 %v3119, 0.0
        %v3206 = vmax.f32 %v3122, 0.0
        %v3207 = vmax.f32 %v3127, 0.0
        %v3208 = vmax.f32 %v3130, 0.0
        %v3209 = vmax.f32 %v3135, 0.0
        %v3210 = vmax.f32 %v3138, 0.0
        %v3211 = vmax.f32 %v3143, 0.0
        %v3212 = vmax.f32 %v3146, 0.0
        %v3213 = vpack.c.bf16 %v3150, %v3149
        %v3214 = vpack.c.bf16 %v3152, %v3151
        %v3215 = vpack.c.bf16 %v3154, %v3153
        %v3216 = vpack.c.bf16 %v3156, %v3155
        %v3217 = vpack.c.bf16 %v3158, %v3157
        %v3218 = vpack.c.bf16 %v3160, %v3159
        %v3219 = vpack.c.bf16 %v3162, %v3161
        %v3220 = vpack.c.bf16 %v3164, %v3163
        %v3221 = vpack.c.bf16 %v3166, %v3165
        %v3222 = vpack.c.bf16 %v3168, %v3167
        %v3223 = vpack.c.bf16 %v3170, %v3169
        %v3224 = vpack.c.bf16 %v3172, %v3171
        %v3225 = vpack.c.bf16 %v3174, %v3173
        %v3226 = vpack.c.bf16 %v3176, %v3175
        %v3227 = vpack.c.bf16 %v3178, %v3177
        %v3228 = vpack.c.bf16 %v3180, %v3179
        %v3229 = vpack.c.bf16 %v3182, %v3181
        %v3230 = vpack.c.bf16 %v3184, %v3183
        %v3231 = vpack.c.bf16 %v3186, %v3185
        %v3232 = vpack.c.bf16 %v3188, %v3187
        %v3233 = vpack.c.bf16 %v3190, %v3189
        %v3234 = vpack.c.bf16 %v3192, %v3191
        %v3235 = vpack.c.bf16 %v3194, %v3193
        %v3236 = vpack.c.bf16 %v3196, %v3195
        %v3237 = vpack.c.bf16 %v3198, %v3197
        %v3238 = vpack.c.bf16 %v3200, %v3199
        %v3239 = vpack.c.bf16 %v3202, %v3201
        %v3240 = vpack.c.bf16 %v3204, %v3203
        %v3241 = vpack.c.bf16 %v3206, %v3205
        %v3242 = vpack.c.bf16 %v3208, %v3207
        %v3243 = vpack.c.bf16 %v3210, %v3209
        %v3244 = vpack.c.bf16 %v3212, %v3211
        %v3245 = vld [vmem:[%s5] sm:$0xff]
        %v3246 = vld [vmem:[%s5 + $0x8] sm:$0xff]
        %v3247 = vld [vmem:[%s6] sm:$0xff]
        %3249 = vset.pattern.permute.xlu0 0
        %3250 = vperm.xlu0 %3249, %v3247
        %v3251 = vpop.permute.xlu0 %3250
        %v3255 = vunpack.c.l.b16 %v3245
        %v3256 = vunpack.c.h.b16 %v3245
        %v3257 = vunpack.c.l.b16 %v3246
        %v3258 = vunpack.c.h.b16 %v3246
        %v3259 = vpack.c.b16 %v3255, %v3255
        %v3260 = vpack.c.b16 %v3256, %v3256
        %v3261 = vpack.c.b16 %v3257, %v3257
        %v3262 = vpack.c.b16 %v3258, %v3258
        %3267 = vmatprep.subr.bf16.mxu0 0
        %3268 = vmatpush1.bf16.msra.mxu0 %v3220
        %3269 = vmatprep.subr.bf16.mxu0 0
        %3270 = vmatpush1.bf16.msra.mxu0 %v3219
        %3271 = vmatprep.subr.bf16.mxu0 0
        %3272 = vmatpush1.bf16.msra.mxu0 %v3218
        %3273 = vmatprep.subr.bf16.mxu0 0
        %3274 = vmatpush1.bf16.msra.mxu0 %v3217
        %3275 = vmatprep.subr.bf16.mxu0 0
        %3276 = vmatpush1.bf16.msra.mxu0 %v3216
        %3277 = vmatprep.subr.bf16.mxu0 0
        %3278 = vmatpush1.bf16.msra.mxu0 %v3215
        %3279 = vmatprep.subr.bf16.mxu0 0
        %3280 = vmatpush1.bf16.msra.mxu0 %v3214
        %3281 = vmatprep.subr.bf16.mxu0 0
        %3282 = vmatpush1.bf16.msra.mxu0 %v3213
        %3283 = vmatprep.subr.bf16.mxu0 0
        %3284 = vmatpush2.bf16.msra.mxu0 %v3228
        %3285 = vmatprep.subr.bf16.mxu0 0
        %3286 = vmatpush2.bf16.msra.mxu0 %v3227
        %3287 = vmatprep.subr.bf16.mxu0 0
        %3288 = vmatpush2.bf16.msra.mxu0 %v3226
        %3289 = vmatprep.subr.bf16.mxu0 0
        %3290 = vmatpush2.bf16.msra.mxu0 %v3225
        %3291 = vmatprep.subr.bf16.mxu0 0
        %3292 = vmatpush2.bf16.msra.mxu0 %v3224
        %3293 = vmatprep.subr.bf16.mxu0 0
        %3294 = vmatpush2.bf16.msra.mxu0 %v3223
        %3295 = vmatprep.subr.bf16.mxu0 0
        %3296 = vmatpush2.bf16.msra.mxu0 %v3222
        %3297 = vmatprep.subr.bf16.mxu0 0
        %3298 = vmatpush2.bf16.msra.mxu0 %v3221
        %3299 = vmatprep.mubr.bf16.mxu0 %v3260
        %3300 = vmatmul.mubr.bf16.gmra.mxu0 %v3259
        %v3301 = vpop.f32.mrf.mxu0
        %v3302 = vadd.f32 %v3251, %v3301
        %v3303 = vpop.f32.mrf.mxu0
        %v3304 = vpop.f32.mrf.mxu0
        %v3305 = vpop.f32.mrf.mxu0
        %3306 = vdwg.mxu0
        %3307 = vmatprep.subr.bf16.mxu0 0
        %3308 = vmatpush1.bf16.msra.mxu0 %v3236
        %3309 = vmatprep.subr.bf16.mxu0 0
        %3310 = vmatpush1.bf16.msra.mxu0 %v3235
        %3311 = vmatprep.subr.bf16.mxu0 0
        %3312 = vmatpush1.bf16.msra.mxu0 %v3234
        %3313 = vmatprep.subr.bf16.mxu0 0
        %3314 = vmatpush1.bf16.msra.mxu0 %v3233
        %3315 = vmatprep.subr.bf16.mxu0 0
        %3316 = vmatpush1.bf16.msra.mxu0 %v3232
        %3317 = vmatprep.subr.bf16.mxu0 0
        %3318 = vmatpush1.bf16.msra.mxu0 %v3231
        %3319 = vmatprep.subr.bf16.mxu0 0
        %3320 = vmatpush1.bf16.msra.mxu0 %v3230
        %3321 = vmatprep.subr.bf16.mxu0 0
        %3322 = vmatpush1.bf16.msra.mxu0 %v3229
        %3323 = vmatprep.subr.bf16.mxu0 0
        %3324 = vmatpush2.bf16.msra.mxu0 %v3244
        %3325 = vmatprep.subr.bf16.mxu0 0
        %3326 = vmatpush2.bf16.msra.mxu0 %v3243
        %3327 = vmatprep.subr.bf16.mxu0 0
        %3328 = vmatpush2.bf16.msra.mxu0 %v3242
        %3329 = vmatprep.subr.bf16.mxu0 0
        %3330 = vmatpush2.bf16.msra.mxu0 %v3241
        %3331 = vmatprep.subr.bf16.mxu0 0
        %3332 = vmatpush2.bf16.msra.mxu0 %v3240
        %3333 = vmatprep.subr.bf16.mxu0 0
        %3334 = vmatpush2.bf16.msra.mxu0 %v3239
        %3335 = vmatprep.subr.bf16.mxu0 0
        %3336 = vmatpush2.bf16.msra.mxu0 %v3238
        %3337 = vmatprep.subr.bf16.mxu0 0
        %3338 = vmatpush2.bf16.msra.mxu0 %v3237
        %3339 = vmatprep.mubr.bf16.mxu0 %v3262
        %3340 = vmatmul.mubr.bf16.gmra.mxu0 %v3261
        %v3341 = vpop.f32.mrf.mxu0
        %v3342 = vadd.f32 %v3302, %v3341
        %v3343 = vpop.f32.mrf.mxu0
        %v3344 = vpop.f32.mrf.mxu0
        %v3345 = vpop.f32.mrf.mxu0
        %3346 = vdwg.mxu0
        %3347 = vst [vmem:[%s328] sm:$0xff] %v3342
        %s3348 = sand.u32 %s201, 1
        %s3349 = scalar_lea.sflag [#allocation4], %s3348
        %s3350 = sand.u32 %s201, 1
        %s3351 = smul.addr %s3350, 8
        %s3352 = scalar_lea.vmem [#allocation7], %s3351
        // Predicated region
        $region57: #{tpu_custom_call.1} parent=47 // pred_check
          %p3353 = pneg %p211
        $region58: #{tpu_custom_call.1} parent=47 // pred_check_branch
          %3355 = sbr.rel (%p3353) target = $region60
        $region59: #{tpu_custom_call.1} parent=47 // pred_region
          %s3357 = ssub.s32 128, 128
          %3358 = vsyncadd %s3349, %s3357
          %s3359 = sadd.s32 %s30, %s29
          %s3360 = smul.addr %s3359, 128
          %s3361 = scalar_lea.hbm %s7, %s3360
          %s3363 = sshll.u32 %s3352, 4
          %s3364 = int_to_ptr.vmem [resolvable:$true] %s3363
          %3366 = dma.vmem_to_hbm [thread:$0]  %s3364, 128, %s3361, %s3349
        $region60: #{tpu_custom_call.1} parent=47 // pred_fallthru
          _
      $region48: #{tpu_custom_call.1} parent=5 // pred_fallthru
        _
      %p3367 = scmp.le.s32.totalorder 2, %s20
      // Predicated region
      $region61: #{tpu_custom_call.1} parent=5 // pred_check
        %p3368 = pneg %p3367
      $region62: #{tpu_custom_call.1} parent=5 // pred_check_branch
        %3370 = sbr.rel (%p3368) target = $region64
      $region63: #{tpu_custom_call.1} parent=5 // pred_region
        %s3371 = ssub.s32 %s20, 2
        // Predicated region
        $region65: #{tpu_custom_call.1} parent=63 // pred_check
          %p3372 = pneg %p217
        $region66: #{tpu_custom_call.1} parent=63 // pred_check_branch
          %3374 = sbr.rel (%p3372) target = $region68
        $region67: #{tpu_custom_call.1} parent=63 // pred_region
          %s3375 = sand.u32 %s202, 1
          %s3376 = scalar_lea.sflag [#allocation4], %s3375
          %s3377 = sand.u32 %s202, 1
          %s3378 = smul.addr %s3377, 8
          %s3379 = scalar_lea.vmem [#allocation7], %s3378
          %3380 = dma.done %s3376, 128
        $region68: #{tpu_custom_call.1} parent=63 // pred_fallthru
          _
      $region64: #{tpu_custom_call.1} parent=5 // pred_fallthru
        _
    $region6: #{tpu_custom_call.1} parent=1 // loop_footer
      %s24 = sadd.s32 1, %s20
    $region7: #{tpu_custom_call.1} parent=1 // loop_footer_branch
      %19 = sbr.rel target = $region3
    $region8: #{tpu_custom_call.1} parent=1 // loop_exit
      _
    %3381 = vsyncpa [#allocation3], 1
    %s3382 = scalar_lea.sflag [#allocation3], 1
    %3383 = vsyncpa %s3382, 1
    %3384 = vsyncpa [#allocation6], 1
    %3385 = vsyncpa [#allocation4], 1
    %s3386 = scalar_lea.sflag [#allocation4], 1
    %3387 = vsyncpa %s3386, 1

</llo_original>
